<compile_context>
chip_gen: v7x
topology: tpu7x:2x2x1
jax: 0.10.0
libtpu: 0.0.40
codegen_flags: <defaults>
</compile_context>

<pallas_src>
import jax
import jax.numpy as jnp
from jax.experimental import pallas as pl
from jax.experimental.pallas import tpu as pltpu


def _round_up(n, m):
    return ((n + m - 1) // m) * m


def _cdiv(a, b):
    return -(-a // b)


def _pick_batch_tiling(B):
    """Pick (TB, Bp): batch tile and padded batch.

    * TB <= 512 (keeps v7x 64 MiB/TC VMEM comfortable, amortizes step overhead).
    * >= 2 grid blocks once the batch is big enough, so both v7x TensorCores
      get work with dimension_semantics=("parallel",).
    * TB is a multiple of 16 (bf16 sublane packing), and sized to the batch so
      odd batch sizes don't pad up to a full 512-row tile.
    """
    TB_MAX = 512
    n_blk = max(_cdiv(B, TB_MAX), 2 if B >= 128 else 1)
    TB = _round_up(_cdiv(B, n_blk), 16)
    Bp = TB * n_blk
    return TB, Bp


def vae_kernel(x_ref, eps_ref,
               w1_ref, b1_ref, wml_ref, bml_ref,
               w3_ref, b3_ref, w4_ref, b4_ref,
               recon_ref, ml_ref):
    # ----- encode: h1 = relu(x @ W1 + b1) ------------------------------------
    # x is already bf16 (cast folded into the wrapper-side padding).
    h1 = jnp.dot(x_ref[...], w1_ref[...],
                 preferred_element_type=jnp.float32) + b1_ref[...]
    h1 = jnp.maximum(h1, 0.0)                                     # [TB, 512] f32

    # ----- fused mu|logvar projection: [TB, 128] ------------------------------
    # mu packed in lanes 0:64 (real 0:20), logvar in lanes 64:128 (real 64:84).
    ml = jnp.dot(h1.astype(jnp.bfloat16), wml_ref[...],
                 preferred_element_type=jnp.float32) + bml_ref[...]
    mu_pad = ml[:, 0:64]                                           # [TB, 64]
    logvar_pad = ml[:, 64:128]                                     # [TB, 64]

    # ----- reparametrize: z = eps * exp(0.5 * logvar) + mu --------------------
    # Padded lanes: logvar=0 -> std=1, eps=0, mu=0 -> z stays exactly 0 there.
    std = jnp.exp(0.5 * logvar_pad)
    z = eps_ref[...].astype(jnp.float32) * std + mu_pad            # [TB, 64] f32

    # ----- decode: recon = tanh(relu(z @ W3 + b3) @ W4 + b4) ------------------
    h3 = jnp.dot(z.astype(jnp.bfloat16), w3_ref[...],
                 preferred_element_type=jnp.float32) + b3_ref[...]
    h3 = jnp.maximum(h3, 0.0)                                      # [TB, 512] f32
    pre = jnp.dot(h3.astype(jnp.bfloat16), w4_ref[...],
                  preferred_element_type=jnp.float32) + b4_ref[...]  # [TB, 896] f32

    # tanh on the bf16-rounded value (bf16 EUP on v6e/v7x, upcast on v5e);
    # result stored as bf16 -> largest HBM write stream halved.
    recon_ref[...] = jnp.tanh(pre.astype(jnp.bfloat16)).astype(recon_ref.dtype)
    ml_ref[...] = ml                                               # [TB, 128] f32


def pack_params(params):
    """Pad raw f32 params to lane-aligned shapes; cast weights to bf16 once."""
    (w1, b1, w21, b21, w22, b22, w3, b3, w4, b4) = params
    w1p = jnp.zeros((896, 512), jnp.float32).at[:784, :400].set(w1).astype(jnp.bfloat16)
    b1p = jnp.zeros((1, 512), jnp.float32).at[:, :400].set(b1)
    # fused mu|logvar projection: mu cols 0:20, logvar cols 64:84 of a 128-wide slab
    wml = (jnp.zeros((512, 128), jnp.float32)
           .at[:400, 0:20].set(w21)
           .at[:400, 64:84].set(w22)
           .astype(jnp.bfloat16))
    bml = (jnp.zeros((1, 128), jnp.float32)
           .at[:, 0:20].set(b21)
           .at[:, 64:84].set(b22))
    w3p = jnp.zeros((64, 512), jnp.float32).at[:20, :400].set(w3).astype(jnp.bfloat16)
    b3p = jnp.zeros((1, 512), jnp.float32).at[:, :400].set(b3)
    w4p = jnp.zeros((512, 896), jnp.float32).at[:400, :784].set(w4).astype(jnp.bfloat16)
    b4p = jnp.zeros((1, 896), jnp.float32).at[:, :784].set(b4)
    return (w1p, b1p, wml, bml, w3p, b3p, w4p, b4p)


def vae_forward(x, eps, packed):
    B = x.shape[0]
    TB, Bp = _pick_batch_tiling(B)

    # Pad to tile-aligned slabs and fold the bf16 cast into the padding copy.
    # This runs inside the same jit as the pallas_call, so XLA fuses it with
    # the producer instead of an extra standalone HBM round-trip.
    xp = jnp.zeros((Bp, 896), jnp.bfloat16).at[:B, :784].set(x.astype(jnp.bfloat16))
    epsp = jnp.zeros((Bp, 64), jnp.bfloat16).at[:B, :20].set(eps.astype(jnp.bfloat16))

    grid = (Bp // TB,)
    act_spec = lambda feat: pl.BlockSpec((TB, feat), lambda i: (i, 0))
    # weights/biases: full-array block + constant index map -> VMEM-resident
    # across all batch tiles; only activation DMA pipelines.
    w_specs = [pl.BlockSpec(p.shape, lambda i: (0, 0)) for p in packed]

    recon_pad, ml = pl.pallas_call(
        vae_kernel,
        out_shape=(
            jax.ShapeDtypeStruct((Bp, 896), jnp.bfloat16),   # padded reconstruction (bf16)
            jax.ShapeDtypeStruct((Bp, 128), jnp.float32),    # packed mu|logvar (f32)
        ),
        grid=grid,
        in_specs=[act_spec(896), act_spec(64)] + w_specs,
        out_specs=(act_spec(896), act_spec(128)),
        compiler_params=pltpu.CompilerParams(
            dimension_semantics=("parallel",),
            vmem_limit_bytes=48 << 20,
        ),
    )(xp, epsp, *packed)

    recon = recon_pad[:B, :784]        # bf16 reconstruction
    mu = ml[:B, 0:20]
    logvar = ml[:B, 64:84]
    return recon, mu, logvar


# Pad / kernel / slice all fused under one jit (review item: avoid standalone
# pad+slice HBM passes around a bandwidth-bound kernel).
vae_forward_jit = jax.jit(vae_forward)


def init_linear(key, fan_in, fan_out):
    """PyTorch-style uniform(-1/sqrt(fan_in), 1/sqrt(fan_in)) init.

    Returns W of shape [fan_in, fan_out] (transposed vs. torch) and b [1, fan_out].
    """
    kw, kb = jax.random.split(key)
    bound = 1.0 / jnp.sqrt(jnp.float32(fan_in))
    w = jax.random.uniform(kw, (fan_in, fan_out), jnp.float32, -bound, bound)
    b = jax.random.uniform(kb, (1, fan_out), jnp.float32, -bound, bound)
    return w, b


def reference_forward(x, eps, params):
    (w1, b1, w21, b21, w22, b22, w3, b3, w4, b4) = params
    h1 = jnp.maximum(x @ w1 + b1, 0.0)
    mu = h1 @ w21 + b21
    logvar = h1 @ w22 + b22
    z = eps * jnp.exp(0.5 * logvar) + mu
    h3 = jnp.maximum(z @ w3 + b3, 0.0)
    recon = jnp.tanh(h3 @ w4 + b4)
    return recon, mu, logvar


if __name__ == "__main__":
    key = jax.random.PRNGKey(0)
    k_x, k_eps, k1, k21, k22, k3, k4 = jax.random.split(key, 7)

    B = 8
    x = jax.random.uniform(k_x, (B, 784), jnp.float32)      # "MNIST-like" flat input
    eps = jax.random.normal(k_eps, (B, 20), jnp.float32)    # reparametrization noise

    w1, b1 = init_linear(k1, 784, 400)
    w21, b21 = init_linear(k21, 400, 20)
    w22, b22 = init_linear(k22, 400, 20)
    w3, b3 = init_linear(k3, 20, 400)
    w4, b4 = init_linear(k4, 400, 784)
    params = (w1, b1, w21, b21, w22, b22, w3, b3, w4, b4)

    packed = pack_params(params)   # one-time pad + bf16 cast (reusable across calls)

    recon, mu, logvar = jax.block_until_ready(vae_forward_jit(x, eps, packed))

    # sanity check against a pure-JAX f32 reference (bf16 weights/activations =>
    # relaxed tolerance; |tanh| <= 1 so bf16 recon adds < 4e-3 abs error)
    r_ref, mu_ref, lv_ref = reference_forward(x, eps, params)
    assert recon.shape == (B, 784) and mu.shape == (B, 20) and logvar.shape == (B, 20)
    assert jnp.allclose(recon.astype(jnp.float32), r_ref, atol=2e-2, rtol=2e-2)
    assert jnp.allclose(mu, mu_ref, atol=1e-2, rtol=1e-2)
    assert jnp.allclose(logvar, lv_ref, atol=1e-2, rtol=1e-2)

    print("KERNEL_OK")
</pallas_src>

<mosaic_0001>
module attributes {stable_mosaic.version = 11 : i64} {
  func.func @vae_kernel(%arg0: i32, %arg1: memref<16x896xbf16, #tpu.memory_space<vmem>>, %arg2: memref<16x64xbf16, #tpu.memory_space<vmem>>, %arg3: memref<896x512xbf16, #tpu.memory_space<vmem>>, %arg4: memref<1x512xf32, #tpu.memory_space<vmem>>, %arg5: memref<512x128xbf16, #tpu.memory_space<vmem>>, %arg6: memref<1x128xf32, #tpu.memory_space<vmem>>, %arg7: memref<64x512xbf16, #tpu.memory_space<vmem>>, %arg8: memref<1x512xf32, #tpu.memory_space<vmem>>, %arg9: memref<512x896xbf16, #tpu.memory_space<vmem>>, %arg10: memref<1x896xf32, #tpu.memory_space<vmem>>, %arg11: memref<16x896xbf16, #tpu.memory_space<vmem>>, %arg12: memref<16x128xf32, #tpu.memory_space<vmem>>) attributes {dimension_semantics = [#tpu.dimension_semantics<parallel>], iteration_bounds = array<i64: 1>, scalar_prefetch = 0 : i64, scratch_operands = 0 : i64, tpu.core_type = #tpu.core_type<tc>, window_params = [{transform_indices = @transform_0, window_bounds = array<i64: 16, 896>}, {transform_indices = @transform_1, window_bounds = array<i64: 16, 64>}, {pipeline_mode = #tpu.pipeline_mode<synchronous>, transform_indices = @transform_2, window_bounds = array<i64: 896, 512>}, {pipeline_mode = #tpu.pipeline_mode<synchronous>, transform_indices = @transform_3, window_bounds = array<i64: 1, 512>}, {pipeline_mode = #tpu.pipeline_mode<synchronous>, transform_indices = @transform_4, window_bounds = array<i64: 512, 128>}, {pipeline_mode = #tpu.pipeline_mode<synchronous>, transform_indices = @transform_5, window_bounds = array<i64: 1, 128>}, {pipeline_mode = #tpu.pipeline_mode<synchronous>, transform_indices = @transform_6, window_bounds = array<i64: 64, 512>}, {pipeline_mode = #tpu.pipeline_mode<synchronous>, transform_indices = @transform_7, window_bounds = array<i64: 1, 512>}, {pipeline_mode = #tpu.pipeline_mode<synchronous>, transform_indices = @transform_8, window_bounds = array<i64: 512, 896>}, {pipeline_mode = #tpu.pipeline_mode<synchronous>, transform_indices = @transform_9, window_bounds = array<i64: 1, 896>}, {transform_indices = @transform_10, window_bounds = array<i64: 16, 896>}, {transform_indices = @transform_11, window_bounds = array<i64: 16, 128>}]} {
    %c0 = arith.constant 0 : index
    %c0_0 = arith.constant 0 : index
    %0 = vector.load %arg1[%c0, %c0_0] : memref<16x896xbf16, #tpu.memory_space<vmem>>, vector<16x896xbf16>
    %c0_1 = arith.constant 0 : index
    %c0_2 = arith.constant 0 : index
    %1 = vector.load %arg3[%c0_1, %c0_2] : memref<896x512xbf16, #tpu.memory_space<vmem>>, vector<896x512xbf16>
    %cst = arith.constant dense<0.000000e+00> : vector<16x512xf32>
    %2 = tpu.matmul %0, %1, %cst {dimension_numbers = #tpu.dot_dimension_numbers<[1], [0], [0], [1], [0, 0, 1, 1], [], []>} : vector<16x896xbf16>, vector<896x512xbf16>, vector<16x512xf32> -> vector<16x512xf32>
    %c0_3 = arith.constant 0 : index
    %c0_4 = arith.constant 0 : index
    %3 = vector.load %arg4[%c0_3, %c0_4] : memref<1x512xf32, #tpu.memory_space<vmem>>, vector<1x512xf32>
    %4 = vector.broadcast %3 : vector<1x512xf32> to vector<16x512xf32>
    %5 = arith.addf %2, %4 : vector<16x512xf32>
    %cst_5 = arith.constant 0.000000e+00 : f32
    %6 = vector.broadcast %cst_5 : f32 to vector<16x512xf32>
    %7 = arith.maximumf %5, %6 : vector<16x512xf32>
    %8 = arith.truncf %7 : vector<16x512xf32> to vector<16x512xbf16>
    %c0_6 = arith.constant 0 : index
    %c0_7 = arith.constant 0 : index
    %9 = vector.load %arg5[%c0_6, %c0_7] : memref<512x128xbf16, #tpu.memory_space<vmem>>, vector<512x128xbf16>
    %cst_8 = arith.constant dense<0.000000e+00> : vector<16x128xf32>
    %10 = tpu.matmul %8, %9, %cst_8 {dimension_numbers = #tpu.dot_dimension_numbers<[1], [0], [0], [1], [0, 0, 1, 1], [], []>} : vector<16x512xbf16>, vector<512x128xbf16>, vector<16x128xf32> -> vector<16x128xf32>
    %c0_9 = arith.constant 0 : index
    %c0_10 = arith.constant 0 : index
    %11 = vector.load %arg6[%c0_9, %c0_10] : memref<1x128xf32, #tpu.memory_space<vmem>>, vector<1x128xf32>
    %12 = vector.broadcast %11 : vector<1x128xf32> to vector<16x128xf32>
    %13 = arith.addf %10, %12 : vector<16x128xf32>
    %14 = vector.extract_strided_slice %13 {offsets = [0, 0], sizes = [16, 64], strides = [1, 1]} : vector<16x128xf32> to vector<16x64xf32>
    %15 = vector.extract_strided_slice %13 {offsets = [0, 64], sizes = [16, 64], strides = [1, 1]} : vector<16x128xf32> to vector<16x64xf32>
    %cst_11 = arith.constant 5.000000e-01 : f32
    %16 = vector.broadcast %cst_11 : f32 to vector<16x64xf32>
    %17 = arith.mulf %16, %15 : vector<16x64xf32>
    %18 = math.exp %17 : vector<16x64xf32>
    %c0_12 = arith.constant 0 : index
    %c0_13 = arith.constant 0 : index
    %19 = vector.load %arg2[%c0_12, %c0_13] : memref<16x64xbf16, #tpu.memory_space<vmem>>, vector<16x64xbf16>
    %20 = arith.extf %19 : vector<16x64xbf16> to vector<16x64xf32>
    %21 = arith.mulf %20, %18 : vector<16x64xf32>
    %22 = arith.addf %21, %14 : vector<16x64xf32>
    %23 = arith.truncf %22 : vector<16x64xf32> to vector<16x64xbf16>
    %c0_14 = arith.constant 0 : index
    %c0_15 = arith.constant 0 : index
    %24 = vector.load %arg7[%c0_14, %c0_15] : memref<64x512xbf16, #tpu.memory_space<vmem>>, vector<64x512xbf16>
    %cst_16 = arith.constant dense<0.000000e+00> : vector<16x512xf32>
    %25 = tpu.matmul %23, %24, %cst_16 {dimension_numbers = #tpu.dot_dimension_numbers<[1], [0], [0], [1], [0, 0, 1, 1], [], []>} : vector<16x64xbf16>, vector<64x512xbf16>, vector<16x512xf32> -> vector<16x512xf32>
    %c0_17 = arith.constant 0 : index
    %c0_18 = arith.constant 0 : index
    %26 = vector.load %arg8[%c0_17, %c0_18] : memref<1x512xf32, #tpu.memory_space<vmem>>, vector<1x512xf32>
    %27 = vector.broadcast %26 : vector<1x512xf32> to vector<16x512xf32>
    %28 = arith.addf %25, %27 : vector<16x512xf32>
    %cst_19 = arith.constant 0.000000e+00 : f32
    %29 = vector.broadcast %cst_19 : f32 to vector<16x512xf32>
    %30 = arith.maximumf %28, %29 : vector<16x512xf32>
    %31 = arith.truncf %30 : vector<16x512xf32> to vector<16x512xbf16>
    %c0_20 = arith.constant 0 : index
    %c0_21 = arith.constant 0 : index
    %32 = vector.load %arg9[%c0_20, %c0_21] : memref<512x896xbf16, #tpu.memory_space<vmem>>, vector<512x896xbf16>
    %cst_22 = arith.constant dense<0.000000e+00> : vector<16x896xf32>
    %33 = tpu.matmul %31, %32, %cst_22 {dimension_numbers = #tpu.dot_dimension_numbers<[1], [0], [0], [1], [0, 0, 1, 1], [], []>} : vector<16x512xbf16>, vector<512x896xbf16>, vector<16x896xf32> -> vector<16x896xf32>
    %c0_23 = arith.constant 0 : index
    %c0_24 = arith.constant 0 : index
    %34 = vector.load %arg10[%c0_23, %c0_24] : memref<1x896xf32, #tpu.memory_space<vmem>>, vector<1x896xf32>
    %35 = vector.broadcast %34 : vector<1x896xf32> to vector<16x896xf32>
    %36 = arith.addf %33, %35 : vector<16x896xf32>
    %37 = arith.truncf %36 : vector<16x896xf32> to vector<16x896xbf16>
    %38 = math.tanh %37 : vector<16x896xbf16>
    %c0_25 = arith.constant 0 : index
    %c0_26 = arith.constant 0 : index
    %39 = vector.load %arg11[%c0_25, %c0_26] : memref<16x896xbf16, #tpu.memory_space<vmem>>, vector<16x896xbf16>
    tpu.vector_store %arg11[%c0_25, %c0_26], %38 {strides = array<i32>} : memref<16x896xbf16, #tpu.memory_space<vmem>>, vector<16x896xbf16>,
    %c0_27 = arith.constant 0 : index
    %c0_28 = arith.constant 0 : index
    %40 = vector.load %arg12[%c0_27, %c0_28] : memref<16x128xf32, #tpu.memory_space<vmem>>, vector<16x128xf32>
    tpu.vector_store %arg12[%c0_27, %c0_28], %13 {strides = array<i32>} : memref<16x128xf32, #tpu.memory_space<vmem>>, vector<16x128xf32>,
    return
  }
  func.func @transform_0(%arg0: i32) -> (i32, i32) {
    %c0_i32 = arith.constant 0 : i32
    %c0_i32_0 = arith.constant 0 : i32
    return %arg0, %c0_i32 : i32, i32
  }
  func.func @transform_1(%arg0: i32) -> (i32, i32) {
    %c0_i32 = arith.constant 0 : i32
    %c0_i32_0 = arith.constant 0 : i32
    return %arg0, %c0_i32 : i32, i32
  }
  func.func @transform_2(%arg0: i32) -> (i32, i32) {
    %c0_i32 = arith.constant 0 : i32
    %c0_i32_0 = arith.constant 0 : i32
    %c0_i32_1 = arith.constant 0 : i32
    return %c0_i32, %c0_i32_0 : i32, i32
  }
  func.func @transform_3(%arg0: i32) -> (i32, i32) {
    %c0_i32 = arith.constant 0 : i32
    %c0_i32_0 = arith.constant 0 : i32
    %c0_i32_1 = arith.constant 0 : i32
    return %c0_i32, %c0_i32_0 : i32, i32
  }
  func.func @transform_4(%arg0: i32) -> (i32, i32) {
    %c0_i32 = arith.constant 0 : i32
    %c0_i32_0 = arith.constant 0 : i32
    %c0_i32_1 = arith.constant 0 : i32
    return %c0_i32, %c0_i32_0 : i32, i32
  }
  func.func @transform_5(%arg0: i32) -> (i32, i32) {
    %c0_i32 = arith.constant 0 : i32
    %c0_i32_0 = arith.constant 0 : i32
    %c0_i32_1 = arith.constant 0 : i32
    return %c0_i32, %c0_i32_0 : i32, i32
  }
  func.func @transform_6(%arg0: i32) -> (i32, i32) {
    %c0_i32 = arith.constant 0 : i32
    %c0_i32_0 = arith.constant 0 : i32
    %c0_i32_1 = arith.constant 0 : i32
    return %c0_i32, %c0_i32_0 : i32, i32
  }
  func.func @transform_7(%arg0: i32) -> (i32, i32) {
    %c0_i32 = arith.constant 0 : i32
    %c0_i32_0 = arith.constant 0 : i32
    %c0_i32_1 = arith.constant 0 : i32
    return %c0_i32, %c0_i32_0 : i32, i32
  }
  func.func @transform_8(%arg0: i32) -> (i32, i32) {
    %c0_i32 = arith.constant 0 : i32
    %c0_i32_0 = arith.constant 0 : i32
    %c0_i32_1 = arith.constant 0 : i32
    return %c0_i32, %c0_i32_0 : i32, i32
  }
  func.func @transform_9(%arg0: i32) -> (i32, i32) {
    %c0_i32 = arith.constant 0 : i32
    %c0_i32_0 = arith.constant 0 : i32
    %c0_i32_1 = arith.constant 0 : i32
    return %c0_i32, %c0_i32_0 : i32, i32
  }
  func.func @transform_10(%arg0: i32) -> (i32, i32) {
    %c0_i32 = arith.constant 0 : i32
    %c0_i32_0 = arith.constant 0 : i32
    return %arg0, %c0_i32 : i32, i32
  }
  func.func @transform_11(%arg0: i32) -> (i32, i32) {
    %c0_i32 = arith.constant 0 : i32
    %c0_i32_0 = arith.constant 0 : i32
    return %arg0, %c0_i32 : i32, i32
  }
}

</mosaic_0001>

<llo_original>
// kernel: vae_forward.1
$region0: #{vae_forward.1}
  #allocation0 [shape = 'u32[]', space=smem, size = 0x4, offset = 0x4, fixed_abs, tag = 'smem constant byte address 0x4 - core index']
  #allocation1 [shape = 'u32[144,128]{1,0:T(1,128)}', space=vmem, size = 0x12000, scoped, tag = 'internal scratch']
  %s0 = inlined_call_operand.vmem [shape: bf16[16,896], index: 0, kind: input, shape index: {}]
  %s1 = inlined_call_operand.vmem [shape: bf16[16,64], index: 1, kind: input, shape index: {}]
  %s2 = inlined_call_operand.hbm [shape: bf16[896,512], index: 2, kind: input, shape index: {}]
  %s3 = inlined_call_operand.vmem [shape: f32[1,512], index: 3, kind: input, shape index: {}]
  %s4 = inlined_call_operand.hbm [shape: bf16[512,128], index: 4, kind: input, shape index: {}]
  %s5 = inlined_call_operand.vmem [shape: f32[1,128], index: 5, kind: input, shape index: {}]
  %s6 = inlined_call_operand.vmem [shape: bf16[64,512], index: 6, kind: input, shape index: {}]
  %s7 = inlined_call_operand.vmem [shape: f32[1,512], index: 7, kind: input, shape index: {}]
  %s8 = inlined_call_operand.hbm [shape: bf16[512,896], index: 8, kind: input, shape index: {}]
  %s9 = inlined_call_operand.vmem [shape: f32[1,896], index: 9, kind: input, shape index: {}]
  %s10 = inlined_call_operand.vmem [shape: bf16[16,896], index: 10, kind: output, shape index: {0}]
  %s11 = inlined_call_operand.vmem [shape: f32[16,128], index: 11, kind: output, shape index: {1}]
  %12 = xla_tuple %s10, %s11
  %s13 = sld [smem:[#allocation0]]
  $region70: #{vae_forward.1} parent=0
    _
  %s15 = ssub.s32 1, %s13
  %s16 = scalar_select 0, %s15, %s13
  $region1: #{vae_forward.1} parent=0
    #allocation2 [shape = 'u8[917504]{0}', space=vmem, size = 0xe0000, scoped, tag = 'input window, operand 2, single buffered']
    #allocation3 [shape = 's32[1]{0}', space=sflag, size = 0x4, scoped, tag = 'scoped memory for vae_forward.1']
    #allocation4 [shape = 'u8[131072]{0}', space=vmem, size = 0x20000, scoped, tag = 'input window, operand 4, single buffered']
    #allocation5 [shape = 's32[1]{0}', space=sflag, size = 0x4, scoped, tag = 'scoped memory for vae_forward.1']
    #allocation6 [shape = 'u8[917504]{0}', space=vmem, size = 0xe0000, scoped, tag = 'input window, operand 8, single buffered']
    %17 = vsyncpa [#allocation3], 0
    %18 = vsyncpa [#allocation5], 0
    // Predicated region
    $region2: #{vae_forward.1} parent=1 // pred_check
      _
    $region3: #{vae_forward.1} parent=1 // pred_check_branch
      %20 = sbr.rel (0) target = $region5
    $region4: #{vae_forward.1} parent=1 // pred_region
      _
    $region5: #{vae_forward.1} parent=1 // pred_fallthru
      _
    // Predicated region
    $region6: #{vae_forward.1} parent=1 // pred_check
      _
    $region7: #{vae_forward.1} parent=1 // pred_check_branch
      %22 = sbr.rel (0) target = $region9
    $region8: #{vae_forward.1} parent=1 // pred_region
      _
    $region9: #{vae_forward.1} parent=1 // pred_fallthru
      _
    // Predicated region
    $region10: #{vae_forward.1} parent=1 // pred_check
      _
    $region11: #{vae_forward.1} parent=1 // pred_check_branch
      %24 = sbr.rel (0) target = $region13
    $region12: #{vae_forward.1} parent=1 // pred_region
      %s26 = ssub.s32 28672, 28672
      %27 = vsyncadd [#allocation3], %s26
      %s28 = sshll.u32 [#allocation2], 4
      %s29 = int_to_ptr.vmem [resolvable:$true] %s28
      %34 = dma.hbm_to_vmem [thread:$0]  %s2, 28672, %s29, [#allocation3], 256, 256, 16
    $region13: #{vae_forward.1} parent=1 // pred_fallthru
      _
    // Predicated region
    $region14: #{vae_forward.1} parent=1 // pred_check
      _
    $region15: #{vae_forward.1} parent=1 // pred_check_branch
      %36 = sbr.rel (0) target = $region17
    $region16: #{vae_forward.1} parent=1 // pred_region
      _
    $region17: #{vae_forward.1} parent=1 // pred_fallthru
      _
    // Predicated region
    $region18: #{vae_forward.1} parent=1 // pred_check
      _
    $region19: #{vae_forward.1} parent=1 // pred_check_branch
      %38 = sbr.rel (0) target = $region21
    $region20: #{vae_forward.1} parent=1 // pred_region
      %s40 = ssub.s32 4096, 4096
      %41 = vsyncadd [#allocation5], %s40
      %s42 = sshll.u32 [#allocation4], 4
      %s43 = int_to_ptr.vmem [resolvable:$true] %s42
      %48 = dma.hbm_to_vmem [thread:$0]  %s4, 4096, %s43, [#allocation5], 64, 64, 4
    $region21: #{vae_forward.1} parent=1 // pred_fallthru
      _
    // Predicated region
    $region22: #{vae_forward.1} parent=1 // pred_check
      _
    $region23: #{vae_forward.1} parent=1 // pred_check_branch
      %50 = sbr.rel (0) target = $region25
    $region24: #{vae_forward.1} parent=1 // pred_region
      _
    $region25: #{vae_forward.1} parent=1 // pred_fallthru
      _
    // Predicated region
    $region26: #{vae_forward.1} parent=1 // pred_check
      _
    $region27: #{vae_forward.1} parent=1 // pred_check_branch
      %52 = sbr.rel (0) target = $region29
    $region28: #{vae_forward.1} parent=1 // pred_region
      _
    $region29: #{vae_forward.1} parent=1 // pred_fallthru
      _
    // Predicated region
    $region30: #{vae_forward.1} parent=1 // pred_check
      _
    $region31: #{vae_forward.1} parent=1 // pred_check_branch
      %54 = sbr.rel (0) target = $region33
    $region32: #{vae_forward.1} parent=1 // pred_region
      _
    $region33: #{vae_forward.1} parent=1 // pred_fallthru
      _
    // Predicated region
    $region34: #{vae_forward.1} parent=1 // pred_check
      _
    $region35: #{vae_forward.1} parent=1 // pred_check_branch
      %56 = sbr.rel (0) target = $region37
    $region36: #{vae_forward.1} parent=1 // pred_region
      %s58 = ssub.s32 28672, 28672
      %59 = vsyncadd [#allocation5], %s58
      %s60 = sshll.u32 [#allocation6], 4
      %s61 = int_to_ptr.vmem [resolvable:$true] %s60
      %66 = dma.hbm_to_vmem [thread:$0]  %s8, 28672, %s61, [#allocation5], 448, 448, 28
    $region37: #{vae_forward.1} parent=1 // pred_fallthru
      _
    // Predicated region
    $region38: #{vae_forward.1} parent=1 // pred_check
      _
    $region39: #{vae_forward.1} parent=1 // pred_check_branch
      %68 = sbr.rel (0) target = $region41
    $region40: #{vae_forward.1} parent=1 // pred_region
      _
    $region41: #{vae_forward.1} parent=1 // pred_fallthru
      _
    // Predicated region
    $region42: #{vae_forward.1} parent=1 // pred_check
      _
    $region43: #{vae_forward.1} parent=1 // pred_check_branch
      %70 = sbr.rel (0) target = $region45
    $region44: #{vae_forward.1} parent=1 // pred_region
      %71 = dma.done [#allocation3], 28672
    $region45: #{vae_forward.1} parent=1 // pred_fallthru
      _
    // Predicated region
    $region46: #{vae_forward.1} parent=1 // pred_check
      _
    $region47: #{vae_forward.1} parent=1 // pred_check_branch
      %73 = sbr.rel (0) target = $region49
    $region48: #{vae_forward.1} parent=1 // pred_region
      %74 = dma.done [#allocation5], 4096
    $region49: #{vae_forward.1} parent=1 // pred_fallthru
      _
    // Predicated region
    $region50: #{vae_forward.1} parent=1 // pred_check
      _
    $region51: #{vae_forward.1} parent=1 // pred_check_branch
      %76 = sbr.rel (0) target = $region53
    $region52: #{vae_forward.1} parent=1 // pred_region
      %77 = dma.done [#allocation5], 28672
    $region53: #{vae_forward.1} parent=1 // pred_fallthru
      _
    %v79 = vld [vmem:[%s0] sm:$0xff]
    %v80 = vld [vmem:[%s0 + $0x8] sm:$0xff]
    %v81 = vld [vmem:[%s0 + $0x10] sm:$0xff]
    %v82 = vld [vmem:[%s0 + $0x18] sm:$0xf]
    %v83 = vld [vmem:[%s0 + $0x1c] sm:$0xff]
    %v84 = vld [vmem:[%s0 + $0x24] sm:$0xff]
    %v85 = vld [vmem:[%s0 + $0x2c] sm:$0xff]
    %v86 = vld [vmem:[%s0 + $0x34] sm:$0xf]
    %v87 = vld [vmem:[#allocation2] sm:$0xff]
    %v88 = vld [vmem:[#allocation2 + $0x8] sm:$0xff]
    %v89 = vld [vmem:[#allocation2 + $0x10] sm:$0xff]
    %v90 = vld [vmem:[#allocation2 + $0x18] sm:$0xff]
    %v91 = vld [vmem:[#allocation2 + $0x20] sm:$0xff]
    %v92 = vld [vmem:[#allocation2 + $0x28] sm:$0xff]
    %v93 = vld [vmem:[#allocation2 + $0x30] sm:$0xff]
    %v94 = vld [vmem:[#allocation2 + $0x38] sm:$0xff]
    %v95 = vld [vmem:[#allocation2 + $0x40] sm:$0xff]
    %v96 = vld [vmem:[#allocation2 + $0x48] sm:$0xff]
    %v97 = vld [vmem:[#allocation2 + $0x50] sm:$0xff]
    %v98 = vld [vmem:[#allocation2 + $0x58] sm:$0xff]
    %v99 = vld [vmem:[#allocation2 + $0x60] sm:$0xff]
    %v100 = vld [vmem:[#allocation2 + $0x68] sm:$0xff]
    %v101 = vld [vmem:[#allocation2 + $0x70] sm:$0xff]
    %v102 = vld [vmem:[#allocation2 + $0x78] sm:$0xff]
    %v103 = vld [vmem:[#allocation2 + $0x80] sm:$0xff]
    %v104 = vld [vmem:[#allocation2 + $0x88] sm:$0xff]
    %v105 = vld [vmem:[#allocation2 + $0x90] sm:$0xff]
    %v106 = vld [vmem:[#allocation2 + $0x98] sm:$0xff]
    %v107 = vld [vmem:[#allocation2 + $0xa0] sm:$0xff]
    %v108 = vld [vmem:[#allocation2 + $0xa8] sm:$0xff]
    %v109 = vld [vmem:[#allocation2 + $0xb0] sm:$0xff]
    %v110 = vld [vmem:[#allocation2 + $0xb8] sm:$0xff]
    %v111 = vld [vmem:[#allocation2 + $0xc0] sm:$0xff]
    %v112 = vld [vmem:[#allocation2 + $0xc8] sm:$0xff]
    %v113 = vld [vmem:[#allocation2 + $0xd0] sm:$0xff]
    %v114 = vld [vmem:[#allocation2 + $0xd8] sm:$0xff]
    %v115 = vld [vmem:[#allocation2 + $0xe0] sm:$0xff]
    %v116 = vld [vmem:[#allocation2 + $0xe8] sm:$0xff]
    %v117 = vld [vmem:[#allocation2 + $0xf0] sm:$0xff]
    %v118 = vld [vmem:[#allocation2 + $0xf8] sm:$0xff]
    %v119 = vld [vmem:[#allocation2 + $0x100] sm:$0xff]
    %v120 = vld [vmem:[#allocation2 + $0x108] sm:$0xff]
    %v121 = vld [vmem:[#allocation2 + $0x110] sm:$0xff]
    %v122 = vld [vmem:[#allocation2 + $0x118] sm:$0xff]
    %v123 = vld [vmem:[#allocation2 + $0x120] sm:$0xff]
    %v124 = vld [vmem:[#allocation2 + $0x128] sm:$0xff]
    %v125 = vld [vmem:[#allocation2 + $0x130] sm:$0xff]
    %v126 = vld [vmem:[#allocation2 + $0x138] sm:$0xff]
    %v127 = vld [vmem:[#allocation2 + $0x140] sm:$0xff]
    %v128 = vld [vmem:[#allocation2 + $0x148] sm:$0xff]
    %v129 = vld [vmem:[#allocation2 + $0x150] sm:$0xff]
    %v130 = vld [vmem:[#allocation2 + $0x158] sm:$0xff]
    %v131 = vld [vmem:[#allocation2 + $0x160] sm:$0xff]
    %v132 = vld [vmem:[#allocation2 + $0x168] sm:$0xff]
    %v133 = vld [vmem:[#allocation2 + $0x170] sm:$0xff]
    %v134 = vld [vmem:[#allocation2 + $0x178] sm:$0xff]
    %v135 = vld [vmem:[#allocation2 + $0x180] sm:$0xff]
    %v136 = vld [vmem:[#allocation2 + $0x188] sm:$0xff]
    %v137 = vld [vmem:[#allocation2 + $0x190] sm:$0xff]
    %v138 = vld [vmem:[#allocation2 + $0x198] sm:$0xff]
    %v139 = vld [vmem:[#allocation2 + $0x1a0] sm:$0xff]
    %v140 = vld [vmem:[#allocation2 + $0x1a8] sm:$0xff]
    %v141 = vld [vmem:[#allocation2 + $0x1b0] sm:$0xff]
    %v142 = vld [vmem:[#allocation2 + $0x1b8] sm:$0xff]
    %v143 = vld [vmem:[#allocation2 + $0x1c0] sm:$0xff]
    %v144 = vld [vmem:[#allocation2 + $0x1c8] sm:$0xff]
    %v145 = vld [vmem:[#allocation2 + $0x1d0] sm:$0xff]
    %v146 = vld [vmem:[#allocation2 + $0x1d8] sm:$0xff]
    %v147 = vld [vmem:[#allocation2 + $0x1e0] sm:$0xff]
    %v148 = vld [vmem:[#allocation2 + $0x1e8] sm:$0xff]
    %v149 = vld [vmem:[#allocation2 + $0x1f0] sm:$0xff]
    %v150 = vld [vmem:[#allocation2 + $0x1f8] sm:$0xff]
    %v151 = vld [vmem:[#allocation2 + $0x200] sm:$0xff]
    %v152 = vld [vmem:[#allocation2 + $0x208] sm:$0xff]
    %v153 = vld [vmem:[#allocation2 + $0x210] sm:$0xff]
    %v154 = vld [vmem:[#allocation2 + $0x218] sm:$0xff]
    %v155 = vld [vmem:[#allocation2 + $0x220] sm:$0xff]
    %v156 = vld [vmem:[#allocation2 + $0x228] sm:$0xff]
    %v157 = vld [vmem:[#allocation2 + $0x230] sm:$0xff]
    %v158 = vld [vmem:[#allocation2 + $0x238] sm:$0xff]
    %v159 = vld [vmem:[#allocation2 + $0x240] sm:$0xff]
    %v160 = vld [vmem:[#allocation2 + $0x248] sm:$0xff]
    %v161 = vld [vmem:[#allocation2 + $0x250] sm:$0xff]
    %v162 = vld [vmem:[#allocation2 + $0x258] sm:$0xff]
    %v163 = vld [vmem:[#allocation2 + $0x260] sm:$0xff]
    %v164 = vld [vmem:[#allocation2 + $0x268] sm:$0xff]
    %v165 = vld [vmem:[#allocation2 + $0x270] sm:$0xff]
    %v166 = vld [vmem:[#allocation2 + $0x278] sm:$0xff]
    %v167 = vld [vmem:[#allocation2 + $0x280] sm:$0xff]
    %v168 = vld [vmem:[#allocation2 + $0x288] sm:$0xff]
    %v169 = vld [vmem:[#allocation2 + $0x290] sm:$0xff]
    %v170 = vld [vmem:[#allocation2 + $0x298] sm:$0xff]
    %v171 = vld [vmem:[#allocation2 + $0x2a0] sm:$0xff]
    %v172 = vld [vmem:[#allocation2 + $0x2a8] sm:$0xff]
    %v173 = vld [vmem:[#allocation2 + $0x2b0] sm:$0xff]
    %v174 = vld [vmem:[#allocation2 + $0x2b8] sm:$0xff]
    %v175 = vld [vmem:[#allocation2 + $0x2c0] sm:$0xff]
    %v176 = vld [vmem:[#allocation2 + $0x2c8] sm:$0xff]
    %v177 = vld [vmem:[#allocation2 + $0x2d0] sm:$0xff]
    %v178 = vld [vmem:[#allocation2 + $0x2d8] sm:$0xff]
    %v179 = vld [vmem:[#allocation2 + $0x2e0] sm:$0xff]
    %v180 = vld [vmem:[#allocation2 + $0x2e8] sm:$0xff]
    %v181 = vld [vmem:[#allocation2 + $0x2f0] sm:$0xff]
    %v182 = vld [vmem:[#allocation2 + $0x2f8] sm:$0xff]
    %v183 = vld [vmem:[#allocation2 + $0x300] sm:$0xff]
    %v184 = vld [vmem:[#allocation2 + $0x308] sm:$0xff]
    %v185 = vld [vmem:[#allocation2 + $0x310] sm:$0xff]
    %v186 = vld [vmem:[#allocation2 + $0x318] sm:$0xff]
    %v187 = vld [vmem:[#allocation2 + $0x320] sm:$0xff]
    %v188 = vld [vmem:[#allocation2 + $0x328] sm:$0xff]
    %v189 = vld [vmem:[#allocation2 + $0x330] sm:$0xff]
    %v190 = vld [vmem:[#allocation2 + $0x338] sm:$0xff]
    %v191 = vld [vmem:[#allocation2 + $0x340] sm:$0xff]
    %v192 = vld [vmem:[#allocation2 + $0x348] sm:$0xff]
    %v193 = vld [vmem:[#allocation2 + $0x350] sm:$0xff]
    %v194 = vld [vmem:[#allocation2 + $0x358] sm:$0xff]
    %v195 = vld [vmem:[#allocation2 + $0x360] sm:$0xff]
    %v196 = vld [vmem:[#allocation2 + $0x368] sm:$0xff]
    %v197 = vld [vmem:[#allocation2 + $0x370] sm:$0xff]
    %v198 = vld [vmem:[#allocation2 + $0x378] sm:$0xff]
    %v199 = vld [vmem:[#allocation2 + $0x380] sm:$0xff]
    %v200 = vld [vmem:[#allocation2 + $0x388] sm:$0xff]
    %v201 = vld [vmem:[#allocation2 + $0x390] sm:$0xff]
    %v202 = vld [vmem:[#allocation2 + $0x398] sm:$0xff]
    %v203 = vld [vmem:[#allocation2 + $0x3a0] sm:$0xff]
    %v204 = vld [vmem:[#allocation2 + $0x3a8] sm:$0xff]
    %v205 = vld [vmem:[#allocation2 + $0x3b0] sm:$0xff]
    %v206 = vld [vmem:[#allocation2 + $0x3b8] sm:$0xff]
    %v207 = vld [vmem:[#allocation2 + $0x3c0] sm:$0xff]
    %v208 = vld [vmem:[#allocation2 + $0x3c8] sm:$0xff]
    %v209 = vld [vmem:[#allocation2 + $0x3d0] sm:$0xff]
    %v210 = vld [vmem:[#allocation2 + $0x3d8] sm:$0xff]
    %v211 = vld [vmem:[#allocation2 + $0x3e0] sm:$0xff]
    %v212 = vld [vmem:[#allocation2 + $0x3e8] sm:$0xff]
    %v213 = vld [vmem:[#allocation2 + $0x3f0] sm:$0xff]
    %v214 = vld [vmem:[#allocation2 + $0x3f8] sm:$0xff]
    %v215 = vld [vmem:[#allocation2 + $0x400] sm:$0xff]
    %v216 = vld [vmem:[#allocation2 + $0x408] sm:$0xff]
    %v217 = vld [vmem:[#allocation2 + $0x410] sm:$0xff]
    %v218 = vld [vmem:[#allocation2 + $0x418] sm:$0xff]
    %v219 = vld [vmem:[#allocation2 + $0x420] sm:$0xff]
    %v220 = vld [vmem:[#allocation2 + $0x428] sm:$0xff]
    %v221 = vld [vmem:[#allocation2 + $0x430] sm:$0xff]
    %v222 = vld [vmem:[#allocation2 + $0x438] sm:$0xff]
    %v223 = vld [vmem:[#allocation2 + $0x440] sm:$0xff]
    %v224 = vld [vmem:[#allocation2 + $0x448] sm:$0xff]
    %v225 = vld [vmem:[#allocation2 + $0x450] sm:$0xff]
    %v226 = vld [vmem:[#allocation2 + $0x458] sm:$0xff]
    %v227 = vld [vmem:[#allocation2 + $0x460] sm:$0xff]
    %v228 = vld [vmem:[#allocation2 + $0x468] sm:$0xff]
    %v229 = vld [vmem:[#allocation2 + $0x470] sm:$0xff]
    %v230 = vld [vmem:[#allocation2 + $0x478] sm:$0xff]
    %v231 = vld [vmem:[#allocation2 + $0x480] sm:$0xff]
    %v232 = vld [vmem:[#allocation2 + $0x488] sm:$0xff]
    %v233 = vld [vmem:[#allocation2 + $0x490] sm:$0xff]
    %v234 = vld [vmem:[#allocation2 + $0x498] sm:$0xff]
    %v235 = vld [vmem:[#allocation2 + $0x4a0] sm:$0xff]
    %v236 = vld [vmem:[#allocation2 + $0x4a8] sm:$0xff]
    %v237 = vld [vmem:[#allocation2 + $0x4b0] sm:$0xff]
    %v238 = vld [vmem:[#allocation2 + $0x4b8] sm:$0xff]
    %v239 = vld [vmem:[#allocation2 + $0x4c0] sm:$0xff]
    %v240 = vld [vmem:[#allocation2 + $0x4c8] sm:$0xff]
    %v241 = vld [vmem:[#allocation2 + $0x4d0] sm:$0xff]
    %v242 = vld [vmem:[#allocation2 + $0x4d8] sm:$0xff]
    %v243 = vld [vmem:[#allocation2 + $0x4e0] sm:$0xff]
    %v244 = vld [vmem:[#allocation2 + $0x4e8] sm:$0xff]
    %v245 = vld [vmem:[#allocation2 + $0x4f0] sm:$0xff]
    %v246 = vld [vmem:[#allocation2 + $0x4f8] sm:$0xff]
    %v247 = vld [vmem:[#allocation2 + $0x500] sm:$0xff]
    %v248 = vld [vmem:[#allocation2 + $0x508] sm:$0xff]
    %v249 = vld [vmem:[#allocation2 + $0x510] sm:$0xff]
    %v250 = vld [vmem:[#allocation2 + $0x518] sm:$0xff]
    %v251 = vld [vmem:[#allocation2 + $0x520] sm:$0xff]
    %v252 = vld [vmem:[#allocation2 + $0x528] sm:$0xff]
    %v253 = vld [vmem:[#allocation2 + $0x530] sm:$0xff]
    %v254 = vld [vmem:[#allocation2 + $0x538] sm:$0xff]
    %v255 = vld [vmem:[#allocation2 + $0x540] sm:$0xff]
    %v256 = vld [vmem:[#allocation2 + $0x548] sm:$0xff]
    %v257 = vld [vmem:[#allocation2 + $0x550] sm:$0xff]
    %v258 = vld [vmem:[#allocation2 + $0x558] sm:$0xff]
    %v259 = vld [vmem:[#allocation2 + $0x560] sm:$0xff]
    %v260 = vld [vmem:[#allocation2 + $0x568] sm:$0xff]
    %v261 = vld [vmem:[#allocation2 + $0x570] sm:$0xff]
    %v262 = vld [vmem:[#allocation2 + $0x578] sm:$0xff]
    %v263 = vld [vmem:[#allocation2 + $0x580] sm:$0xff]
    %v264 = vld [vmem:[#allocation2 + $0x588] sm:$0xff]
    %v265 = vld [vmem:[#allocation2 + $0x590] sm:$0xff]
    %v266 = vld [vmem:[#allocation2 + $0x598] sm:$0xff]
    %v267 = vld [vmem:[#allocation2 + $0x5a0] sm:$0xff]
    %v268 = vld [vmem:[#allocation2 + $0x5a8] sm:$0xff]
    %v269 = vld [vmem:[#allocation2 + $0x5b0] sm:$0xff]
    %v270 = vld [vmem:[#allocation2 + $0x5b8] sm:$0xff]
    %v271 = vld [vmem:[#allocation2 + $0x5c0] sm:$0xff]
    %v272 = vld [vmem:[#allocation2 + $0x5c8] sm:$0xff]
    %v273 = vld [vmem:[#allocation2 + $0x5d0] sm:$0xff]
    %v274 = vld [vmem:[#allocation2 + $0x5d8] sm:$0xff]
    %v275 = vld [vmem:[#allocation2 + $0x5e0] sm:$0xff]
    %v276 = vld [vmem:[#allocation2 + $0x5e8] sm:$0xff]
    %v277 = vld [vmem:[#allocation2 + $0x5f0] sm:$0xff]
    %v278 = vld [vmem:[#allocation2 + $0x5f8] sm:$0xff]
    %v279 = vld [vmem:[#allocation2 + $0x600] sm:$0xff]
    %v280 = vld [vmem:[#allocation2 + $0x608] sm:$0xff]
    %v281 = vld [vmem:[#allocation2 + $0x610] sm:$0xff]
    %v282 = vld [vmem:[#allocation2 + $0x618] sm:$0xff]
    %v283 = vld [vmem:[#allocation2 + $0x620] sm:$0xff]
    %v284 = vld [vmem:[#allocation2 + $0x628] sm:$0xff]
    %v285 = vld [vmem:[#allocation2 + $0x630] sm:$0xff]
    %v286 = vld [vmem:[#allocation2 + $0x638] sm:$0xff]
    %v287 = vld [vmem:[#allocation2 + $0x640] sm:$0xff]
    %v288 = vld [vmem:[#allocation2 + $0x648] sm:$0xff]
    %v289 = vld [vmem:[#allocation2 + $0x650] sm:$0xff]
    %v290 = vld [vmem:[#allocation2 + $0x658] sm:$0xff]
    %v291 = vld [vmem:[#allocation2 + $0x660] sm:$0xff]
    %v292 = vld [vmem:[#allocation2 + $0x668] sm:$0xff]
    %v293 = vld [vmem:[#allocation2 + $0x670] sm:$0xff]
    %v294 = vld [vmem:[#allocation2 + $0x678] sm:$0xff]
    %v295 = vld [vmem:[#allocation2 + $0x680] sm:$0xff]
    %v296 = vld [vmem:[#allocation2 + $0x688] sm:$0xff]
    %v297 = vld [vmem:[#allocation2 + $0x690] sm:$0xff]
    %v298 = vld [vmem:[#allocation2 + $0x698] sm:$0xff]
    %v299 = vld [vmem:[#allocation2 + $0x6a0] sm:$0xff]
    %v300 = vld [vmem:[#allocation2 + $0x6a8] sm:$0xff]
    %v301 = vld [vmem:[#allocation2 + $0x6b0] sm:$0xff]
    %v302 = vld [vmem:[#allocation2 + $0x6b8] sm:$0xff]
    %v303 = vld [vmem:[#allocation2 + $0x6c0] sm:$0xff]
    %v304 = vld [vmem:[#allocation2 + $0x6c8] sm:$0xff]
    %v305 = vld [vmem:[#allocation2 + $0x6d0] sm:$0xff]
    %v306 = vld [vmem:[#allocation2 + $0x6d8] sm:$0xff]
    %v307 = vld [vmem:[#allocation2 + $0x6e0] sm:$0xff]
    %v308 = vld [vmem:[#allocation2 + $0x6e8] sm:$0xff]
    %v309 = vld [vmem:[#allocation2 + $0x6f0] sm:$0xff]
    %v310 = vld [vmem:[#allocation2 + $0x6f8] sm:$0xff]
    %v311 = vld [vmem:[%s3] sm:$0xf]
    %v313 = vlaneseq
    %v314 = vshrl.u32 %v313, 7
    %v315 = vsub.s32 0, %v314
    %v316 = vrot.slane %v311, %v315
    %v317 = vlaneseq
    %v318 = vshrl.u32 %v317, 7
    %v319 = vsub.s32 1, %v318
    %v320 = vrot.slane %v311, %v319
    %v321 = vlaneseq
    %v322 = vshrl.u32 %v321, 7
    %v323 = vsub.s32 2, %v322
    %v324 = vrot.slane %v311, %v323
    %v325 = vlaneseq
    %v326 = vshrl.u32 %v325, 7
    %v327 = vsub.s32 3, %v326
    %v328 = vrot.slane %v311, %v327
    %v341 = vunpack.c.l.b16 %v79
    %v342 = vunpack.c.h.b16 %v79
    %v343 = vunpack.c.l.b16 %v80
    %v344 = vunpack.c.h.b16 %v80
    %v345 = vunpack.c.l.b16 %v81
    %v346 = vunpack.c.h.b16 %v81
    %v347 = vunpack.c.l.b16 %v82
    %v348 = vunpack.c.l.b16 %v83
    %v349 = vunpack.c.h.b16 %v83
    %v350 = vunpack.c.l.b16 %v84
    %v351 = vunpack.c.h.b16 %v84
    %v352 = vunpack.c.l.b16 %v85
    %v353 = vunpack.c.h.b16 %v85
    %v354 = vunpack.c.l.b16 %v86
    %v355 = vpack.c.b16 %v348, %v341
    %v356 = vpack.c.b16 %v349, %v342
    %v357 = vpack.c.b16 %v350, %v343
    %v358 = vpack.c.b16 %v351, %v344
    %v359 = vpack.c.b16 %v352, %v345
    %v360 = vpack.c.b16 %v353, %v346
    %v361 = vpack.c.b16 %v354, %v347
    %v593 = vunpack.c.l.b16 %v87
    %v594 = vunpack.c.h.b16 %v87
    %v595 = vunpack.c.l.b16 %v88
    %v596 = vunpack.c.h.b16 %v88
    %v597 = vunpack.c.l.b16 %v89
    %v598 = vunpack.c.h.b16 %v89
    %v599 = vunpack.c.l.b16 %v90
    %v600 = vunpack.c.h.b16 %v90
    %v601 = vunpack.c.l.b16 %v91
    %v602 = vunpack.c.h.b16 %v91
    %v603 = vunpack.c.l.b16 %v92
    %v604 = vunpack.c.h.b16 %v92
    %v605 = vunpack.c.l.b16 %v93
    %v606 = vunpack.c.h.b16 %v93
    %v607 = vunpack.c.l.b16 %v94
    %v608 = vunpack.c.h.b16 %v94
    %v609 = vunpack.c.l.b16 %v95
    %v610 = vunpack.c.h.b16 %v95
    %v611 = vunpack.c.l.b16 %v96
    %v612 = vunpack.c.h.b16 %v96
    %v613 = vunpack.c.l.b16 %v97
    %v614 = vunpack.c.h.b16 %v97
    %v615 = vunpack.c.l.b16 %v98
    %v616 = vunpack.c.h.b16 %v98
    %v617 = vunpack.c.l.b16 %v99
    %v618 = vunpack.c.h.b16 %v99
    %v619 = vunpack.c.l.b16 %v100
    %v620 = vunpack.c.h.b16 %v100
    %v621 = vunpack.c.l.b16 %v101
    %v622 = vunpack.c.h.b16 %v101
    %v623 = vunpack.c.l.b16 %v102
    %v624 = vunpack.c.h.b16 %v102
    %v625 = vunpack.c.l.b16 %v103
    %v626 = vunpack.c.h.b16 %v103
    %v627 = vunpack.c.l.b16 %v104
    %v628 = vunpack.c.h.b16 %v104
    %v629 = vunpack.c.l.b16 %v105
    %v630 = vunpack.c.h.b16 %v105
    %v631 = vunpack.c.l.b16 %v106
    %v632 = vunpack.c.h.b16 %v106
    %v633 = vunpack.c.l.b16 %v107
    %v634 = vunpack.c.h.b16 %v107
    %v635 = vunpack.c.l.b16 %v108
    %v636 = vunpack.c.h.b16 %v108
    %v637 = vunpack.c.l.b16 %v109
    %v638 = vunpack.c.h.b16 %v109
    %v639 = vunpack.c.l.b16 %v110
    %v640 = vunpack.c.h.b16 %v110
    %v641 = vunpack.c.l.b16 %v111
    %v642 = vunpack.c.h.b16 %v111
    %v643 = vunpack.c.l.b16 %v112
    %v644 = vunpack.c.h.b16 %v112
    %v645 = vunpack.c.l.b16 %v113
    %v646 = vunpack.c.h.b16 %v113
    %v647 = vunpack.c.l.b16 %v114
    %v648 = vunpack.c.h.b16 %v114
    %v649 = vunpack.c.l.b16 %v115
    %v650 = vunpack.c.h.b16 %v115
    %v651 = vunpack.c.l.b16 %v116
    %v652 = vunpack.c.h.b16 %v116
    %v653 = vunpack.c.l.b16 %v117
    %v654 = vunpack.c.h.b16 %v117
    %v655 = vunpack.c.l.b16 %v118
    %v656 = vunpack.c.h.b16 %v118
    %v657 = vunpack.c.l.b16 %v119
    %v658 = vunpack.c.h.b16 %v119
    %v659 = vunpack.c.l.b16 %v120
    %v660 = vunpack.c.h.b16 %v120
    %v661 = vunpack.c.l.b16 %v121
    %v662 = vunpack.c.h.b16 %v121
    %v663 = vunpack.c.l.b16 %v122
    %v664 = vunpack.c.h.b16 %v122
    %v665 = vunpack.c.l.b16 %v123
    %v666 = vunpack.c.h.b16 %v123
    %v667 = vunpack.c.l.b16 %v124
    %v668 = vunpack.c.h.b16 %v124
    %v669 = vunpack.c.l.b16 %v125
    %v670 = vunpack.c.h.b16 %v125
    %v671 = vunpack.c.l.b16 %v126
    %v672 = vunpack.c.h.b16 %v126
    %v673 = vunpack.c.l.b16 %v127
    %v674 = vunpack.c.h.b16 %v127
    %v675 = vunpack.c.l.b16 %v128
    %v676 = vunpack.c.h.b16 %v128
    %v677 = vunpack.c.l.b16 %v129
    %v678 = vunpack.c.h.b16 %v129
    %v679 = vunpack.c.l.b16 %v130
    %v680 = vunpack.c.h.b16 %v130
    %v681 = vunpack.c.l.b16 %v131
    %v682 = vunpack.c.h.b16 %v131
    %v683 = vunpack.c.l.b16 %v132
    %v684 = vunpack.c.h.b16 %v132
    %v685 = vunpack.c.l.b16 %v133
    %v686 = vunpack.c.h.b16 %v133
    %v687 = vunpack.c.l.b16 %v134
    %v688 = vunpack.c.h.b16 %v134
    %v689 = vunpack.c.l.b16 %v135
    %v690 = vunpack.c.h.b16 %v135
    %v691 = vunpack.c.l.b16 %v136
    %v692 = vunpack.c.h.b16 %v136
    %v693 = vunpack.c.l.b16 %v137
    %v694 = vunpack.c.h.b16 %v137
    %v695 = vunpack.c.l.b16 %v138
    %v696 = vunpack.c.h.b16 %v138
    %v697 = vunpack.c.l.b16 %v139
    %v698 = vunpack.c.h.b16 %v139
    %v699 = vunpack.c.l.b16 %v140
    %v700 = vunpack.c.h.b16 %v140
    %v701 = vunpack.c.l.b16 %v141
    %v702 = vunpack.c.h.b16 %v141
    %v703 = vunpack.c.l.b16 %v142
    %v704 = vunpack.c.h.b16 %v142
    %v705 = vunpack.c.l.b16 %v143
    %v706 = vunpack.c.h.b16 %v143
    %v707 = vunpack.c.l.b16 %v144
    %v708 = vunpack.c.h.b16 %v144
    %v709 = vunpack.c.l.b16 %v145
    %v710 = vunpack.c.h.b16 %v145
    %v711 = vunpack.c.l.b16 %v146
    %v712 = vunpack.c.h.b16 %v146
    %v713 = vunpack.c.l.b16 %v147
    %v714 = vunpack.c.h.b16 %v147
    %v715 = vunpack.c.l.b16 %v148
    %v716 = vunpack.c.h.b16 %v148
    %v717 = vunpack.c.l.b16 %v149
    %v718 = vunpack.c.h.b16 %v149
    %v719 = vunpack.c.l.b16 %v150
    %v720 = vunpack.c.h.b16 %v150
    %v721 = vunpack.c.l.b16 %v151
    %v722 = vunpack.c.h.b16 %v151
    %v723 = vunpack.c.l.b16 %v152
    %v724 = vunpack.c.h.b16 %v152
    %v725 = vunpack.c.l.b16 %v153
    %v726 = vunpack.c.h.b16 %v153
    %v727 = vunpack.c.l.b16 %v154
    %v728 = vunpack.c.h.b16 %v154
    %v729 = vunpack.c.l.b16 %v155
    %v730 = vunpack.c.h.b16 %v155
    %v731 = vunpack.c.l.b16 %v156
    %v732 = vunpack.c.h.b16 %v156
    %v733 = vunpack.c.l.b16 %v157
    %v734 = vunpack.c.h.b16 %v157
    %v735 = vunpack.c.l.b16 %v158
    %v736 = vunpack.c.h.b16 %v158
    %v737 = vunpack.c.l.b16 %v159
    %v738 = vunpack.c.h.b16 %v159
    %v739 = vunpack.c.l.b16 %v160
    %v740 = vunpack.c.h.b16 %v160
    %v741 = vunpack.c.l.b16 %v161
    %v742 = vunpack.c.h.b16 %v161
    %v743 = vunpack.c.l.b16 %v162
    %v744 = vunpack.c.h.b16 %v162
    %v745 = vunpack.c.l.b16 %v163
    %v746 = vunpack.c.h.b16 %v163
    %v747 = vunpack.c.l.b16 %v164
    %v748 = vunpack.c.h.b16 %v164
    %v749 = vunpack.c.l.b16 %v165
    %v750 = vunpack.c.h.b16 %v165
    %v751 = vunpack.c.l.b16 %v166
    %v752 = vunpack.c.h.b16 %v166
    %v753 = vunpack.c.l.b16 %v167
    %v754 = vunpack.c.h.b16 %v167
    %v755 = vunpack.c.l.b16 %v168
    %v756 = vunpack.c.h.b16 %v168
    %v757 = vunpack.c.l.b16 %v169
    %v758 = vunpack.c.h.b16 %v169
    %v759 = vunpack.c.l.b16 %v170
    %v760 = vunpack.c.h.b16 %v170
    %v761 = vunpack.c.l.b16 %v171
    %v762 = vunpack.c.h.b16 %v171
    %v763 = vunpack.c.l.b16 %v172
    %v764 = vunpack.c.h.b16 %v172
    %v765 = vunpack.c.l.b16 %v173
    %v766 = vunpack.c.h.b16 %v173
    %v767 = vunpack.c.l.b16 %v174
    %v768 = vunpack.c.h.b16 %v174
    %v769 = vunpack.c.l.b16 %v175
    %v770 = vunpack.c.h.b16 %v175
    %v771 = vunpack.c.l.b16 %v176
    %v772 = vunpack.c.h.b16 %v176
    %v773 = vunpack.c.l.b16 %v177
    %v774 = vunpack.c.h.b16 %v177
    %v775 = vunpack.c.l.b16 %v178
    %v776 = vunpack.c.h.b16 %v178
    %v777 = vunpack.c.l.b16 %v179
    %v778 = vunpack.c.h.b16 %v179
    %v779 = vunpack.c.l.b16 %v180
    %v780 = vunpack.c.h.b16 %v180
    %v781 = vunpack.c.l.b16 %v181
    %v782 = vunpack.c.h.b16 %v181
    %v783 = vunpack.c.l.b16 %v182
    %v784 = vunpack.c.h.b16 %v182
    %v785 = vunpack.c.l.b16 %v183
    %v786 = vunpack.c.h.b16 %v183
    %v787 = vunpack.c.l.b16 %v184
    %v788 = vunpack.c.h.b16 %v184
    %v789 = vunpack.c.l.b16 %v185
    %v790 = vunpack.c.h.b16 %v185
    %v791 = vunpack.c.l.b16 %v186
    %v792 = vunpack.c.h.b16 %v186
    %v793 = vunpack.c.l.b16 %v187
    %v794 = vunpack.c.h.b16 %v187
    %v795 = vunpack.c.l.b16 %v188
    %v796 = vunpack.c.h.b16 %v188
    %v797 = vunpack.c.l.b16 %v189
    %v798 = vunpack.c.h.b16 %v189
    %v799 = vunpack.c.l.b16 %v190
    %v800 = vunpack.c.h.b16 %v190
    %v801 = vunpack.c.l.b16 %v191
    %v802 = vunpack.c.h.b16 %v191
    %v803 = vunpack.c.l.b16 %v192
    %v804 = vunpack.c.h.b16 %v192
    %v805 = vunpack.c.l.b16 %v193
    %v806 = vunpack.c.h.b16 %v193
    %v807 = vunpack.c.l.b16 %v194
    %v808 = vunpack.c.h.b16 %v194
    %v809 = vunpack.c.l.b16 %v195
    %v810 = vunpack.c.h.b16 %v195
    %v811 = vunpack.c.l.b16 %v196
    %v812 = vunpack.c.h.b16 %v196
    %v813 = vunpack.c.l.b16 %v197
    %v814 = vunpack.c.h.b16 %v197
    %v815 = vunpack.c.l.b16 %v198
    %v816 = vunpack.c.h.b16 %v198
    %v817 = vunpack.c.l.b16 %v199
    %v818 = vunpack.c.h.b16 %v199
    %v819 = vunpack.c.l.b16 %v200
    %v820 = vunpack.c.h.b16 %v200
    %v821 = vunpack.c.l.b16 %v201
    %v822 = vunpack.c.h.b16 %v201
    %v823 = vunpack.c.l.b16 %v202
    %v824 = vunpack.c.h.b16 %v202
    %v825 = vunpack.c.l.b16 %v203
    %v826 = vunpack.c.h.b16 %v203
    %v827 = vunpack.c.l.b16 %v204
    %v828 = vunpack.c.h.b16 %v204
    %v829 = vunpack.c.l.b16 %v205
    %v830 = vunpack.c.h.b16 %v205
    %v831 = vunpack.c.l.b16 %v206
    %v832 = vunpack.c.h.b16 %v206
    %v833 = vunpack.c.l.b16 %v207
    %v834 = vunpack.c.h.b16 %v207
    %v835 = vunpack.c.l.b16 %v208
    %v836 = vunpack.c.h.b16 %v208
    %v837 = vunpack.c.l.b16 %v209
    %v838 = vunpack.c.h.b16 %v209
    %v839 = vunpack.c.l.b16 %v210
    %v840 = vunpack.c.h.b16 %v210
    %v841 = vunpack.c.l.b16 %v211
    %v842 = vunpack.c.h.b16 %v211
    %v843 = vunpack.c.l.b16 %v212
    %v844 = vunpack.c.h.b16 %v212
    %v845 = vunpack.c.l.b16 %v213
    %v846 = vunpack.c.h.b16 %v213
    %v847 = vunpack.c.l.b16 %v214
    %v848 = vunpack.c.h.b16 %v214
    %v849 = vunpack.c.l.b16 %v215
    %v850 = vunpack.c.h.b16 %v215
    %v851 = vunpack.c.l.b16 %v216
    %v852 = vunpack.c.h.b16 %v216
    %v853 = vunpack.c.l.b16 %v217
    %v854 = vunpack.c.h.b16 %v217
    %v855 = vunpack.c.l.b16 %v218
    %v856 = vunpack.c.h.b16 %v218
    %v857 = vunpack.c.l.b16 %v219
    %v858 = vunpack.c.h.b16 %v219
    %v859 = vunpack.c.l.b16 %v220
    %v860 = vunpack.c.h.b16 %v220
    %v861 = vunpack.c.l.b16 %v221
    %v862 = vunpack.c.h.b16 %v221
    %v863 = vunpack.c.l.b16 %v222
    %v864 = vunpack.c.h.b16 %v222
    %v865 = vunpack.c.l.b16 %v223
    %v866 = vunpack.c.h.b16 %v223
    %v867 = vunpack.c.l.b16 %v224
    %v868 = vunpack.c.h.b16 %v224
    %v869 = vunpack.c.l.b16 %v225
    %v870 = vunpack.c.h.b16 %v225
    %v871 = vunpack.c.l.b16 %v226
    %v872 = vunpack.c.h.b16 %v226
    %v873 = vunpack.c.l.b16 %v227
    %v874 = vunpack.c.h.b16 %v227
    %v875 = vunpack.c.l.b16 %v228
    %v876 = vunpack.c.h.b16 %v228
    %v877 = vunpack.c.l.b16 %v229
    %v878 = vunpack.c.h.b16 %v229
    %v879 = vunpack.c.l.b16 %v230
    %v880 = vunpack.c.h.b16 %v230
    %v881 = vunpack.c.l.b16 %v231
    %v882 = vunpack.c.h.b16 %v231
    %v883 = vunpack.c.l.b16 %v232
    %v884 = vunpack.c.h.b16 %v232
    %v885 = vunpack.c.l.b16 %v233
    %v886 = vunpack.c.h.b16 %v233
    %v887 = vunpack.c.l.b16 %v234
    %v888 = vunpack.c.h.b16 %v234
    %v889 = vunpack.c.l.b16 %v235
    %v890 = vunpack.c.h.b16 %v235
    %v891 = vunpack.c.l.b16 %v236
    %v892 = vunpack.c.h.b16 %v236
    %v893 = vunpack.c.l.b16 %v237
    %v894 = vunpack.c.h.b16 %v237
    %v895 = vunpack.c.l.b16 %v238
    %v896 = vunpack.c.h.b16 %v238
    %v897 = vunpack.c.l.b16 %v239
    %v898 = vunpack.c.h.b16 %v239
    %v899 = vunpack.c.l.b16 %v240
    %v900 = vunpack.c.h.b16 %v240
    %v901 = vunpack.c.l.b16 %v241
    %v902 = vunpack.c.h.b16 %v241
    %v903 = vunpack.c.l.b16 %v242
    %v904 = vunpack.c.h.b16 %v242
    %v905 = vunpack.c.l.b16 %v243
    %v906 = vunpack.c.h.b16 %v243
    %v907 = vunpack.c.l.b16 %v244
    %v908 = vunpack.c.h.b16 %v244
    %v909 = vunpack.c.l.b16 %v245
    %v910 = vunpack.c.h.b16 %v245
    %v911 = vunpack.c.l.b16 %v246
    %v912 = vunpack.c.h.b16 %v246
    %v913 = vunpack.c.l.b16 %v247
    %v914 = vunpack.c.h.b16 %v247
    %v915 = vunpack.c.l.b16 %v248
    %v916 = vunpack.c.h.b16 %v248
    %v917 = vunpack.c.l.b16 %v249
    %v918 = vunpack.c.h.b16 %v249
    %v919 = vunpack.c.l.b16 %v250
    %v920 = vunpack.c.h.b16 %v250
    %v921 = vunpack.c.l.b16 %v251
    %v922 = vunpack.c.h.b16 %v251
    %v923 = vunpack.c.l.b16 %v252
    %v924 = vunpack.c.h.b16 %v252
    %v925 = vunpack.c.l.b16 %v253
    %v926 = vunpack.c.h.b16 %v253
    %v927 = vunpack.c.l.b16 %v254
    %v928 = vunpack.c.h.b16 %v254
    %v929 = vunpack.c.l.b16 %v255
    %v930 = vunpack.c.h.b16 %v255
    %v931 = vunpack.c.l.b16 %v256
    %v932 = vunpack.c.h.b16 %v256
    %v933 = vunpack.c.l.b16 %v257
    %v934 = vunpack.c.h.b16 %v257
    %v935 = vunpack.c.l.b16 %v258
    %v936 = vunpack.c.h.b16 %v258
    %v937 = vunpack.c.l.b16 %v259
    %v938 = vunpack.c.h.b16 %v259
    %v939 = vunpack.c.l.b16 %v260
    %v940 = vunpack.c.h.b16 %v260
    %v941 = vunpack.c.l.b16 %v261
    %v942 = vunpack.c.h.b16 %v261
    %v943 = vunpack.c.l.b16 %v262
    %v944 = vunpack.c.h.b16 %v262
    %v945 = vunpack.c.l.b16 %v263
    %v946 = vunpack.c.h.b16 %v263
    %v947 = vunpack.c.l.b16 %v264
    %v948 = vunpack.c.h.b16 %v264
    %v949 = vunpack.c.l.b16 %v265
    %v950 = vunpack.c.h.b16 %v265
    %v951 = vunpack.c.l.b16 %v266
    %v952 = vunpack.c.h.b16 %v266
    %v953 = vunpack.c.l.b16 %v267
    %v954 = vunpack.c.h.b16 %v267
    %v955 = vunpack.c.l.b16 %v268
    %v956 = vunpack.c.h.b16 %v268
    %v957 = vunpack.c.l.b16 %v269
    %v958 = vunpack.c.h.b16 %v269
    %v959 = vunpack.c.l.b16 %v270
    %v960 = vunpack.c.h.b16 %v270
    %v961 = vunpack.c.l.b16 %v271
    %v962 = vunpack.c.h.b16 %v271
    %v963 = vunpack.c.l.b16 %v272
    %v964 = vunpack.c.h.b16 %v272
    %v965 = vunpack.c.l.b16 %v273
    %v966 = vunpack.c.h.b16 %v273
    %v967 = vunpack.c.l.b16 %v274
    %v968 = vunpack.c.h.b16 %v274
    %v969 = vunpack.c.l.b16 %v275
    %v970 = vunpack.c.h.b16 %v275
    %v971 = vunpack.c.l.b16 %v276
    %v972 = vunpack.c.h.b16 %v276
    %v973 = vunpack.c.l.b16 %v277
    %v974 = vunpack.c.h.b16 %v277
    %v975 = vunpack.c.l.b16 %v278
    %v976 = vunpack.c.h.b16 %v278
    %v977 = vunpack.c.l.b16 %v279
    %v978 = vunpack.c.h.b16 %v279
    %v979 = vunpack.c.l.b16 %v280
    %v980 = vunpack.c.h.b16 %v280
    %v981 = vunpack.c.l.b16 %v281
    %v982 = vunpack.c.h.b16 %v281
    %v983 = vunpack.c.l.b16 %v282
    %v984 = vunpack.c.h.b16 %v282
    %v985 = vunpack.c.l.b16 %v283
    %v986 = vunpack.c.h.b16 %v283
    %v987 = vunpack.c.l.b16 %v284
    %v988 = vunpack.c.h.b16 %v284
    %v989 = vunpack.c.l.b16 %v285
    %v990 = vunpack.c.h.b16 %v285
    %v991 = vunpack.c.l.b16 %v286
    %v992 = vunpack.c.h.b16 %v286
    %v993 = vunpack.c.l.b16 %v287
    %v994 = vunpack.c.h.b16 %v287
    %v995 = vunpack.c.l.b16 %v288
    %v996 = vunpack.c.h.b16 %v288
    %v997 = vunpack.c.l.b16 %v289
    %v998 = vunpack.c.h.b16 %v289
    %v999 = vunpack.c.l.b16 %v290
    %v1000 = vunpack.c.h.b16 %v290
    %v1001 = vunpack.c.l.b16 %v291
    %v1002 = vunpack.c.h.b16 %v291
    %v1003 = vunpack.c.l.b16 %v292
    %v1004 = vunpack.c.h.b16 %v292
    %v1005 = vunpack.c.l.b16 %v293
    %v1006 = vunpack.c.h.b16 %v293
    %v1007 = vunpack.c.l.b16 %v294
    %v1008 = vunpack.c.h.b16 %v294
    %v1009 = vunpack.c.l.b16 %v295
    %v1010 = vunpack.c.h.b16 %v295
    %v1011 = vunpack.c.l.b16 %v296
    %v1012 = vunpack.c.h.b16 %v296
    %v1013 = vunpack.c.l.b16 %v297
    %v1014 = vunpack.c.h.b16 %v297
    %v1015 = vunpack.c.l.b16 %v298
    %v1016 = vunpack.c.h.b16 %v298
    %v1017 = vunpack.c.l.b16 %v299
    %v1018 = vunpack.c.h.b16 %v299
    %v1019 = vunpack.c.l.b16 %v300
    %v1020 = vunpack.c.h.b16 %v300
    %v1021 = vunpack.c.l.b16 %v301
    %v1022 = vunpack.c.h.b16 %v301
    %v1023 = vunpack.c.l.b16 %v302
    %v1024 = vunpack.c.h.b16 %v302
    %v1025 = vunpack.c.l.b16 %v303
    %v1026 = vunpack.c.h.b16 %v303
    %v1027 = vunpack.c.l.b16 %v304
    %v1028 = vunpack.c.h.b16 %v304
    %v1029 = vunpack.c.l.b16 %v305
    %v1030 = vunpack.c.h.b16 %v305
    %v1031 = vunpack.c.l.b16 %v306
    %v1032 = vunpack.c.h.b16 %v306
    %v1033 = vunpack.c.l.b16 %v307
    %v1034 = vunpack.c.h.b16 %v307
    %v1035 = vunpack.c.l.b16 %v308
    %v1036 = vunpack.c.h.b16 %v308
    %v1037 = vunpack.c.l.b16 %v309
    %v1038 = vunpack.c.h.b16 %v309
    %v1039 = vunpack.c.l.b16 %v310
    %v1040 = vunpack.c.h.b16 %v310
    %v1041 = vpack.c.b16 %v597, %v593
    %v1042 = vpack.c.b16 %v598, %v594
    %v1043 = vpack.c.b16 %v599, %v595
    %v1044 = vpack.c.b16 %v600, %v596
    %v1045 = vpack.c.b16 %v605, %v601
    %v1046 = vpack.c.b16 %v606, %v602
    %v1047 = vpack.c.b16 %v607, %v603
    %v1048 = vpack.c.b16 %v608, %v604
    %v1049 = vpack.c.b16 %v613, %v609
    %v1050 = vpack.c.b16 %v614, %v610
    %v1051 = vpack.c.b16 %v615, %v611
    %v1052 = vpack.c.b16 %v616, %v612
    %v1053 = vpack.c.b16 %v621, %v617
    %v1054 = vpack.c.b16 %v622, %v618
    %v1055 = vpack.c.b16 %v623, %v619
    %v1056 = vpack.c.b16 %v624, %v620
    %v1057 = vpack.c.b16 %v629, %v625
    %v1058 = vpack.c.b16 %v630, %v626
    %v1059 = vpack.c.b16 %v631, %v627
    %v1060 = vpack.c.b16 %v632, %v628
    %v1061 = vpack.c.b16 %v637, %v633
    %v1062 = vpack.c.b16 %v638, %v634
    %v1063 = vpack.c.b16 %v639, %v635
    %v1064 = vpack.c.b16 %v640, %v636
    %v1065 = vpack.c.b16 %v645, %v641
    %v1066 = vpack.c.b16 %v646, %v642
    %v1067 = vpack.c.b16 %v647, %v643
    %v1068 = vpack.c.b16 %v648, %v644
    %v1069 = vpack.c.b16 %v653, %v649
    %v1070 = vpack.c.b16 %v654, %v650
    %v1071 = vpack.c.b16 %v655, %v651
    %v1072 = vpack.c.b16 %v656, %v652
    %v1073 = vpack.c.b16 %v661, %v657
    %v1074 = vpack.c.b16 %v662, %v658
    %v1075 = vpack.c.b16 %v663, %v659
    %v1076 = vpack.c.b16 %v664, %v660
    %v1077 = vpack.c.b16 %v669, %v665
    %v1078 = vpack.c.b16 %v670, %v666
    %v1079 = vpack.c.b16 %v671, %v667
    %v1080 = vpack.c.b16 %v672, %v668
    %v1081 = vpack.c.b16 %v677, %v673
    %v1082 = vpack.c.b16 %v678, %v674
    %v1083 = vpack.c.b16 %v679, %v675
    %v1084 = vpack.c.b16 %v680, %v676
    %v1085 = vpack.c.b16 %v685, %v681
    %v1086 = vpack.c.b16 %v686, %v682
    %v1087 = vpack.c.b16 %v687, %v683
    %v1088 = vpack.c.b16 %v688, %v684
    %v1089 = vpack.c.b16 %v693, %v689
    %v1090 = vpack.c.b16 %v694, %v690
    %v1091 = vpack.c.b16 %v695, %v691
    %v1092 = vpack.c.b16 %v696, %v692
    %v1093 = vpack.c.b16 %v701, %v697
    %v1094 = vpack.c.b16 %v702, %v698
    %v1095 = vpack.c.b16 %v703, %v699
    %v1096 = vpack.c.b16 %v704, %v700
    %v1097 = vpack.c.b16 %v709, %v705
    %v1098 = vpack.c.b16 %v710, %v706
    %v1099 = vpack.c.b16 %v711, %v707
    %v1100 = vpack.c.b16 %v712, %v708
    %v1101 = vpack.c.b16 %v717, %v713
    %v1102 = vpack.c.b16 %v718, %v714
    %v1103 = vpack.c.b16 %v719, %v715
    %v1104 = vpack.c.b16 %v720, %v716
    %v1105 = vpack.c.b16 %v725, %v721
    %v1106 = vpack.c.b16 %v726, %v722
    %v1107 = vpack.c.b16 %v727, %v723
    %v1108 = vpack.c.b16 %v728, %v724
    %v1109 = vpack.c.b16 %v733, %v729
    %v1110 = vpack.c.b16 %v734, %v730
    %v1111 = vpack.c.b16 %v735, %v731
    %v1112 = vpack.c.b16 %v736, %v732
    %v1113 = vpack.c.b16 %v741, %v737
    %v1114 = vpack.c.b16 %v742, %v738
    %v1115 = vpack.c.b16 %v743, %v739
    %v1116 = vpack.c.b16 %v744, %v740
    %v1117 = vpack.c.b16 %v749, %v745
    %v1118 = vpack.c.b16 %v750, %v746
    %v1119 = vpack.c.b16 %v751, %v747
    %v1120 = vpack.c.b16 %v752, %v748
    %v1121 = vpack.c.b16 %v757, %v753
    %v1122 = vpack.c.b16 %v758, %v754
    %v1123 = vpack.c.b16 %v759, %v755
    %v1124 = vpack.c.b16 %v760, %v756
    %v1125 = vpack.c.b16 %v765, %v761
    %v1126 = vpack.c.b16 %v766, %v762
    %v1127 = vpack.c.b16 %v767, %v763
    %v1128 = vpack.c.b16 %v768, %v764
    %v1129 = vpack.c.b16 %v773, %v769
    %v1130 = vpack.c.b16 %v774, %v770
    %v1131 = vpack.c.b16 %v775, %v771
    %v1132 = vpack.c.b16 %v776, %v772
    %v1133 = vpack.c.b16 %v781, %v777
    %v1134 = vpack.c.b16 %v782, %v778
    %v1135 = vpack.c.b16 %v783, %v779
    %v1136 = vpack.c.b16 %v784, %v780
    %v1137 = vpack.c.b16 %v789, %v785
    %v1138 = vpack.c.b16 %v790, %v786
    %v1139 = vpack.c.b16 %v791, %v787
    %v1140 = vpack.c.b16 %v792, %v788
    %v1141 = vpack.c.b16 %v797, %v793
    %v1142 = vpack.c.b16 %v798, %v794
    %v1143 = vpack.c.b16 %v799, %v795
    %v1144 = vpack.c.b16 %v800, %v796
    %v1145 = vpack.c.b16 %v805, %v801
    %v1146 = vpack.c.b16 %v806, %v802
    %v1147 = vpack.c.b16 %v807, %v803
    %v1148 = vpack.c.b16 %v808, %v804
    %v1149 = vpack.c.b16 %v813, %v809
    %v1150 = vpack.c.b16 %v814, %v810
    %v1151 = vpack.c.b16 %v815, %v811
    %v1152 = vpack.c.b16 %v816, %v812
    %v1153 = vpack.c.b16 %v821, %v817
    %v1154 = vpack.c.b16 %v822, %v818
    %v1155 = vpack.c.b16 %v823, %v819
    %v1156 = vpack.c.b16 %v824, %v820
    %v1157 = vpack.c.b16 %v829, %v825
    %v1158 = vpack.c.b16 %v830, %v826
    %v1159 = vpack.c.b16 %v831, %v827
    %v1160 = vpack.c.b16 %v832, %v828
    %v1161 = vpack.c.b16 %v837, %v833
    %v1162 = vpack.c.b16 %v838, %v834
    %v1163 = vpack.c.b16 %v839, %v835
    %v1164 = vpack.c.b16 %v840, %v836
    %v1165 = vpack.c.b16 %v845, %v841
    %v1166 = vpack.c.b16 %v846, %v842
    %v1167 = vpack.c.b16 %v847, %v843
    %v1168 = vpack.c.b16 %v848, %v844
    %v1169 = vpack.c.b16 %v853, %v849
    %v1170 = vpack.c.b16 %v854, %v850
    %v1171 = vpack.c.b16 %v855, %v851
    %v1172 = vpack.c.b16 %v856, %v852
    %v1173 = vpack.c.b16 %v861, %v857
    %v1174 = vpack.c.b16 %v862, %v858
    %v1175 = vpack.c.b16 %v863, %v859
    %v1176 = vpack.c.b16 %v864, %v860
    %v1177 = vpack.c.b16 %v869, %v865
    %v1178 = vpack.c.b16 %v870, %v866
    %v1179 = vpack.c.b16 %v871, %v867
    %v1180 = vpack.c.b16 %v872, %v868
    %v1181 = vpack.c.b16 %v877, %v873
    %v1182 = vpack.c.b16 %v878, %v874
    %v1183 = vpack.c.b16 %v879, %v875
    %v1184 = vpack.c.b16 %v880, %v876
    %v1185 = vpack.c.b16 %v885, %v881
    %v1186 = vpack.c.b16 %v886, %v882
    %v1187 = vpack.c.b16 %v887, %v883
    %v1188 = vpack.c.b16 %v888, %v884
    %v1189 = vpack.c.b16 %v893, %v889
    %v1190 = vpack.c.b16 %v894, %v890
    %v1191 = vpack.c.b16 %v895, %v891
    %v1192 = vpack.c.b16 %v896, %v892
    %v1193 = vpack.c.b16 %v901, %v897
    %v1194 = vpack.c.b16 %v902, %v898
    %v1195 = vpack.c.b16 %v903, %v899
    %v1196 = vpack.c.b16 %v904, %v900
    %v1197 = vpack.c.b16 %v909, %v905
    %v1198 = vpack.c.b16 %v910, %v906
    %v1199 = vpack.c.b16 %v911, %v907
    %v1200 = vpack.c.b16 %v912, %v908
    %v1201 = vpack.c.b16 %v917, %v913
    %v1202 = vpack.c.b16 %v918, %v914
    %v1203 = vpack.c.b16 %v919, %v915
    %v1204 = vpack.c.b16 %v920, %v916
    %v1205 = vpack.c.b16 %v925, %v921
    %v1206 = vpack.c.b16 %v926, %v922
    %v1207 = vpack.c.b16 %v927, %v923
    %v1208 = vpack.c.b16 %v928, %v924
    %v1209 = vpack.c.b16 %v933, %v929
    %v1210 = vpack.c.b16 %v934, %v930
    %v1211 = vpack.c.b16 %v935, %v931
    %v1212 = vpack.c.b16 %v936, %v932
    %v1213 = vpack.c.b16 %v941, %v937
    %v1214 = vpack.c.b16 %v942, %v938
    %v1215 = vpack.c.b16 %v943, %v939
    %v1216 = vpack.c.b16 %v944, %v940
    %v1217 = vpack.c.b16 %v949, %v945
    %v1218 = vpack.c.b16 %v950, %v946
    %v1219 = vpack.c.b16 %v951, %v947
    %v1220 = vpack.c.b16 %v952, %v948
    %v1221 = vpack.c.b16 %v957, %v953
    %v1222 = vpack.c.b16 %v958, %v954
    %v1223 = vpack.c.b16 %v959, %v955
    %v1224 = vpack.c.b16 %v960, %v956
    %v1225 = vpack.c.b16 %v965, %v961
    %v1226 = vpack.c.b16 %v966, %v962
    %v1227 = vpack.c.b16 %v967, %v963
    %v1228 = vpack.c.b16 %v968, %v964
    %v1229 = vpack.c.b16 %v973, %v969
    %v1230 = vpack.c.b16 %v974, %v970
    %v1231 = vpack.c.b16 %v975, %v971
    %v1232 = vpack.c.b16 %v976, %v972
    %v1233 = vpack.c.b16 %v981, %v977
    %v1234 = vpack.c.b16 %v982, %v978
    %v1235 = vpack.c.b16 %v983, %v979
    %v1236 = vpack.c.b16 %v984, %v980
    %v1237 = vpack.c.b16 %v989, %v985
    %v1238 = vpack.c.b16 %v990, %v986
    %v1239 = vpack.c.b16 %v991, %v987
    %v1240 = vpack.c.b16 %v992, %v988
    %v1241 = vpack.c.b16 %v997, %v993
    %v1242 = vpack.c.b16 %v998, %v994
    %v1243 = vpack.c.b16 %v999, %v995
    %v1244 = vpack.c.b16 %v1000, %v996
    %v1245 = vpack.c.b16 %v1005, %v1001
    %v1246 = vpack.c.b16 %v1006, %v1002
    %v1247 = vpack.c.b16 %v1007, %v1003
    %v1248 = vpack.c.b16 %v1008, %v1004
    %v1249 = vpack.c.b16 %v1013, %v1009
    %v1250 = vpack.c.b16 %v1014, %v1010
    %v1251 = vpack.c.b16 %v1015, %v1011
    %v1252 = vpack.c.b16 %v1016, %v1012
    %v1253 = vpack.c.b16 %v1021, %v1017
    %v1254 = vpack.c.b16 %v1022, %v1018
    %v1255 = vpack.c.b16 %v1023, %v1019
    %v1256 = vpack.c.b16 %v1024, %v1020
    %v1257 = vpack.c.b16 %v1029, %v1025
    %v1258 = vpack.c.b16 %v1030, %v1026
    %v1259 = vpack.c.b16 %v1031, %v1027
    %v1260 = vpack.c.b16 %v1032, %v1028
    %v1261 = vpack.c.b16 %v1037, %v1033
    %v1262 = vpack.c.b16 %v1038, %v1034
    %v1263 = vpack.c.b16 %v1039, %v1035
    %v1264 = vpack.c.b16 %v1040, %v1036
    %1489 = vmatprep.subr.bf16.mxu0 %v1042
    %1490 = vmatpush1.bf16.msra.mxu0 %v1041
    %1491 = vmatprep.subr.bf16.mxu0 %v1046
    %1492 = vmatpush1.bf16.msra.mxu0 %v1045
    %1493 = vmatprep.subr.bf16.mxu0 %v1050
    %1494 = vmatpush1.bf16.msra.mxu0 %v1049
    %1495 = vmatprep.subr.bf16.mxu0 %v1054
    %1496 = vmatpush1.bf16.msra.mxu0 %v1053
    %1497 = vmatprep.subr.bf16.mxu0 %v1058
    %1498 = vmatpush1.bf16.msra.mxu0 %v1057
    %1499 = vmatprep.subr.bf16.mxu0 %v1062
    %1500 = vmatpush1.bf16.msra.mxu0 %v1061
    %1501 = vmatprep.subr.bf16.mxu0 %v1066
    %1502 = vmatpush1.bf16.msra.mxu0 %v1065
    %1503 = vmatprep.subr.bf16.mxu0 %v1070
    %1504 = vmatpush1.bf16.msra.mxu0 %v1069
    %1505 = vmatprep.subr.bf16.mxu0 %v1074
    %1506 = vmatpush1.bf16.msra.mxu0 %v1073
    %1507 = vmatprep.subr.bf16.mxu0 %v1078
    %1508 = vmatpush1.bf16.msra.mxu0 %v1077
    %1509 = vmatprep.subr.bf16.mxu0 %v1082
    %1510 = vmatpush1.bf16.msra.mxu0 %v1081
    %1511 = vmatprep.subr.bf16.mxu0 %v1086
    %1512 = vmatpush1.bf16.msra.mxu0 %v1085
    %1513 = vmatprep.subr.bf16.mxu0 %v1090
    %1514 = vmatpush1.bf16.msra.mxu0 %v1089
    %1515 = vmatprep.subr.bf16.mxu0 %v1094
    %1516 = vmatpush1.bf16.msra.mxu0 %v1093
    %1517 = vmatprep.subr.bf16.mxu0 %v1098
    %1518 = vmatpush1.bf16.msra.mxu0 %v1097
    %1519 = vmatprep.subr.bf16.mxu0 %v1102
    %1520 = vmatpush1.bf16.msra.mxu0 %v1101
    %1521 = vmatprep.mubr.bf16.mxu0 %v356
    %1522 = vmatmul.mubr.bf16.gmra.mrb[0].mxu0 %v355
    %v1523 = vpop.f32.mrb[0].mxu0
    %v1524 = vadd.f32 %v316, %v1523
    %v1525 = vpop.f32.mrb[0].mxu0
    %v1526 = vadd.f32 %v320, %v1525
    %v1527 = vpop.f32.mrb[0].mxu0
    %v1528 = vadd.f32 %v316, %v1527
    %v1529 = vpop.f32.mrb[0].mxu0
    %v1530 = vadd.f32 %v320, %v1529
    %1531 = vdwg.mxu0
    %1532 = vmatprep.subr.bf16.mxu0 %v1106
    %1533 = vmatpush1.bf16.msra.mxu0 %v1105
    %1534 = vmatprep.subr.bf16.mxu0 %v1110
    %1535 = vmatpush1.bf16.msra.mxu0 %v1109
    %1536 = vmatprep.subr.bf16.mxu0 %v1114
    %1537 = vmatpush1.bf16.msra.mxu0 %v1113
    %1538 = vmatprep.subr.bf16.mxu0 %v1118
    %1539 = vmatpush1.bf16.msra.mxu0 %v1117
    %1540 = vmatprep.subr.bf16.mxu0 %v1122
    %1541 = vmatpush1.bf16.msra.mxu0 %v1121
    %1542 = vmatprep.subr.bf16.mxu0 %v1126
    %1543 = vmatpush1.bf16.msra.mxu0 %v1125
    %1544 = vmatprep.subr.bf16.mxu0 %v1130
    %1545 = vmatpush1.bf16.msra.mxu0 %v1129
    %1546 = vmatprep.subr.bf16.mxu0 %v1134
    %1547 = vmatpush1.bf16.msra.mxu0 %v1133
    %1548 = vmatprep.subr.bf16.mxu0 %v1138
    %1549 = vmatpush1.bf16.msra.mxu0 %v1137
    %1550 = vmatprep.subr.bf16.mxu0 %v1142
    %1551 = vmatpush1.bf16.msra.mxu0 %v1141
    %1552 = vmatprep.subr.bf16.mxu0 %v1146
    %1553 = vmatpush1.bf16.msra.mxu0 %v1145
    %1554 = vmatprep.subr.bf16.mxu0 %v1150
    %1555 = vmatpush1.bf16.msra.mxu0 %v1149
    %1556 = vmatprep.subr.bf16.mxu0 %v1154
    %1557 = vmatpush1.bf16.msra.mxu0 %v1153
    %1558 = vmatprep.subr.bf16.mxu0 %v1158
    %1559 = vmatpush1.bf16.msra.mxu0 %v1157
    %1560 = vmatprep.subr.bf16.mxu0 %v1162
    %1561 = vmatpush1.bf16.msra.mxu0 %v1161
    %1562 = vmatprep.subr.bf16.mxu0 %v1166
    %1563 = vmatpush1.bf16.msra.mxu0 %v1165
    %1564 = vmatprep.mubr.bf16.mxu0 %v358
    %1565 = vmatmul.mubr.bf16.gmra.mrb[0].mxu0 %v357
    %v1566 = vpop.f32.mrb[0].mxu0
    %v1567 = vadd.f32 %v1524, %v1566
    %v1568 = vpop.f32.mrb[0].mxu0
    %v1569 = vadd.f32 %v1526, %v1568
    %v1570 = vpop.f32.mrb[0].mxu0
    %v1571 = vadd.f32 %v1528, %v1570
    %v1572 = vpop.f32.mrb[0].mxu0
    %v1573 = vadd.f32 %v1530, %v1572
    %1574 = vdwg.mxu0
    %1575 = vmatprep.subr.bf16.mxu0 %v1170
    %1576 = vmatpush1.bf16.msra.mxu0 %v1169
    %1577 = vmatprep.subr.bf16.mxu0 %v1174
    %1578 = vmatpush1.bf16.msra.mxu0 %v1173
    %1579 = vmatprep.subr.bf16.mxu0 %v1178
    %1580 = vmatpush1.bf16.msra.mxu0 %v1177
    %1581 = vmatprep.subr.bf16.mxu0 %v1182
    %1582 = vmatpush1.bf16.msra.mxu0 %v1181
    %1583 = vmatprep.subr.bf16.mxu0 %v1186
    %1584 = vmatpush1.bf16.msra.mxu0 %v1185
    %1585 = vmatprep.subr.bf16.mxu0 %v1190
    %1586 = vmatpush1.bf16.msra.mxu0 %v1189
    %1587 = vmatprep.subr.bf16.mxu0 %v1194
    %1588 = vmatpush1.bf16.msra.mxu0 %v1193
    %1589 = vmatprep.subr.bf16.mxu0 %v1198
    %1590 = vmatpush1.bf16.msra.mxu0 %v1197
    %1591 = vmatprep.subr.bf16.mxu0 %v1202
    %1592 = vmatpush1.bf16.msra.mxu0 %v1201
    %1593 = vmatprep.subr.bf16.mxu0 %v1206
    %1594 = vmatpush1.bf16.msra.mxu0 %v1205
    %1595 = vmatprep.subr.bf16.mxu0 %v1210
    %1596 = vmatpush1.bf16.msra.mxu0 %v1209
    %1597 = vmatprep.subr.bf16.mxu0 %v1214
    %1598 = vmatpush1.bf16.msra.mxu0 %v1213
    %1599 = vmatprep.subr.bf16.mxu0 %v1218
    %1600 = vmatpush1.bf16.msra.mxu0 %v1217
    %1601 = vmatprep.subr.bf16.mxu0 %v1222
    %1602 = vmatpush1.bf16.msra.mxu0 %v1221
    %1603 = vmatprep.subr.bf16.mxu0 %v1226
    %1604 = vmatpush1.bf16.msra.mxu0 %v1225
    %1605 = vmatprep.subr.bf16.mxu0 %v1230
    %1606 = vmatpush1.bf16.msra.mxu0 %v1229
    %1607 = vmatprep.mubr.bf16.mxu0 %v360
    %1608 = vmatmul.mubr.bf16.gmra.mrb[0].mxu0 %v359
    %v1609 = vpop.f32.mrb[0].mxu0
    %v1610 = vadd.f32 %v1567, %v1609
    %v1611 = vpop.f32.mrb[0].mxu0
    %v1612 = vadd.f32 %v1569, %v1611
    %v1613 = vpop.f32.mrb[0].mxu0
    %v1614 = vadd.f32 %v1571, %v1613
    %v1615 = vpop.f32.mrb[0].mxu0
    %v1616 = vadd.f32 %v1573, %v1615
    %1617 = vdwg.mxu0
    %1618 = vmatprep.subr.bf16.mxu0 %v1234
    %1619 = vmatpush1.bf16.msra.mxu0 %v1233
    %1620 = vmatprep.subr.bf16.mxu0 %v1238
    %1621 = vmatpush1.bf16.msra.mxu0 %v1237
    %1622 = vmatprep.subr.bf16.mxu0 %v1242
    %1623 = vmatpush1.bf16.msra.mxu0 %v1241
    %1624 = vmatprep.subr.bf16.mxu0 %v1246
    %1625 = vmatpush1.bf16.msra.mxu0 %v1245
    %1626 = vmatprep.subr.bf16.mxu0 %v1250
    %1627 = vmatpush1.bf16.msra.mxu0 %v1249
    %1628 = vmatprep.subr.bf16.mxu0 %v1254
    %1629 = vmatpush1.bf16.msra.mxu0 %v1253
    %1630 = vmatprep.subr.bf16.mxu0 %v1258
    %1631 = vmatpush1.bf16.msra.mxu0 %v1257
    %1632 = vmatprep.subr.bf16.mxu0 %v1262
    %1633 = vmatpush1.bf16.msra.mxu0 %v1261
    %1634 = vmatprep.subr.bf16.mxu0 0
    %1635 = vmatpush1.bf16.msra.mxu0 0
    %1636 = vmatprep.subr.bf16.mxu0 0
    %1637 = vmatpush1.bf16.msra.mxu0 0
    %1638 = vmatprep.subr.bf16.mxu0 0
    %1639 = vmatpush1.bf16.msra.mxu0 0
    %1640 = vmatprep.subr.bf16.mxu0 0
    %1641 = vmatpush1.bf16.msra.mxu0 0
    %1642 = vmatprep.subr.bf16.mxu0 0
    %1643 = vmatpush1.bf16.msra.mxu0 0
    %1644 = vmatprep.subr.bf16.mxu0 0
    %1645 = vmatpush1.bf16.msra.mxu0 0
    %1646 = vmatprep.subr.bf16.mxu0 0
    %1647 = vmatpush1.bf16.msra.mxu0 0
    %1648 = vmatprep.subr.bf16.mxu0 0
    %1649 = vmatpush1.bf16.msra.mxu0 0
    %1650 = vmatprep.mubr.bf16.mxu0 0
    %1651 = vmatmul.mubr.bf16.gmra.mrb[0].mxu0 %v361
    %v1652 = vpop.f32.mrb[0].mxu0
    %v1653 = vadd.f32 %v1610, %v1652
    %v1654 = vpop.f32.mrb[0].mxu0
    %v1655 = vadd.f32 %v1612, %v1654
    %v1656 = vpop.f32.mrb[0].mxu0
    %v1657 = vadd.f32 %v1614, %v1656
    %v1658 = vpop.f32.mrb[0].mxu0
    %v1659 = vadd.f32 %v1616, %v1658
    %1660 = vdwg.mxu0
    %1661 = vmatprep.subr.bf16.mxu0 %v1044
    %1662 = vmatpush1.bf16.msra.mxu0 %v1043
    %1663 = vmatprep.subr.bf16.mxu0 %v1048
    %1664 = vmatpush1.bf16.msra.mxu0 %v1047
    %1665 = vmatprep.subr.bf16.mxu0 %v1052
    %1666 = vmatpush1.bf16.msra.mxu0 %v1051
    %1667 = vmatprep.subr.bf16.mxu0 %v1056
    %1668 = vmatpush1.bf16.msra.mxu0 %v1055
    %1669 = vmatprep.subr.bf16.mxu0 %v1060
    %1670 = vmatpush1.bf16.msra.mxu0 %v1059
    %1671 = vmatprep.subr.bf16.mxu0 %v1064
    %1672 = vmatpush1.bf16.msra.mxu0 %v1063
    %1673 = vmatprep.subr.bf16.mxu0 %v1068
    %1674 = vmatpush1.bf16.msra.mxu0 %v1067
    %1675 = vmatprep.subr.bf16.mxu0 %v1072
    %1676 = vmatpush1.bf16.msra.mxu0 %v1071
    %1677 = vmatprep.subr.bf16.mxu0 %v1076
    %1678 = vmatpush1.bf16.msra.mxu0 %v1075
    %1679 = vmatprep.subr.bf16.mxu0 %v1080
    %1680 = vmatpush1.bf16.msra.mxu0 %v1079
    %1681 = vmatprep.subr.bf16.mxu0 %v1084
    %1682 = vmatpush1.bf16.msra.mxu0 %v1083
    %1683 = vmatprep.subr.bf16.mxu0 %v1088
    %1684 = vmatpush1.bf16.msra.mxu0 %v1087
    %1685 = vmatprep.subr.bf16.mxu0 %v1092
    %1686 = vmatpush1.bf16.msra.mxu0 %v1091
    %1687 = vmatprep.subr.bf16.mxu0 %v1096
    %1688 = vmatpush1.bf16.msra.mxu0 %v1095
    %1689 = vmatprep.subr.bf16.mxu0 %v1100
    %1690 = vmatpush1.bf16.msra.mxu0 %v1099
    %1691 = vmatprep.subr.bf16.mxu0 %v1104
    %1692 = vmatpush1.bf16.msra.mxu0 %v1103
    %1693 = vmatprep.mubr.bf16.mxu0 %v356
    %1694 = vmatmul.mubr.bf16.gmra.mrb[0].mxu0 %v355
    %v1695 = vpop.f32.mrb[0].mxu0
    %v1696 = vadd.f32 %v324, %v1695
    %v1697 = vpop.f32.mrb[0].mxu0
    %v1698 = vadd.f32 %v328, %v1697
    %v1699 = vpop.f32.mrb[0].mxu0
    %v1700 = vadd.f32 %v324, %v1699
    %v1701 = vpop.f32.mrb[0].mxu0
    %v1702 = vadd.f32 %v328, %v1701
    %1703 = vdwg.mxu0
    %1704 = vmatprep.subr.bf16.mxu0 %v1108
    %1705 = vmatpush1.bf16.msra.mxu0 %v1107
    %1706 = vmatprep.subr.bf16.mxu0 %v1112
    %1707 = vmatpush1.bf16.msra.mxu0 %v1111
    %1708 = vmatprep.subr.bf16.mxu0 %v1116
    %1709 = vmatpush1.bf16.msra.mxu0 %v1115
    %1710 = vmatprep.subr.bf16.mxu0 %v1120
    %1711 = vmatpush1.bf16.msra.mxu0 %v1119
    %1712 = vmatprep.subr.bf16.mxu0 %v1124
    %1713 = vmatpush1.bf16.msra.mxu0 %v1123
    %1714 = vmatprep.subr.bf16.mxu0 %v1128
    %1715 = vmatpush1.bf16.msra.mxu0 %v1127
    %1716 = vmatprep.subr.bf16.mxu0 %v1132
    %1717 = vmatpush1.bf16.msra.mxu0 %v1131
    %1718 = vmatprep.subr.bf16.mxu0 %v1136
    %1719 = vmatpush1.bf16.msra.mxu0 %v1135
    %1720 = vmatprep.subr.bf16.mxu0 %v1140
    %1721 = vmatpush1.bf16.msra.mxu0 %v1139
    %1722 = vmatprep.subr.bf16.mxu0 %v1144
    %1723 = vmatpush1.bf16.msra.mxu0 %v1143
    %1724 = vmatprep.subr.bf16.mxu0 %v1148
    %1725 = vmatpush1.bf16.msra.mxu0 %v1147
    %1726 = vmatprep.subr.bf16.mxu0 %v1152
    %1727 = vmatpush1.bf16.msra.mxu0 %v1151
    %1728 = vmatprep.subr.bf16.mxu0 %v1156
    %1729 = vmatpush1.bf16.msra.mxu0 %v1155
    %1730 = vmatprep.subr.bf16.mxu0 %v1160
    %1731 = vmatpush1.bf16.msra.mxu0 %v1159
    %1732 = vmatprep.subr.bf16.mxu0 %v1164
    %1733 = vmatpush1.bf16.msra.mxu0 %v1163
    %1734 = vmatprep.subr.bf16.mxu0 %v1168
    %1735 = vmatpush1.bf16.msra.mxu0 %v1167
    %1736 = vmatprep.mubr.bf16.mxu0 %v358
    %1737 = vmatmul.mubr.bf16.gmra.mrb[0].mxu0 %v357
    %v1738 = vpop.f32.mrb[0].mxu0
    %v1739 = vadd.f32 %v1696, %v1738
    %v1740 = vpop.f32.mrb[0].mxu0
    %v1741 = vadd.f32 %v1698, %v1740
    %v1742 = vpop.f32.mrb[0].mxu0
    %v1743 = vadd.f32 %v1700, %v1742
    %v1744 = vpop.f32.mrb[0].mxu0
    %v1745 = vadd.f32 %v1702, %v1744
    %1746 = vdwg.mxu0
    %1747 = vmatprep.subr.bf16.mxu0 %v1172
    %1748 = vmatpush1.bf16.msra.mxu0 %v1171
    %1749 = vmatprep.subr.bf16.mxu0 %v1176
    %1750 = vmatpush1.bf16.msra.mxu0 %v1175
    %1751 = vmatprep.subr.bf16.mxu0 %v1180
    %1752 = vmatpush1.bf16.msra.mxu0 %v1179
    %1753 = vmatprep.subr.bf16.mxu0 %v1184
    %1754 = vmatpush1.bf16.msra.mxu0 %v1183
    %1755 = vmatprep.subr.bf16.mxu0 %v1188
    %1756 = vmatpush1.bf16.msra.mxu0 %v1187
    %1757 = vmatprep.subr.bf16.mxu0 %v1192
    %1758 = vmatpush1.bf16.msra.mxu0 %v1191
    %1759 = vmatprep.subr.bf16.mxu0 %v1196
    %1760 = vmatpush1.bf16.msra.mxu0 %v1195
    %1761 = vmatprep.subr.bf16.mxu0 %v1200
    %1762 = vmatpush1.bf16.msra.mxu0 %v1199
    %1763 = vmatprep.subr.bf16.mxu0 %v1204
    %1764 = vmatpush1.bf16.msra.mxu0 %v1203
    %1765 = vmatprep.subr.bf16.mxu0 %v1208
    %1766 = vmatpush1.bf16.msra.mxu0 %v1207
    %1767 = vmatprep.subr.bf16.mxu0 %v1212
    %1768 = vmatpush1.bf16.msra.mxu0 %v1211
    %1769 = vmatprep.subr.bf16.mxu0 %v1216
    %1770 = vmatpush1.bf16.msra.mxu0 %v1215
    %1771 = vmatprep.subr.bf16.mxu0 %v1220
    %1772 = vmatpush1.bf16.msra.mxu0 %v1219
    %1773 = vmatprep.subr.bf16.mxu0 %v1224
    %1774 = vmatpush1.bf16.msra.mxu0 %v1223
    %1775 = vmatprep.subr.bf16.mxu0 %v1228
    %1776 = vmatpush1.bf16.msra.mxu0 %v1227
    %1777 = vmatprep.subr.bf16.mxu0 %v1232
    %1778 = vmatpush1.bf16.msra.mxu0 %v1231
    %1779 = vmatprep.mubr.bf16.mxu0 %v360
    %1780 = vmatmul.mubr.bf16.gmra.mrb[0].mxu0 %v359
    %v1781 = vpop.f32.mrb[0].mxu0
    %v1782 = vadd.f32 %v1739, %v1781
    %v1783 = vpop.f32.mrb[0].mxu0
    %v1784 = vadd.f32 %v1741, %v1783
    %v1785 = vpop.f32.mrb[0].mxu0
    %v1786 = vadd.f32 %v1743, %v1785
    %v1787 = vpop.f32.mrb[0].mxu0
    %v1788 = vadd.f32 %v1745, %v1787
    %1789 = vdwg.mxu0
    %1790 = vmatprep.subr.bf16.mxu0 %v1236
    %1791 = vmatpush1.bf16.msra.mxu0 %v1235
    %1792 = vmatprep.subr.bf16.mxu0 %v1240
    %1793 = vmatpush1.bf16.msra.mxu0 %v1239
    %1794 = vmatprep.subr.bf16.mxu0 %v1244
    %1795 = vmatpush1.bf16.msra.mxu0 %v1243
    %1796 = vmatprep.subr.bf16.mxu0 %v1248
    %1797 = vmatpush1.bf16.msra.mxu0 %v1247
    %1798 = vmatprep.subr.bf16.mxu0 %v1252
    %1799 = vmatpush1.bf16.msra.mxu0 %v1251
    %1800 = vmatprep.subr.bf16.mxu0 %v1256
    %1801 = vmatpush1.bf16.msra.mxu0 %v1255
    %1802 = vmatprep.subr.bf16.mxu0 %v1260
    %1803 = vmatpush1.bf16.msra.mxu0 %v1259
    %1804 = vmatprep.subr.bf16.mxu0 %v1264
    %1805 = vmatpush1.bf16.msra.mxu0 %v1263
    %1806 = vmatprep.subr.bf16.mxu0 0
    %1807 = vmatpush1.bf16.msra.mxu0 0
    %1808 = vmatprep.subr.bf16.mxu0 0
    %1809 = vmatpush1.bf16.msra.mxu0 0
    %1810 = vmatprep.subr.bf16.mxu0 0
    %1811 = vmatpush1.bf16.msra.mxu0 0
    %1812 = vmatprep.subr.bf16.mxu0 0
    %1813 = vmatpush1.bf16.msra.mxu0 0
    %1814 = vmatprep.subr.bf16.mxu0 0
    %1815 = vmatpush1.bf16.msra.mxu0 0
    %1816 = vmatprep.subr.bf16.mxu0 0
    %1817 = vmatpush1.bf16.msra.mxu0 0
    %1818 = vmatprep.subr.bf16.mxu0 0
    %1819 = vmatpush1.bf16.msra.mxu0 0
    %1820 = vmatprep.subr.bf16.mxu0 0
    %1821 = vmatpush1.bf16.msra.mxu0 0
    %1822 = vmatprep.mubr.bf16.mxu0 0
    %1823 = vmatmul.mubr.bf16.gmra.mrb[0].mxu0 %v361
    %v1824 = vpop.f32.mrb[0].mxu0
    %v1825 = vadd.f32 %v1782, %v1824
    %v1826 = vpop.f32.mrb[0].mxu0
    %v1827 = vadd.f32 %v1784, %v1826
    %v1828 = vpop.f32.mrb[0].mxu0
    %v1829 = vadd.f32 %v1786, %v1828
    %v1830 = vpop.f32.mrb[0].mxu0
    %v1831 = vadd.f32 %v1788, %v1830
    %1832 = vdwg.mxu0
    %v1833 = vmax.f32 %v1653, 0.0
    %v1834 = vmax.f32 %v1655, 0.0
    %v1835 = vmax.f32 %v1825, 0.0
    %v1836 = vmax.f32 %v1827, 0.0
    %v1837 = vmax.f32 %v1657, 0.0
    %v1838 = vmax.f32 %v1659, 0.0
    %v1839 = vmax.f32 %v1829, 0.0
    %v1840 = vmax.f32 %v1831, 0.0
    %v1841 = vpack.c.bf16 %v1837, %v1833
    %v1842 = vpack.c.bf16 %v1838, %v1834
    %v1843 = vpack.c.bf16 %v1839, %v1835
    %v1844 = vpack.c.bf16 %v1840, %v1836
    %v1845 = vld [vmem:[#allocation4] sm:$0xf]
    %v1846 = vld [vmem:[#allocation4 + $0x4] sm:$0xf]
    %v1847 = vld [vmem:[#allocation4 + $0x8] sm:$0xf]
    %v1848 = vld [vmem:[#allocation4 + $0xc] sm:$0xf]
    %v1849 = vld [vmem:[#allocation4 + $0x10] sm:$0xf]
    %v1850 = vld [vmem:[#allocation4 + $0x14] sm:$0xf]
    %v1851 = vld [vmem:[#allocation4 + $0x18] sm:$0xf]
    %v1852 = vld [vmem:[#allocation4 + $0x1c] sm:$0xf]
    %v1853 = vld [vmem:[#allocation4 + $0x20] sm:$0xf]
    %v1854 = vld [vmem:[#allocation4 + $0x24] sm:$0xf]
    %v1855 = vld [vmem:[#allocation4 + $0x28] sm:$0xf]
    %v1856 = vld [vmem:[#allocation4 + $0x2c] sm:$0xf]
    %v1857 = vld [vmem:[#allocation4 + $0x30] sm:$0xf]
    %v1858 = vld [vmem:[#allocation4 + $0x34] sm:$0xf]
    %v1859 = vld [vmem:[#allocation4 + $0x38] sm:$0xf]
    %v1860 = vld [vmem:[#allocation4 + $0x3c] sm:$0xf]
    %v1861 = vld [vmem:[#allocation4 + $0x40] sm:$0xf]
    %v1862 = vld [vmem:[#allocation4 + $0x44] sm:$0xf]
    %v1863 = vld [vmem:[#allocation4 + $0x48] sm:$0xf]
    %v1864 = vld [vmem:[#allocation4 + $0x4c] sm:$0xf]
    %v1865 = vld [vmem:[#allocation4 + $0x50] sm:$0xf]
    %v1866 = vld [vmem:[#allocation4 + $0x54] sm:$0xf]
    %v1867 = vld [vmem:[#allocation4 + $0x58] sm:$0xf]
    %v1868 = vld [vmem:[#allocation4 + $0x5c] sm:$0xf]
    %v1869 = vld [vmem:[#allocation4 + $0x60] sm:$0xf]
    %v1870 = vld [vmem:[#allocation4 + $0x64] sm:$0xf]
    %v1871 = vld [vmem:[#allocation4 + $0x68] sm:$0xf]
    %v1872 = vld [vmem:[#allocation4 + $0x6c] sm:$0xf]
    %v1873 = vld [vmem:[#allocation4 + $0x70] sm:$0xf]
    %v1874 = vld [vmem:[#allocation4 + $0x74] sm:$0xf]
    %v1875 = vld [vmem:[#allocation4 + $0x78] sm:$0xf]
    %v1876 = vld [vmem:[#allocation4 + $0x7c] sm:$0xf]
    %v1877 = vld [vmem:[#allocation4 + $0x80] sm:$0xf]
    %v1878 = vld [vmem:[#allocation4 + $0x84] sm:$0xf]
    %v1879 = vld [vmem:[#allocation4 + $0x88] sm:$0xf]
    %v1880 = vld [vmem:[#allocation4 + $0x8c] sm:$0xf]
    %v1881 = vld [vmem:[#allocation4 + $0x90] sm:$0xf]
    %v1882 = vld [vmem:[#allocation4 + $0x94] sm:$0xf]
    %v1883 = vld [vmem:[#allocation4 + $0x98] sm:$0xf]
    %v1884 = vld [vmem:[#allocation4 + $0x9c] sm:$0xf]
    %v1885 = vld [vmem:[#allocation4 + $0xa0] sm:$0xf]
    %v1886 = vld [vmem:[#allocation4 + $0xa4] sm:$0xf]
    %v1887 = vld [vmem:[#allocation4 + $0xa8] sm:$0xf]
    %v1888 = vld [vmem:[#allocation4 + $0xac] sm:$0xf]
    %v1889 = vld [vmem:[#allocation4 + $0xb0] sm:$0xf]
    %v1890 = vld [vmem:[#allocation4 + $0xb4] sm:$0xf]
    %v1891 = vld [vmem:[#allocation4 + $0xb8] sm:$0xf]
    %v1892 = vld [vmem:[#allocation4 + $0xbc] sm:$0xf]
    %v1893 = vld [vmem:[#allocation4 + $0xc0] sm:$0xf]
    %v1894 = vld [vmem:[#allocation4 + $0xc4] sm:$0xf]
    %v1895 = vld [vmem:[#allocation4 + $0xc8] sm:$0xf]
    %v1896 = vld [vmem:[#allocation4 + $0xcc] sm:$0xf]
    %v1897 = vld [vmem:[#allocation4 + $0xd0] sm:$0xf]
    %v1898 = vld [vmem:[#allocation4 + $0xd4] sm:$0xf]
    %v1899 = vld [vmem:[#allocation4 + $0xd8] sm:$0xf]
    %v1900 = vld [vmem:[#allocation4 + $0xdc] sm:$0xf]
    %v1901 = vld [vmem:[#allocation4 + $0xe0] sm:$0xf]
    %v1902 = vld [vmem:[#allocation4 + $0xe4] sm:$0xf]
    %v1903 = vld [vmem:[#allocation4 + $0xe8] sm:$0xf]
    %v1904 = vld [vmem:[#allocation4 + $0xec] sm:$0xf]
    %v1905 = vld [vmem:[#allocation4 + $0xf0] sm:$0xf]
    %v1906 = vld [vmem:[#allocation4 + $0xf4] sm:$0xf]
    %v1907 = vld [vmem:[#allocation4 + $0xf8] sm:$0xf]
    %v1908 = vld [vmem:[#allocation4 + $0xfc] sm:$0xf]
    %v1909 = vld [vmem:[%s5] sm:$0x1]
    %v1911 = vlaneseq
    %v1912 = vshrl.u32 %v1911, 7
    %v1913 = vsub.s32 0, %v1912
    %v1914 = vrot.slane %v1909, %v1913
    %v1980 = vunpack.c.l.b16 %v1845
    %v1981 = vunpack.c.l.b16 %v1846
    %v1982 = vunpack.c.l.b16 %v1847
    %v1983 = vunpack.c.l.b16 %v1848
    %v1984 = vunpack.c.l.b16 %v1849
    %v1985 = vunpack.c.l.b16 %v1850
    %v1986 = vunpack.c.l.b16 %v1851
    %v1987 = vunpack.c.l.b16 %v1852
    %v1988 = vunpack.c.l.b16 %v1853
    %v1989 = vunpack.c.l.b16 %v1854
    %v1990 = vunpack.c.l.b16 %v1855
    %v1991 = vunpack.c.l.b16 %v1856
    %v1992 = vunpack.c.l.b16 %v1857
    %v1993 = vunpack.c.l.b16 %v1858
    %v1994 = vunpack.c.l.b16 %v1859
    %v1995 = vunpack.c.l.b16 %v1860
    %v1996 = vunpack.c.l.b16 %v1861
    %v1997 = vunpack.c.l.b16 %v1862
    %v1998 = vunpack.c.l.b16 %v1863
    %v1999 = vunpack.c.l.b16 %v1864
    %v2000 = vunpack.c.l.b16 %v1865
    %v2001 = vunpack.c.l.b16 %v1866
    %v2002 = vunpack.c.l.b16 %v1867
    %v2003 = vunpack.c.l.b16 %v1868
    %v2004 = vunpack.c.l.b16 %v1869
    %v2005 = vunpack.c.l.b16 %v1870
    %v2006 = vunpack.c.l.b16 %v1871
    %v2007 = vunpack.c.l.b16 %v1872
    %v2008 = vunpack.c.l.b16 %v1873
    %v2009 = vunpack.c.l.b16 %v1874
    %v2010 = vunpack.c.l.b16 %v1875
    %v2011 = vunpack.c.l.b16 %v1876
    %v2012 = vunpack.c.l.b16 %v1877
    %v2013 = vunpack.c.l.b16 %v1878
    %v2014 = vunpack.c.l.b16 %v1879
    %v2015 = vunpack.c.l.b16 %v1880
    %v2016 = vunpack.c.l.b16 %v1881
    %v2017 = vunpack.c.l.b16 %v1882
    %v2018 = vunpack.c.l.b16 %v1883
    %v2019 = vunpack.c.l.b16 %v1884
    %v2020 = vunpack.c.l.b16 %v1885
    %v2021 = vunpack.c.l.b16 %v1886
    %v2022 = vunpack.c.l.b16 %v1887
    %v2023 = vunpack.c.l.b16 %v1888
    %v2024 = vunpack.c.l.b16 %v1889
    %v2025 = vunpack.c.l.b16 %v1890
    %v2026 = vunpack.c.l.b16 %v1891
    %v2027 = vunpack.c.l.b16 %v1892
    %v2028 = vunpack.c.l.b16 %v1893
    %v2029 = vunpack.c.l.b16 %v1894
    %v2030 = vunpack.c.l.b16 %v1895
    %v2031 = vunpack.c.l.b16 %v1896
    %v2032 = vunpack.c.l.b16 %v1897
    %v2033 = vunpack.c.l.b16 %v1898
    %v2034 = vunpack.c.l.b16 %v1899
    %v2035 = vunpack.c.l.b16 %v1900
    %v2036 = vunpack.c.l.b16 %v1901
    %v2037 = vunpack.c.l.b16 %v1902
    %v2038 = vunpack.c.l.b16 %v1903
    %v2039 = vunpack.c.l.b16 %v1904
    %v2040 = vunpack.c.l.b16 %v1905
    %v2041 = vunpack.c.l.b16 %v1906
    %v2042 = vunpack.c.l.b16 %v1907
    %v2043 = vunpack.c.l.b16 %v1908
    %v2044 = vpack.c.b16 %v1981, %v1980
    %v2045 = vpack.c.b16 %v1983, %v1982
    %v2046 = vpack.c.b16 %v1985, %v1984
    %v2047 = vpack.c.b16 %v1987, %v1986
    %v2048 = vpack.c.b16 %v1989, %v1988
    %v2049 = vpack.c.b16 %v1991, %v1990
    %v2050 = vpack.c.b16 %v1993, %v1992
    %v2051 = vpack.c.b16 %v1995, %v1994
    %v2052 = vpack.c.b16 %v1997, %v1996
    %v2053 = vpack.c.b16 %v1999, %v1998
    %v2054 = vpack.c.b16 %v2001, %v2000
    %v2055 = vpack.c.b16 %v2003, %v2002
    %v2056 = vpack.c.b16 %v2005, %v2004
    %v2057 = vpack.c.b16 %v2007, %v2006
    %v2058 = vpack.c.b16 %v2009, %v2008
    %v2059 = vpack.c.b16 %v2011, %v2010
    %v2060 = vpack.c.b16 %v2013, %v2012
    %v2061 = vpack.c.b16 %v2015, %v2014
    %v2062 = vpack.c.b16 %v2017, %v2016
    %v2063 = vpack.c.b16 %v2019, %v2018
    %v2064 = vpack.c.b16 %v2021, %v2020
    %v2065 = vpack.c.b16 %v2023, %v2022
    %v2066 = vpack.c.b16 %v2025, %v2024
    %v2067 = vpack.c.b16 %v2027, %v2026
    %v2068 = vpack.c.b16 %v2029, %v2028
    %v2069 = vpack.c.b16 %v2031, %v2030
    %v2070 = vpack.c.b16 %v2033, %v2032
    %v2071 = vpack.c.b16 %v2035, %v2034
    %v2072 = vpack.c.b16 %v2037, %v2036
    %v2073 = vpack.c.b16 %v2039, %v2038
    %v2074 = vpack.c.b16 %v2041, %v2040
    %v2075 = vpack.c.b16 %v2043, %v2042
    %2108 = vmatprep.subr.bf16.mxu0 0
    %2109 = vmatpush1.bf16.msra.mxu0 %v2044
    %2110 = vmatprep.subr.bf16.mxu0 0
    %2111 = vmatpush1.bf16.msra.mxu0 %v2045
    %2112 = vmatprep.subr.bf16.mxu0 0
    %2113 = vmatpush1.bf16.msra.mxu0 %v2046
    %2114 = vmatprep.subr.bf16.mxu0 0
    %2115 = vmatpush1.bf16.msra.mxu0 %v2047
    %2116 = vmatprep.subr.bf16.mxu0 0
    %2117 = vmatpush1.bf16.msra.mxu0 %v2048
    %2118 = vmatprep.subr.bf16.mxu0 0
    %2119 = vmatpush1.bf16.msra.mxu0 %v2049
    %2120 = vmatprep.subr.bf16.mxu0 0
    %2121 = vmatpush1.bf16.msra.mxu0 %v2050
    %2122 = vmatprep.subr.bf16.mxu0 0
    %2123 = vmatpush1.bf16.msra.mxu0 %v2051
    %2124 = vmatprep.subr.bf16.mxu0 0
    %2125 = vmatpush1.bf16.msra.mxu0 %v2052
    %2126 = vmatprep.subr.bf16.mxu0 0
    %2127 = vmatpush1.bf16.msra.mxu0 %v2053
    %2128 = vmatprep.subr.bf16.mxu0 0
    %2129 = vmatpush1.bf16.msra.mxu0 %v2054
    %2130 = vmatprep.subr.bf16.mxu0 0
    %2131 = vmatpush1.bf16.msra.mxu0 %v2055
    %2132 = vmatprep.subr.bf16.mxu0 0
    %2133 = vmatpush1.bf16.msra.mxu0 %v2056
    %2134 = vmatprep.subr.bf16.mxu0 0
    %2135 = vmatpush1.bf16.msra.mxu0 %v2057
    %2136 = vmatprep.subr.bf16.mxu0 0
    %2137 = vmatpush1.bf16.msra.mxu0 %v2058
    %2138 = vmatprep.subr.bf16.mxu0 0
    %2139 = vmatpush1.bf16.msra.mxu0 %v2059
    %2140 = vmatprep.mubr.bf16.mxu0 %v1842
    %2141 = vmatmul.mubr.bf16.gmra.mrb[0].mxu0 %v1841
    %v2142 = vpop.f32.mrb[0].mxu0
    %v2143 = vadd.f32 %v1914, %v2142
    %v2144 = vpop.f32.mrb[0].mxu0
    %v2145 = vpop.f32.mrb[0].mxu0
    %v2146 = vadd.f32 %v1914, %v2145
    %v2147 = vpop.f32.mrb[0].mxu0
    %2148 = vdwg.mxu0
    %2149 = vmatprep.subr.bf16.mxu0 0
    %2150 = vmatpush1.bf16.msra.mxu0 %v2060
    %2151 = vmatprep.subr.bf16.mxu0 0
    %2152 = vmatpush1.bf16.msra.mxu0 %v2061
    %2153 = vmatprep.subr.bf16.mxu0 0
    %2154 = vmatpush1.bf16.msra.mxu0 %v2062
    %2155 = vmatprep.subr.bf16.mxu0 0
    %2156 = vmatpush1.bf16.msra.mxu0 %v2063
    %2157 = vmatprep.subr.bf16.mxu0 0
    %2158 = vmatpush1.bf16.msra.mxu0 %v2064
    %2159 = vmatprep.subr.bf16.mxu0 0
    %2160 = vmatpush1.bf16.msra.mxu0 %v2065
    %2161 = vmatprep.subr.bf16.mxu0 0
    %2162 = vmatpush1.bf16.msra.mxu0 %v2066
    %2163 = vmatprep.subr.bf16.mxu0 0
    %2164 = vmatpush1.bf16.msra.mxu0 %v2067
    %2165 = vmatprep.subr.bf16.mxu0 0
    %2166 = vmatpush1.bf16.msra.mxu0 %v2068
    %2167 = vmatprep.subr.bf16.mxu0 0
    %2168 = vmatpush1.bf16.msra.mxu0 %v2069
    %2169 = vmatprep.subr.bf16.mxu0 0
    %2170 = vmatpush1.bf16.msra.mxu0 %v2070
    %2171 = vmatprep.subr.bf16.mxu0 0
    %2172 = vmatpush1.bf16.msra.mxu0 %v2071
    %2173 = vmatprep.subr.bf16.mxu0 0
    %2174 = vmatpush1.bf16.msra.mxu0 %v2072
    %2175 = vmatprep.subr.bf16.mxu0 0
    %2176 = vmatpush1.bf16.msra.mxu0 %v2073
    %2177 = vmatprep.subr.bf16.mxu0 0
    %2178 = vmatpush1.bf16.msra.mxu0 %v2074
    %2179 = vmatprep.subr.bf16.mxu0 0
    %2180 = vmatpush1.bf16.msra.mxu0 %v2075
    %2181 = vmatprep.mubr.bf16.mxu0 %v1844
    %2182 = vmatmul.mubr.bf16.gmra.mrb[0].mxu0 %v1843
    %v2183 = vpop.f32.mrb[0].mxu0
    %v2184 = vadd.f32 %v2143, %v2183
    %v2185 = vpop.f32.mrb[0].mxu0
    %v2186 = vpop.f32.mrb[0].mxu0
    %v2187 = vadd.f32 %v2146, %v2186
    %v2188 = vpop.f32.mrb[0].mxu0
    %2189 = vdwg.mxu0
    %v2190 = vmul.f32 %v2184, 0.5
    %v2191 = vmul.f32 %v2187, 0.5
    %v2192 = vmul.f32 %v2190, 1.442695
    %v2193 = vpow.pop %v2192
    %v2194 = vmul.f32 %v2191, 1.442695
    %v2195 = vpow.pop %v2194
    %v2196 = vld [vmem:[%s1] sm:$0xf]
    %v2197 = vld [vmem:[%s1 + $0x4] sm:$0xf]
    %v2198 = vunpack.c.l.bf16 %v2196
    %v2199 = vunpack.c.l.bf16 %v2197
    %2202 = vrot.lane.b32.xlu0 %v2193, 64
    %v2203 = vpop.permute.xlu0 %2202
    %2204 = vrot.lane.b32.xlu0 %v2195, 64
    %v2205 = vpop.permute.xlu0 %2204
    %v2208 = vmul.f32 %v2198, %v2203
    %v2209 = vmul.f32 %v2199, %v2205
    %v2210 = vadd.f32 %v2208, %v2184
    %v2211 = vadd.f32 %v2209, %v2187
    %v2212 = vpack.c.bf16 %v2211, %v2210
    %v2213 = vld [vmem:[%s6] sm:$0xff]
    %v2214 = vld [vmem:[%s6 + $0x8] sm:$0xff]
    %v2215 = vld [vmem:[%s6 + $0x10] sm:$0xff]
    %v2216 = vld [vmem:[%s6 + $0x18] sm:$0xff]
    %v2217 = vld [vmem:[%s6 + $0x20] sm:$0xff]
    %v2218 = vld [vmem:[%s6 + $0x28] sm:$0xff]
    %v2219 = vld [vmem:[%s6 + $0x30] sm:$0xff]
    %v2220 = vld [vmem:[%s6 + $0x38] sm:$0xff]
    %v2221 = vld [vmem:[%s6 + $0x40] sm:$0xff]
    %v2222 = vld [vmem:[%s6 + $0x48] sm:$0xff]
    %v2223 = vld [vmem:[%s6 + $0x50] sm:$0xff]
    %v2224 = vld [vmem:[%s6 + $0x58] sm:$0xff]
    %v2225 = vld [vmem:[%s6 + $0x60] sm:$0xff]
    %v2226 = vld [vmem:[%s6 + $0x68] sm:$0xff]
    %v2227 = vld [vmem:[%s6 + $0x70] sm:$0xff]
    %v2228 = vld [vmem:[%s6 + $0x78] sm:$0xff]
    %v2229 = vld [vmem:[%s7] sm:$0xf]
    %v2231 = vlaneseq
    %v2232 = vshrl.u32 %v2231, 7
    %v2233 = vsub.s32 0, %v2232
    %v2234 = vrot.slane %v2229, %v2233
    %v2235 = vlaneseq
    %v2236 = vshrl.u32 %v2235, 7
    %v2237 = vsub.s32 1, %v2236
    %v2238 = vrot.slane %v2229, %v2237
    %v2239 = vlaneseq
    %v2240 = vshrl.u32 %v2239, 7
    %v2241 = vsub.s32 2, %v2240
    %v2242 = vrot.slane %v2229, %v2241
    %v2243 = vlaneseq
    %v2244 = vshrl.u32 %v2243, 7
    %v2245 = vsub.s32 3, %v2244
    %v2246 = vrot.slane %v2229, %v2245
    %v2267 = vunpack.c.l.b16 %v2213
    %v2268 = vunpack.c.h.b16 %v2213
    %v2269 = vunpack.c.l.b16 %v2214
    %v2270 = vunpack.c.h.b16 %v2214
    %v2271 = vunpack.c.l.b16 %v2215
    %v2272 = vunpack.c.h.b16 %v2215
    %v2273 = vunpack.c.l.b16 %v2216
    %v2274 = vunpack.c.h.b16 %v2216
    %v2275 = vunpack.c.l.b16 %v2217
    %v2276 = vunpack.c.h.b16 %v2217
    %v2277 = vunpack.c.l.b16 %v2218
    %v2278 = vunpack.c.h.b16 %v2218
    %v2279 = vunpack.c.l.b16 %v2219
    %v2280 = vunpack.c.h.b16 %v2219
    %v2281 = vunpack.c.l.b16 %v2220
    %v2282 = vunpack.c.h.b16 %v2220
    %v2283 = vunpack.c.l.b16 %v2221
    %v2284 = vunpack.c.h.b16 %v2221
    %v2285 = vunpack.c.l.b16 %v2222
    %v2286 = vunpack.c.h.b16 %v2222
    %v2287 = vunpack.c.l.b16 %v2223
    %v2288 = vunpack.c.h.b16 %v2223
    %v2289 = vunpack.c.l.b16 %v2224
    %v2290 = vunpack.c.h.b16 %v2224
    %v2291 = vunpack.c.l.b16 %v2225
    %v2292 = vunpack.c.h.b16 %v2225
    %v2293 = vunpack.c.l.b16 %v2226
    %v2294 = vunpack.c.h.b16 %v2226
    %v2295 = vunpack.c.l.b16 %v2227
    %v2296 = vunpack.c.h.b16 %v2227
    %v2297 = vunpack.c.l.b16 %v2228
    %v2298 = vunpack.c.h.b16 %v2228
    %v2299 = vpack.c.b16 %v2271, %v2267
    %v2300 = vpack.c.b16 %v2272, %v2268
    %v2301 = vpack.c.b16 %v2273, %v2269
    %v2302 = vpack.c.b16 %v2274, %v2270
    %v2303 = vpack.c.b16 %v2279, %v2275
    %v2304 = vpack.c.b16 %v2280, %v2276
    %v2305 = vpack.c.b16 %v2281, %v2277
    %v2306 = vpack.c.b16 %v2282, %v2278
    %v2307 = vpack.c.b16 %v2287, %v2283
    %v2308 = vpack.c.b16 %v2288, %v2284
    %v2309 = vpack.c.b16 %v2289, %v2285
    %v2310 = vpack.c.b16 %v2290, %v2286
    %v2311 = vpack.c.b16 %v2295, %v2291
    %v2312 = vpack.c.b16 %v2296, %v2292
    %v2313 = vpack.c.b16 %v2297, %v2293
    %v2314 = vpack.c.b16 %v2298, %v2294
    %vm2331 = vcmask 523264
    %v2333 = vsel %vm2331, %v2212, 0
    %2335 = vmatprep.subr.bf16.mxu0 %v2300
    %2336 = vmatpush1.bf16.msra.mxu0 %v2299
    %2337 = vmatprep.subr.bf16.mxu0 %v2304
    %2338 = vmatpush1.bf16.msra.mxu0 %v2303
    %2339 = vmatprep.subr.bf16.mxu0 %v2308
    %2340 = vmatpush1.bf16.msra.mxu0 %v2307
    %2341 = vmatprep.subr.bf16.mxu0 %v2312
    %2342 = vmatpush1.bf16.msra.mxu0 %v2311
    %2343 = vmatprep.subr.bf16.mxu0 0
    %2344 = vmatpush1.bf16.msra.mxu0 0
    %2345 = vmatprep.subr.bf16.mxu0 0
    %2346 = vmatpush1.bf16.msra.mxu0 0
    %2347 = vmatprep.subr.bf16.mxu0 0
    %2348 = vmatpush1.bf16.msra.mxu0 0
    %2349 = vmatprep.subr.bf16.mxu0 0
    %2350 = vmatpush1.bf16.msra.mxu0 0
    %2351 = vmatprep.subr.bf16.mxu0 0
    %2352 = vmatpush1.bf16.msra.mxu0 0
    %2353 = vmatprep.subr.bf16.mxu0 0
    %2354 = vmatpush1.bf16.msra.mxu0 0
    %2355 = vmatprep.subr.bf16.mxu0 0
    %2356 = vmatpush1.bf16.msra.mxu0 0
    %2357 = vmatprep.subr.bf16.mxu0 0
    %2358 = vmatpush1.bf16.msra.mxu0 0
    %2359 = vmatprep.subr.bf16.mxu0 0
    %2360 = vmatpush1.bf16.msra.mxu0 0
    %2361 = vmatprep.subr.bf16.mxu0 0
    %2362 = vmatpush1.bf16.msra.mxu0 0
    %2363 = vmatprep.subr.bf16.mxu0 0
    %2364 = vmatpush1.bf16.msra.mxu0 0
    %2365 = vmatprep.subr.bf16.mxu0 0
    %2366 = vmatpush1.bf16.msra.mxu0 0
    %2367 = vmatprep.mubr.bf16.mxu0 0
    %2368 = vmatmul.mubr.bf16.gmra.mrb[0].mxu0 %v2333
    %v2369 = vpop.f32.mrb[0].mxu0
    %v2370 = vadd.f32 %v2234, %v2369
    %v2371 = vpop.f32.mrb[0].mxu0
    %v2372 = vadd.f32 %v2238, %v2371
    %v2373 = vpop.f32.mrb[0].mxu0
    %v2374 = vadd.f32 %v2234, %v2373
    %v2375 = vpop.f32.mrb[0].mxu0
    %v2376 = vadd.f32 %v2238, %v2375
    %2377 = vdwg.mxu0
    %2378 = vmatprep.subr.bf16.mxu0 %v2302
    %2379 = vmatpush1.bf16.msra.mxu0 %v2301
    %2380 = vmatprep.subr.bf16.mxu0 %v2306
    %2381 = vmatpush1.bf16.msra.mxu0 %v2305
    %2382 = vmatprep.subr.bf16.mxu0 %v2310
    %2383 = vmatpush1.bf16.msra.mxu0 %v2309
    %2384 = vmatprep.subr.bf16.mxu0 %v2314
    %2385 = vmatpush1.bf16.msra.mxu0 %v2313
    %2386 = vmatprep.subr.bf16.mxu0 0
    %2387 = vmatpush1.bf16.msra.mxu0 0
    %2388 = vmatprep.subr.bf16.mxu0 0
    %2389 = vmatpush1.bf16.msra.mxu0 0
    %2390 = vmatprep.subr.bf16.mxu0 0
    %2391 = vmatpush1.bf16.msra.mxu0 0
    %2392 = vmatprep.subr.bf16.mxu0 0
    %2393 = vmatpush1.bf16.msra.mxu0 0
    %2394 = vmatprep.subr.bf16.mxu0 0
    %2395 = vmatpush1.bf16.msra.mxu0 0
    %2396 = vmatprep.subr.bf16.mxu0 0
    %2397 = vmatpush1.bf16.msra.mxu0 0
    %2398 = vmatprep.subr.bf16.mxu0 0
    %2399 = vmatpush1.bf16.msra.mxu0 0
    %2400 = vmatprep.subr.bf16.mxu0 0
    %2401 = vmatpush1.bf16.msra.mxu0 0
    %2402 = vmatprep.subr.bf16.mxu0 0
    %2403 = vmatpush1.bf16.msra.mxu0 0
    %2404 = vmatprep.subr.bf16.mxu0 0
    %2405 = vmatpush1.bf16.msra.mxu0 0
    %2406 = vmatprep.subr.bf16.mxu0 0
    %2407 = vmatpush1.bf16.msra.mxu0 0
    %2408 = vmatprep.subr.bf16.mxu0 0
    %2409 = vmatpush1.bf16.msra.mxu0 0
    %2410 = vmatprep.mubr.bf16.mxu0 0
    %2411 = vmatmul.mubr.bf16.gmra.mrb[0].mxu0 %v2333
    %v2412 = vpop.f32.mrb[0].mxu0
    %v2413 = vadd.f32 %v2242, %v2412
    %v2414 = vpop.f32.mrb[0].mxu0
    %v2415 = vadd.f32 %v2246, %v2414
    %v2416 = vpop.f32.mrb[0].mxu0
    %v2417 = vadd.f32 %v2242, %v2416
    %v2418 = vpop.f32.mrb[0].mxu0
    %v2419 = vadd.f32 %v2246, %v2418
    %2420 = vdwg.mxu0
    %v2421 = vmax.f32 %v2370, 0.0
    %v2422 = vmax.f32 %v2372, 0.0
    %v2423 = vmax.f32 %v2413, 0.0
    %v2424 = vmax.f32 %v2415, 0.0
    %v2425 = vmax.f32 %v2374, 0.0
    %v2426 = vmax.f32 %v2376, 0.0
    %v2427 = vmax.f32 %v2417, 0.0
    %v2428 = vmax.f32 %v2419, 0.0
    %v2429 = vpack.c.bf16 %v2425, %v2421
    %v2430 = vpack.c.bf16 %v2426, %v2422
    %v2431 = vpack.c.bf16 %v2427, %v2423
    %v2432 = vpack.c.bf16 %v2428, %v2424
    %v2433 = vld [vmem:[#allocation6] sm:$0xff]
    %v2434 = vld [vmem:[#allocation6 + $0x8] sm:$0xff]
    %v2435 = vld [vmem:[#allocation6 + $0x10] sm:$0xff]
    %v2436 = vld [vmem:[#allocation6 + $0x18] sm:$0xf]
    %v2437 = vld [vmem:[#allocation6 + $0x1c] sm:$0xff]
    %v2438 = vld [vmem:[#allocation6 + $0x24] sm:$0xff]
    %v2439 = vld [vmem:[#allocation6 + $0x2c] sm:$0xff]
    %v2440 = vld [vmem:[#allocation6 + $0x34] sm:$0xf]
    %v2441 = vld [vmem:[#allocation6 + $0x38] sm:$0xff]
    %v2442 = vld [vmem:[#allocation6 + $0x40] sm:$0xff]
    %v2443 = vld [vmem:[#allocation6 + $0x48] sm:$0xff]
    %v2444 = vld [vmem:[#allocation6 + $0x50] sm:$0xf]
    %v2445 = vld [vmem:[#allocation6 + $0x54] sm:$0xff]
    %v2446 = vld [vmem:[#allocation6 + $0x5c] sm:$0xff]
    %v2447 = vld [vmem:[#allocation6 + $0x64] sm:$0xff]
    %v2448 = vld [vmem:[#allocation6 + $0x6c] sm:$0xf]
    %v2449 = vld [vmem:[#allocation6 + $0x70] sm:$0xff]
    %v2450 = vld [vmem:[#allocation6 + $0x78] sm:$0xff]
    %v2451 = vld [vmem:[#allocation6 + $0x80] sm:$0xff]
    %v2452 = vld [vmem:[#allocation6 + $0x88] sm:$0xf]
    %v2453 = vld [vmem:[#allocation6 + $0x8c] sm:$0xff]
    %v2454 = vld [vmem:[#allocation6 + $0x94] sm:$0xff]
    %v2455 = vld [vmem:[#allocation6 + $0x9c] sm:$0xff]
    %v2456 = vld [vmem:[#allocation6 + $0xa4] sm:$0xf]
    %v2457 = vld [vmem:[#allocation6 + $0xa8] sm:$0xff]
    %v2458 = vld [vmem:[#allocation6 + $0xb0] sm:$0xff]
    %v2459 = vld [vmem:[#allocation6 + $0xb8] sm:$0xff]
    %v2460 = vld [vmem:[#allocation6 + $0xc0] sm:$0xf]
    %v2461 = vld [vmem:[#allocation6 + $0xc4] sm:$0xff]
    %v2462 = vld [vmem:[#allocation6 + $0xcc] sm:$0xff]
    %v2463 = vld [vmem:[#allocation6 + $0xd4] sm:$0xff]
    %v2464 = vld [vmem:[#allocation6 + $0xdc] sm:$0xf]
    %v2465 = vld [vmem:[#allocation6 + $0xe0] sm:$0xff]
    %v2466 = vld [vmem:[#allocation6 + $0xe8] sm:$0xff]
    %v2467 = vld [vmem:[#allocation6 + $0xf0] sm:$0xff]
    %v2468 = vld [vmem:[#allocation6 + $0xf8] sm:$0xf]
    %v2469 = vld [vmem:[#allocation6 + $0xfc] sm:$0xff]
    %v2470 = vld [vmem:[#allocation6 + $0x104] sm:$0xff]
    %v2471 = vld [vmem:[#allocation6 + $0x10c] sm:$0xff]
    %v2472 = vld [vmem:[#allocation6 + $0x114] sm:$0xf]
    %v2473 = vld [vmem:[#allocation6 + $0x118] sm:$0xff]
    %v2474 = vld [vmem:[#allocation6 + $0x120] sm:$0xff]
    %v2475 = vld [vmem:[#allocation6 + $0x128] sm:$0xff]
    %v2476 = vld [vmem:[#allocation6 + $0x130] sm:$0xf]
    %v2477 = vld [vmem:[#allocation6 + $0x134] sm:$0xff]
    %v2478 = vld [vmem:[#allocation6 + $0x13c] sm:$0xff]
    %v2479 = vld [vmem:[#allocation6 + $0x144] sm:$0xff]
    %v2480 = vld [vmem:[#allocation6 + $0x14c] sm:$0xf]
    %v2481 = vld [vmem:[#allocation6 + $0x150] sm:$0xff]
    %v2482 = vld [vmem:[#allocation6 + $0x158] sm:$0xff]
    %v2483 = vld [vmem:[#allocation6 + $0x160] sm:$0xff]
    %v2484 = vld [vmem:[#allocation6 + $0x168] sm:$0xf]
    %v2485 = vld [vmem:[#allocation6 + $0x16c] sm:$0xff]
    %v2486 = vld [vmem:[#allocation6 + $0x174] sm:$0xff]
    %v2487 = vld [vmem:[#allocation6 + $0x17c] sm:$0xff]
    %v2488 = vld [vmem:[#allocation6 + $0x184] sm:$0xf]
    %v2489 = vld [vmem:[#allocation6 + $0x188] sm:$0xff]
    %v2490 = vld [vmem:[#allocation6 + $0x190] sm:$0xff]
    %v2491 = vld [vmem:[#allocation6 + $0x198] sm:$0xff]
    %v2492 = vld [vmem:[#allocation6 + $0x1a0] sm:$0xf]
    %v2493 = vld [vmem:[#allocation6 + $0x1a4] sm:$0xff]
    %v2494 = vld [vmem:[#allocation6 + $0x1ac] sm:$0xff]
    %v2495 = vld [vmem:[#allocation6 + $0x1b4] sm:$0xff]
    %v2496 = vld [vmem:[#allocation6 + $0x1bc] sm:$0xf]
    %v2497 = vld [vmem:[#allocation6 + $0x1c0] sm:$0xff]
    %v2498 = vld [vmem:[#allocation6 + $0x1c8] sm:$0xff]
    %v2499 = vld [vmem:[#allocation6 + $0x1d0] sm:$0xff]
    %v2500 = vld [vmem:[#allocation6 + $0x1d8] sm:$0xf]
    %v2501 = vld [vmem:[#allocation6 + $0x1dc] sm:$0xff]
    %v2502 = vld [vmem:[#allocation6 + $0x1e4] sm:$0xff]
    %v2503 = vld [vmem:[#allocation6 + $0x1ec] sm:$0xff]
    %v2504 = vld [vmem:[#allocation6 + $0x1f4] sm:$0xf]
    %v2505 = vld [vmem:[#allocation6 + $0x1f8] sm:$0xff]
    %v2506 = vld [vmem:[#allocation6 + $0x200] sm:$0xff]
    %v2507 = vld [vmem:[#allocation6 + $0x208] sm:$0xff]
    %v2508 = vld [vmem:[#allocation6 + $0x210] sm:$0xf]
    %v2509 = vld [vmem:[#allocation6 + $0x214] sm:$0xff]
    %v2510 = vld [vmem:[#allocation6 + $0x21c] sm:$0xff]
    %v2511 = vld [vmem:[#allocation6 + $0x224] sm:$0xff]
    %v2512 = vld [vmem:[#allocation6 + $0x22c] sm:$0xf]
    %v2513 = vld [vmem:[#allocation6 + $0x230] sm:$0xff]
    %v2514 = vld [vmem:[#allocation6 + $0x238] sm:$0xff]
    %v2515 = vld [vmem:[#allocation6 + $0x240] sm:$0xff]
    %v2516 = vld [vmem:[#allocation6 + $0x248] sm:$0xf]
    %v2517 = vld [vmem:[#allocation6 + $0x24c] sm:$0xff]
    %v2518 = vld [vmem:[#allocation6 + $0x254] sm:$0xff]
    %v2519 = vld [vmem:[#allocation6 + $0x25c] sm:$0xff]
    %v2520 = vld [vmem:[#allocation6 + $0x264] sm:$0xf]
    %v2521 = vld [vmem:[#allocation6 + $0x268] sm:$0xff]
    %v2522 = vld [vmem:[#allocation6 + $0x270] sm:$0xff]
    %v2523 = vld [vmem:[#allocation6 + $0x278] sm:$0xff]
    %v2524 = vld [vmem:[#allocation6 + $0x280] sm:$0xf]
    %v2525 = vld [vmem:[#allocation6 + $0x284] sm:$0xff]
    %v2526 = vld [vmem:[#allocation6 + $0x28c] sm:$0xff]
    %v2527 = vld [vmem:[#allocation6 + $0x294] sm:$0xff]
    %v2528 = vld [vmem:[#allocation6 + $0x29c] sm:$0xf]
    %v2529 = vld [vmem:[#allocation6 + $0x2a0] sm:$0xff]
    %v2530 = vld [vmem:[#allocation6 + $0x2a8] sm:$0xff]
    %v2531 = vld [vmem:[#allocation6 + $0x2b0] sm:$0xff]
    %v2532 = vld [vmem:[#allocation6 + $0x2b8] sm:$0xf]
    %v2533 = vld [vmem:[#allocation6 + $0x2bc] sm:$0xff]
    %v2534 = vld [vmem:[#allocation6 + $0x2c4] sm:$0xff]
    %v2535 = vld [vmem:[#allocation6 + $0x2cc] sm:$0xff]
    %v2536 = vld [vmem:[#allocation6 + $0x2d4] sm:$0xf]
    %v2537 = vld [vmem:[#allocation6 + $0x2d8] sm:$0xff]
    %v2538 = vld [vmem:[#allocation6 + $0x2e0] sm:$0xff]
    %v2539 = vld [vmem:[#allocation6 + $0x2e8] sm:$0xff]
    %v2540 = vld [vmem:[#allocation6 + $0x2f0] sm:$0xf]
    %v2541 = vld [vmem:[#allocation6 + $0x2f4] sm:$0xff]
    %v2542 = vld [vmem:[#allocation6 + $0x2fc] sm:$0xff]
    %v2543 = vld [vmem:[#allocation6 + $0x304] sm:$0xff]
    %v2544 = vld [vmem:[#allocation6 + $0x30c] sm:$0xf]
    %v2545 = vld [vmem:[#allocation6 + $0x310] sm:$0xff]
    %v2546 = vld [vmem:[#allocation6 + $0x318] sm:$0xff]
    %v2547 = vld [vmem:[#allocation6 + $0x320] sm:$0xff]
    %v2548 = vld [vmem:[#allocation6 + $0x328] sm:$0xf]
    %v2549 = vld [vmem:[#allocation6 + $0x32c] sm:$0xff]
    %v2550 = vld [vmem:[#allocation6 + $0x334] sm:$0xff]
    %v2551 = vld [vmem:[#allocation6 + $0x33c] sm:$0xff]
    %v2552 = vld [vmem:[#allocation6 + $0x344] sm:$0xf]
    %v2553 = vld [vmem:[#allocation6 + $0x348] sm:$0xff]
    %v2554 = vld [vmem:[#allocation6 + $0x350] sm:$0xff]
    %v2555 = vld [vmem:[#allocation6 + $0x358] sm:$0xff]
    %v2556 = vld [vmem:[#allocation6 + $0x360] sm:$0xf]
    %v2557 = vld [vmem:[#allocation6 + $0x364] sm:$0xff]
    %v2558 = vld [vmem:[#allocation6 + $0x36c] sm:$0xff]
    %v2559 = vld [vmem:[#allocation6 + $0x374] sm:$0xff]
    %v2560 = vld [vmem:[#allocation6 + $0x37c] sm:$0xf]
    %v2561 = vld [vmem:[#allocation6 + $0x380] sm:$0xff]
    %v2562 = vld [vmem:[#allocation6 + $0x388] sm:$0xff]
    %v2563 = vld [vmem:[#allocation6 + $0x390] sm:$0xff]
    %v2564 = vld [vmem:[#allocation6 + $0x398] sm:$0xf]
    %v2565 = vld [vmem:[#allocation6 + $0x39c] sm:$0xff]
    %v2566 = vld [vmem:[#allocation6 + $0x3a4] sm:$0xff]
    %v2567 = vld [vmem:[#allocation6 + $0x3ac] sm:$0xff]
    %v2568 = vld [vmem:[#allocation6 + $0x3b4] sm:$0xf]
    %v2569 = vld [vmem:[#allocation6 + $0x3b8] sm:$0xff]
    %v2570 = vld [vmem:[#allocation6 + $0x3c0] sm:$0xff]
    %v2571 = vld [vmem:[#allocation6 + $0x3c8] sm:$0xff]
    %v2572 = vld [vmem:[#allocation6 + $0x3d0] sm:$0xf]
    %v2573 = vld [vmem:[#allocation6 + $0x3d4] sm:$0xff]
    %v2574 = vld [vmem:[#allocation6 + $0x3dc] sm:$0xff]
    %v2575 = vld [vmem:[#allocation6 + $0x3e4] sm:$0xff]
    %v2576 = vld [vmem:[#allocation6 + $0x3ec] sm:$0xf]
    %v2577 = vld [vmem:[#allocation6 + $0x3f0] sm:$0xff]
    %v2578 = vld [vmem:[#allocation6 + $0x3f8] sm:$0xff]
    %v2579 = vld [vmem:[#allocation6 + $0x400] sm:$0xff]
    %v2580 = vld [vmem:[#allocation6 + $0x408] sm:$0xf]
    %v2581 = vld [vmem:[#allocation6 + $0x40c] sm:$0xff]
    %v2582 = vld [vmem:[#allocation6 + $0x414] sm:$0xff]
    %v2583 = vld [vmem:[#allocation6 + $0x41c] sm:$0xff]
    %v2584 = vld [vmem:[#allocation6 + $0x424] sm:$0xf]
    %v2585 = vld [vmem:[#allocation6 + $0x428] sm:$0xff]
    %v2586 = vld [vmem:[#allocation6 + $0x430] sm:$0xff]
    %v2587 = vld [vmem:[#allocation6 + $0x438] sm:$0xff]
    %v2588 = vld [vmem:[#allocation6 + $0x440] sm:$0xf]
    %v2589 = vld [vmem:[#allocation6 + $0x444] sm:$0xff]
    %v2590 = vld [vmem:[#allocation6 + $0x44c] sm:$0xff]
    %v2591 = vld [vmem:[#allocation6 + $0x454] sm:$0xff]
    %v2592 = vld [vmem:[#allocation6 + $0x45c] sm:$0xf]
    %v2593 = vld [vmem:[#allocation6 + $0x460] sm:$0xff]
    %v2594 = vld [vmem:[#allocation6 + $0x468] sm:$0xff]
    %v2595 = vld [vmem:[#allocation6 + $0x470] sm:$0xff]
    %v2596 = vld [vmem:[#allocation6 + $0x478] sm:$0xf]
    %v2597 = vld [vmem:[#allocation6 + $0x47c] sm:$0xff]
    %v2598 = vld [vmem:[#allocation6 + $0x484] sm:$0xff]
    %v2599 = vld [vmem:[#allocation6 + $0x48c] sm:$0xff]
    %v2600 = vld [vmem:[#allocation6 + $0x494] sm:$0xf]
    %v2601 = vld [vmem:[#allocation6 + $0x498] sm:$0xff]
    %v2602 = vld [vmem:[#allocation6 + $0x4a0] sm:$0xff]
    %v2603 = vld [vmem:[#allocation6 + $0x4a8] sm:$0xff]
    %v2604 = vld [vmem:[#allocation6 + $0x4b0] sm:$0xf]
    %v2605 = vld [vmem:[#allocation6 + $0x4b4] sm:$0xff]
    %v2606 = vld [vmem:[#allocation6 + $0x4bc] sm:$0xff]
    %v2607 = vld [vmem:[#allocation6 + $0x4c4] sm:$0xff]
    %v2608 = vld [vmem:[#allocation6 + $0x4cc] sm:$0xf]
    %v2609 = vld [vmem:[#allocation6 + $0x4d0] sm:$0xff]
    %v2610 = vld [vmem:[#allocation6 + $0x4d8] sm:$0xff]
    %v2611 = vld [vmem:[#allocation6 + $0x4e0] sm:$0xff]
    %v2612 = vld [vmem:[#allocation6 + $0x4e8] sm:$0xf]
    %v2613 = vld [vmem:[#allocation6 + $0x4ec] sm:$0xff]
    %v2614 = vld [vmem:[#allocation6 + $0x4f4] sm:$0xff]
    %v2615 = vld [vmem:[#allocation6 + $0x4fc] sm:$0xff]
    %v2616 = vld [vmem:[#allocation6 + $0x504] sm:$0xf]
    %v2617 = vld [vmem:[#allocation6 + $0x508] sm:$0xff]
    %v2618 = vld [vmem:[#allocation6 + $0x510] sm:$0xff]
    %v2619 = vld [vmem:[#allocation6 + $0x518] sm:$0xff]
    %v2620 = vld [vmem:[#allocation6 + $0x520] sm:$0xf]
    %v2621 = vld [vmem:[#allocation6 + $0x524] sm:$0xff]
    %v2622 = vld [vmem:[#allocation6 + $0x52c] sm:$0xff]
    %v2623 = vld [vmem:[#allocation6 + $0x534] sm:$0xff]
    %v2624 = vld [vmem:[#allocation6 + $0x53c] sm:$0xf]
    %v2625 = vld [vmem:[#allocation6 + $0x540] sm:$0xff]
    %v2626 = vld [vmem:[#allocation6 + $0x548] sm:$0xff]
    %v2627 = vld [vmem:[#allocation6 + $0x550] sm:$0xff]
    %v2628 = vld [vmem:[#allocation6 + $0x558] sm:$0xf]
    %v2629 = vld [vmem:[#allocation6 + $0x55c] sm:$0xff]
    %v2630 = vld [vmem:[#allocation6 + $0x564] sm:$0xff]
    %v2631 = vld [vmem:[#allocation6 + $0x56c] sm:$0xff]
    %v2632 = vld [vmem:[#allocation6 + $0x574] sm:$0xf]
    %v2633 = vld [vmem:[#allocation6 + $0x578] sm:$0xff]
    %v2634 = vld [vmem:[#allocation6 + $0x580] sm:$0xff]
    %v2635 = vld [vmem:[#allocation6 + $0x588] sm:$0xff]
    %v2636 = vld [vmem:[#allocation6 + $0x590] sm:$0xf]
    %v2637 = vld [vmem:[#allocation6 + $0x594] sm:$0xff]
    %v2638 = vld [vmem:[#allocation6 + $0x59c] sm:$0xff]
    %v2639 = vld [vmem:[#allocation6 + $0x5a4] sm:$0xff]
    %v2640 = vld [vmem:[#allocation6 + $0x5ac] sm:$0xf]
    %v2641 = vld [vmem:[#allocation6 + $0x5b0] sm:$0xff]
    %v2642 = vld [vmem:[#allocation6 + $0x5b8] sm:$0xff]
    %v2643 = vld [vmem:[#allocation6 + $0x5c0] sm:$0xff]
    %v2644 = vld [vmem:[#allocation6 + $0x5c8] sm:$0xf]
    %v2645 = vld [vmem:[#allocation6 + $0x5cc] sm:$0xff]
    %v2646 = vld [vmem:[#allocation6 + $0x5d4] sm:$0xff]
    %v2647 = vld [vmem:[#allocation6 + $0x5dc] sm:$0xff]
    %v2648 = vld [vmem:[#allocation6 + $0x5e4] sm:$0xf]
    %v2649 = vld [vmem:[#allocation6 + $0x5e8] sm:$0xff]
    %v2650 = vld [vmem:[#allocation6 + $0x5f0] sm:$0xff]
    %v2651 = vld [vmem:[#allocation6 + $0x5f8] sm:$0xff]
    %v2652 = vld [vmem:[#allocation6 + $0x600] sm:$0xf]
    %v2653 = vld [vmem:[#allocation6 + $0x604] sm:$0xff]
    %v2654 = vld [vmem:[#allocation6 + $0x60c] sm:$0xff]
    %v2655 = vld [vmem:[#allocation6 + $0x614] sm:$0xff]
    %v2656 = vld [vmem:[#allocation6 + $0x61c] sm:$0xf]
    %v2657 = vld [vmem:[#allocation6 + $0x620] sm:$0xff]
    %v2658 = vld [vmem:[#allocation6 + $0x628] sm:$0xff]
    %v2659 = vld [vmem:[#allocation6 + $0x630] sm:$0xff]
    %v2660 = vld [vmem:[#allocation6 + $0x638] sm:$0xf]
    %v2661 = vld [vmem:[#allocation6 + $0x63c] sm:$0xff]
    %v2662 = vld [vmem:[#allocation6 + $0x644] sm:$0xff]
    %v2663 = vld [vmem:[#allocation6 + $0x64c] sm:$0xff]
    %v2664 = vld [vmem:[#allocation6 + $0x654] sm:$0xf]
    %v2665 = vld [vmem:[#allocation6 + $0x658] sm:$0xff]
    %v2666 = vld [vmem:[#allocation6 + $0x660] sm:$0xff]
    %v2667 = vld [vmem:[#allocation6 + $0x668] sm:$0xff]
    %v2668 = vld [vmem:[#allocation6 + $0x670] sm:$0xf]
    %v2669 = vld [vmem:[#allocation6 + $0x674] sm:$0xff]
    %v2670 = vld [vmem:[#allocation6 + $0x67c] sm:$0xff]
    %v2671 = vld [vmem:[#allocation6 + $0x684] sm:$0xff]
    %v2672 = vld [vmem:[#allocation6 + $0x68c] sm:$0xf]
    %v2673 = vld [vmem:[#allocation6 + $0x690] sm:$0xff]
    %v2674 = vld [vmem:[#allocation6 + $0x698] sm:$0xff]
    %v2675 = vld [vmem:[#allocation6 + $0x6a0] sm:$0xff]
    %v2676 = vld [vmem:[#allocation6 + $0x6a8] sm:$0xf]
    %v2677 = vld [vmem:[#allocation6 + $0x6ac] sm:$0xff]
    %v2678 = vld [vmem:[#allocation6 + $0x6b4] sm:$0xff]
    %v2679 = vld [vmem:[#allocation6 + $0x6bc] sm:$0xff]
    %v2680 = vld [vmem:[#allocation6 + $0x6c4] sm:$0xf]
    %v2681 = vld [vmem:[#allocation6 + $0x6c8] sm:$0xff]
    %v2682 = vld [vmem:[#allocation6 + $0x6d0] sm:$0xff]
    %v2683 = vld [vmem:[#allocation6 + $0x6d8] sm:$0xff]
    %v2684 = vld [vmem:[#allocation6 + $0x6e0] sm:$0xf]
    %v2685 = vld [vmem:[#allocation6 + $0x6e4] sm:$0xff]
    %v2686 = vld [vmem:[#allocation6 + $0x6ec] sm:$0xff]
    %v2687 = vld [vmem:[#allocation6 + $0x6f4] sm:$0xff]
    %v2688 = vld [vmem:[#allocation6 + $0x6fc] sm:$0xf]
    %v2689 = vld [vmem:[%s9] sm:$0xff]
    %v2691 = vlaneseq
    %v2692 = vshrl.u32 %v2691, 7
    %v2693 = vsub.s32 0, %v2692
    %v2694 = vrot.slane %v2689, %v2693
    %v2695 = vlaneseq
    %v2696 = vshrl.u32 %v2695, 7
    %v2697 = vsub.s32 1, %v2696
    %v2698 = vrot.slane %v2689, %v2697
    %v2699 = vlaneseq
    %v2700 = vshrl.u32 %v2699, 7
    %v2701 = vsub.s32 2, %v2700
    %v2702 = vrot.slane %v2689, %v2701
    %v2703 = vlaneseq
    %v2704 = vshrl.u32 %v2703, 7
    %v2705 = vsub.s32 3, %v2704
    %v2706 = vrot.slane %v2689, %v2705
    %v2707 = vlaneseq
    %v2708 = vshrl.u32 %v2707, 7
    %v2709 = vsub.s32 4, %v2708
    %v2710 = vrot.slane %v2689, %v2709
    %v2711 = vlaneseq
    %v2712 = vshrl.u32 %v2711, 7
    %v2713 = vsub.s32 5, %v2712
    %v2714 = vrot.slane %v2689, %v2713
    %v2715 = vlaneseq
    %v2716 = vshrl.u32 %v2715, 7
    %v2717 = vsub.s32 6, %v2716
    %v2718 = vrot.slane %v2689, %v2717
    %v2982 = vunpack.c.l.b16 %v2433
    %v2983 = vunpack.c.h.b16 %v2433
    %v2984 = vunpack.c.l.b16 %v2434
    %v2985 = vunpack.c.h.b16 %v2434
    %v2986 = vunpack.c.l.b16 %v2435
    %v2987 = vunpack.c.h.b16 %v2435
    %v2988 = vunpack.c.l.b16 %v2436
    %v2989 = vunpack.c.l.b16 %v2437
    %v2990 = vunpack.c.h.b16 %v2437
    %v2991 = vunpack.c.l.b16 %v2438
    %v2992 = vunpack.c.h.b16 %v2438
    %v2993 = vunpack.c.l.b16 %v2439
    %v2994 = vunpack.c.h.b16 %v2439
    %v2995 = vunpack.c.l.b16 %v2440
    %v2996 = vunpack.c.l.b16 %v2441
    %v2997 = vunpack.c.h.b16 %v2441
    %v2998 = vunpack.c.l.b16 %v2442
    %v2999 = vunpack.c.h.b16 %v2442
    %v3000 = vunpack.c.l.b16 %v2443
    %v3001 = vunpack.c.h.b16 %v2443
    %v3002 = vunpack.c.l.b16 %v2444
    %v3003 = vunpack.c.l.b16 %v2445
    %v3004 = vunpack.c.h.b16 %v2445
    %v3005 = vunpack.c.l.b16 %v2446
    %v3006 = vunpack.c.h.b16 %v2446
    %v3007 = vunpack.c.l.b16 %v2447
    %v3008 = vunpack.c.h.b16 %v2447
    %v3009 = vunpack.c.l.b16 %v2448
    %v3010 = vunpack.c.l.b16 %v2449
    %v3011 = vunpack.c.h.b16 %v2449
    %v3012 = vunpack.c.l.b16 %v2450
    %v3013 = vunpack.c.h.b16 %v2450
    %v3014 = vunpack.c.l.b16 %v2451
    %v3015 = vunpack.c.h.b16 %v2451
    %v3016 = vunpack.c.l.b16 %v2452
    %v3017 = vunpack.c.l.b16 %v2453
    %v3018 = vunpack.c.h.b16 %v2453
    %v3019 = vunpack.c.l.b16 %v2454
    %v3020 = vunpack.c.h.b16 %v2454
    %v3021 = vunpack.c.l.b16 %v2455
    %v3022 = vunpack.c.h.b16 %v2455
    %v3023 = vunpack.c.l.b16 %v2456
    %v3024 = vunpack.c.l.b16 %v2457
    %v3025 = vunpack.c.h.b16 %v2457
    %v3026 = vunpack.c.l.b16 %v2458
    %v3027 = vunpack.c.h.b16 %v2458
    %v3028 = vunpack.c.l.b16 %v2459
    %v3029 = vunpack.c.h.b16 %v2459
    %v3030 = vunpack.c.l.b16 %v2460
    %v3031 = vunpack.c.l.b16 %v2461
    %v3032 = vunpack.c.h.b16 %v2461
    %v3033 = vunpack.c.l.b16 %v2462
    %v3034 = vunpack.c.h.b16 %v2462
    %v3035 = vunpack.c.l.b16 %v2463
    %v3036 = vunpack.c.h.b16 %v2463
    %v3037 = vunpack.c.l.b16 %v2464
    %v3038 = vunpack.c.l.b16 %v2465
    %v3039 = vunpack.c.h.b16 %v2465
    %v3040 = vunpack.c.l.b16 %v2466
    %v3041 = vunpack.c.h.b16 %v2466
    %v3042 = vunpack.c.l.b16 %v2467
    %v3043 = vunpack.c.h.b16 %v2467
    %v3044 = vunpack.c.l.b16 %v2468
    %v3045 = vunpack.c.l.b16 %v2469
    %v3046 = vunpack.c.h.b16 %v2469
    %v3047 = vunpack.c.l.b16 %v2470
    %v3048 = vunpack.c.h.b16 %v2470
    %v3049 = vunpack.c.l.b16 %v2471
    %v3050 = vunpack.c.h.b16 %v2471
    %v3051 = vunpack.c.l.b16 %v2472
    %v3052 = vunpack.c.l.b16 %v2473
    %v3053 = vunpack.c.h.b16 %v2473
    %v3054 = vunpack.c.l.b16 %v2474
    %v3055 = vunpack.c.h.b16 %v2474
    %v3056 = vunpack.c.l.b16 %v2475
    %v3057 = vunpack.c.h.b16 %v2475
    %v3058 = vunpack.c.l.b16 %v2476
    %v3059 = vunpack.c.l.b16 %v2477
    %v3060 = vunpack.c.h.b16 %v2477
    %v3061 = vunpack.c.l.b16 %v2478
    %v3062 = vunpack.c.h.b16 %v2478
    %v3063 = vunpack.c.l.b16 %v2479
    %v3064 = vunpack.c.h.b16 %v2479
    %v3065 = vunpack.c.l.b16 %v2480
    %v3066 = vunpack.c.l.b16 %v2481
    %v3067 = vunpack.c.h.b16 %v2481
    %v3068 = vunpack.c.l.b16 %v2482
    %v3069 = vunpack.c.h.b16 %v2482
    %v3070 = vunpack.c.l.b16 %v2483
    %v3071 = vunpack.c.h.b16 %v2483
    %v3072 = vunpack.c.l.b16 %v2484
    %v3073 = vunpack.c.l.b16 %v2485
    %v3074 = vunpack.c.h.b16 %v2485
    %v3075 = vunpack.c.l.b16 %v2486
    %v3076 = vunpack.c.h.b16 %v2486
    %v3077 = vunpack.c.l.b16 %v2487
    %v3078 = vunpack.c.h.b16 %v2487
    %v3079 = vunpack.c.l.b16 %v2488
    %v3080 = vunpack.c.l.b16 %v2489
    %v3081 = vunpack.c.h.b16 %v2489
    %v3082 = vunpack.c.l.b16 %v2490
    %v3083 = vunpack.c.h.b16 %v2490
    %v3084 = vunpack.c.l.b16 %v2491
    %v3085 = vunpack.c.h.b16 %v2491
    %v3086 = vunpack.c.l.b16 %v2492
    %v3087 = vunpack.c.l.b16 %v2493
    %v3088 = vunpack.c.h.b16 %v2493
    %v3089 = vunpack.c.l.b16 %v2494
    %v3090 = vunpack.c.h.b16 %v2494
    %v3091 = vunpack.c.l.b16 %v2495
    %v3092 = vunpack.c.h.b16 %v2495
    %v3093 = vunpack.c.l.b16 %v2496
    %v3094 = vunpack.c.l.b16 %v2497
    %v3095 = vunpack.c.h.b16 %v2497
    %v3096 = vunpack.c.l.b16 %v2498
    %v3097 = vunpack.c.h.b16 %v2498
    %v3098 = vunpack.c.l.b16 %v2499
    %v3099 = vunpack.c.h.b16 %v2499
    %v3100 = vunpack.c.l.b16 %v2500
    %v3101 = vunpack.c.l.b16 %v2501
    %v3102 = vunpack.c.h.b16 %v2501
    %v3103 = vunpack.c.l.b16 %v2502
    %v3104 = vunpack.c.h.b16 %v2502
    %v3105 = vunpack.c.l.b16 %v2503
    %v3106 = vunpack.c.h.b16 %v2503
    %v3107 = vunpack.c.l.b16 %v2504
    %v3108 = vunpack.c.l.b16 %v2505
    %v3109 = vunpack.c.h.b16 %v2505
    %v3110 = vunpack.c.l.b16 %v2506
    %v3111 = vunpack.c.h.b16 %v2506
    %v3112 = vunpack.c.l.b16 %v2507
    %v3113 = vunpack.c.h.b16 %v2507
    %v3114 = vunpack.c.l.b16 %v2508
    %v3115 = vunpack.c.l.b16 %v2509
    %v3116 = vunpack.c.h.b16 %v2509
    %v3117 = vunpack.c.l.b16 %v2510
    %v3118 = vunpack.c.h.b16 %v2510
    %v3119 = vunpack.c.l.b16 %v2511
    %v3120 = vunpack.c.h.b16 %v2511
    %v3121 = vunpack.c.l.b16 %v2512
    %v3122 = vunpack.c.l.b16 %v2513
    %v3123 = vunpack.c.h.b16 %v2513
    %v3124 = vunpack.c.l.b16 %v2514
    %v3125 = vunpack.c.h.b16 %v2514
    %v3126 = vunpack.c.l.b16 %v2515
    %v3127 = vunpack.c.h.b16 %v2515
    %v3128 = vunpack.c.l.b16 %v2516
    %v3129 = vunpack.c.l.b16 %v2517
    %v3130 = vunpack.c.h.b16 %v2517
    %v3131 = vunpack.c.l.b16 %v2518
    %v3132 = vunpack.c.h.b16 %v2518
    %v3133 = vunpack.c.l.b16 %v2519
    %v3134 = vunpack.c.h.b16 %v2519
    %v3135 = vunpack.c.l.b16 %v2520
    %v3136 = vunpack.c.l.b16 %v2521
    %v3137 = vunpack.c.h.b16 %v2521
    %v3138 = vunpack.c.l.b16 %v2522
    %v3139 = vunpack.c.h.b16 %v2522
    %v3140 = vunpack.c.l.b16 %v2523
    %v3141 = vunpack.c.h.b16 %v2523
    %v3142 = vunpack.c.l.b16 %v2524
    %v3143 = vunpack.c.l.b16 %v2525
    %v3144 = vunpack.c.h.b16 %v2525
    %v3145 = vunpack.c.l.b16 %v2526
    %v3146 = vunpack.c.h.b16 %v2526
    %v3147 = vunpack.c.l.b16 %v2527
    %v3148 = vunpack.c.h.b16 %v2527
    %v3149 = vunpack.c.l.b16 %v2528
    %v3150 = vunpack.c.l.b16 %v2529
    %v3151 = vunpack.c.h.b16 %v2529
    %v3152 = vunpack.c.l.b16 %v2530
    %v3153 = vunpack.c.h.b16 %v2530
    %v3154 = vunpack.c.l.b16 %v2531
    %v3155 = vunpack.c.h.b16 %v2531
    %v3156 = vunpack.c.l.b16 %v2532
    %v3157 = vunpack.c.l.b16 %v2533
    %v3158 = vunpack.c.h.b16 %v2533
    %v3159 = vunpack.c.l.b16 %v2534
    %v3160 = vunpack.c.h.b16 %v2534
    %v3161 = vunpack.c.l.b16 %v2535
    %v3162 = vunpack.c.h.b16 %v2535
    %v3163 = vunpack.c.l.b16 %v2536
    %v3164 = vunpack.c.l.b16 %v2537
    %v3165 = vunpack.c.h.b16 %v2537
    %v3166 = vunpack.c.l.b16 %v2538
    %v3167 = vunpack.c.h.b16 %v2538
    %v3168 = vunpack.c.l.b16 %v2539
    %v3169 = vunpack.c.h.b16 %v2539
    %v3170 = vunpack.c.l.b16 %v2540
    %v3171 = vunpack.c.l.b16 %v2541
    %v3172 = vunpack.c.h.b16 %v2541
    %v3173 = vunpack.c.l.b16 %v2542
    %v3174 = vunpack.c.h.b16 %v2542
    %v3175 = vunpack.c.l.b16 %v2543
    %v3176 = vunpack.c.h.b16 %v2543
    %v3177 = vunpack.c.l.b16 %v2544
    %v3178 = vunpack.c.l.b16 %v2545
    %v3179 = vunpack.c.h.b16 %v2545
    %v3180 = vunpack.c.l.b16 %v2546
    %v3181 = vunpack.c.h.b16 %v2546
    %v3182 = vunpack.c.l.b16 %v2547
    %v3183 = vunpack.c.h.b16 %v2547
    %v3184 = vunpack.c.l.b16 %v2548
    %v3185 = vunpack.c.l.b16 %v2549
    %v3186 = vunpack.c.h.b16 %v2549
    %v3187 = vunpack.c.l.b16 %v2550
    %v3188 = vunpack.c.h.b16 %v2550
    %v3189 = vunpack.c.l.b16 %v2551
    %v3190 = vunpack.c.h.b16 %v2551
    %v3191 = vunpack.c.l.b16 %v2552
    %v3192 = vunpack.c.l.b16 %v2553
    %v3193 = vunpack.c.h.b16 %v2553
    %v3194 = vunpack.c.l.b16 %v2554
    %v3195 = vunpack.c.h.b16 %v2554
    %v3196 = vunpack.c.l.b16 %v2555
    %v3197 = vunpack.c.h.b16 %v2555
    %v3198 = vunpack.c.l.b16 %v2556
    %v3199 = vunpack.c.l.b16 %v2557
    %v3200 = vunpack.c.h.b16 %v2557
    %v3201 = vunpack.c.l.b16 %v2558
    %v3202 = vunpack.c.h.b16 %v2558
    %v3203 = vunpack.c.l.b16 %v2559
    %v3204 = vunpack.c.h.b16 %v2559
    %v3205 = vunpack.c.l.b16 %v2560
    %v3206 = vunpack.c.l.b16 %v2561
    %v3207 = vunpack.c.h.b16 %v2561
    %v3208 = vunpack.c.l.b16 %v2562
    %v3209 = vunpack.c.h.b16 %v2562
    %v3210 = vunpack.c.l.b16 %v2563
    %v3211 = vunpack.c.h.b16 %v2563
    %v3212 = vunpack.c.l.b16 %v2564
    %v3213 = vunpack.c.l.b16 %v2565
    %v3214 = vunpack.c.h.b16 %v2565
    %v3215 = vunpack.c.l.b16 %v2566
    %v3216 = vunpack.c.h.b16 %v2566
    %v3217 = vunpack.c.l.b16 %v2567
    %v3218 = vunpack.c.h.b16 %v2567
    %v3219 = vunpack.c.l.b16 %v2568
    %v3220 = vunpack.c.l.b16 %v2569
    %v3221 = vunpack.c.h.b16 %v2569
    %v3222 = vunpack.c.l.b16 %v2570
    %v3223 = vunpack.c.h.b16 %v2570
    %v3224 = vunpack.c.l.b16 %v2571
    %v3225 = vunpack.c.h.b16 %v2571
    %v3226 = vunpack.c.l.b16 %v2572
    %v3227 = vunpack.c.l.b16 %v2573
    %v3228 = vunpack.c.h.b16 %v2573
    %v3229 = vunpack.c.l.b16 %v2574
    %v3230 = vunpack.c.h.b16 %v2574
    %v3231 = vunpack.c.l.b16 %v2575
    %v3232 = vunpack.c.h.b16 %v2575
    %v3233 = vunpack.c.l.b16 %v2576
    %v3234 = vunpack.c.l.b16 %v2577
    %v3235 = vunpack.c.h.b16 %v2577
    %v3236 = vunpack.c.l.b16 %v2578
    %v3237 = vunpack.c.h.b16 %v2578
    %v3238 = vunpack.c.l.b16 %v2579
    %v3239 = vunpack.c.h.b16 %v2579
    %v3240 = vunpack.c.l.b16 %v2580
    %v3241 = vunpack.c.l.b16 %v2581
    %v3242 = vunpack.c.h.b16 %v2581
    %v3243 = vunpack.c.l.b16 %v2582
    %v3244 = vunpack.c.h.b16 %v2582
    %v3245 = vunpack.c.l.b16 %v2583
    %v3246 = vunpack.c.h.b16 %v2583
    %v3247 = vunpack.c.l.b16 %v2584
    %v3248 = vunpack.c.l.b16 %v2585
    %v3249 = vunpack.c.h.b16 %v2585
    %v3250 = vunpack.c.l.b16 %v2586
    %v3251 = vunpack.c.h.b16 %v2586
    %v3252 = vunpack.c.l.b16 %v2587
    %v3253 = vunpack.c.h.b16 %v2587
    %v3254 = vunpack.c.l.b16 %v2588
    %v3255 = vunpack.c.l.b16 %v2589
    %v3256 = vunpack.c.h.b16 %v2589
    %v3257 = vunpack.c.l.b16 %v2590
    %v3258 = vunpack.c.h.b16 %v2590
    %v3259 = vunpack.c.l.b16 %v2591
    %v3260 = vunpack.c.h.b16 %v2591
    %v3261 = vunpack.c.l.b16 %v2592
    %v3262 = vunpack.c.l.b16 %v2593
    %v3263 = vunpack.c.h.b16 %v2593
    %v3264 = vunpack.c.l.b16 %v2594
    %v3265 = vunpack.c.h.b16 %v2594
    %v3266 = vunpack.c.l.b16 %v2595
    %v3267 = vunpack.c.h.b16 %v2595
    %v3268 = vunpack.c.l.b16 %v2596
    %v3269 = vunpack.c.l.b16 %v2597
    %v3270 = vunpack.c.h.b16 %v2597
    %v3271 = vunpack.c.l.b16 %v2598
    %v3272 = vunpack.c.h.b16 %v2598
    %v3273 = vunpack.c.l.b16 %v2599
    %v3274 = vunpack.c.h.b16 %v2599
    %v3275 = vunpack.c.l.b16 %v2600
    %v3276 = vunpack.c.l.b16 %v2601
    %v3277 = vunpack.c.h.b16 %v2601
    %v3278 = vunpack.c.l.b16 %v2602
    %v3279 = vunpack.c.h.b16 %v2602
    %v3280 = vunpack.c.l.b16 %v2603
    %v3281 = vunpack.c.h.b16 %v2603
    %v3282 = vunpack.c.l.b16 %v2604
    %v3283 = vunpack.c.l.b16 %v2605
    %v3284 = vunpack.c.h.b16 %v2605
    %v3285 = vunpack.c.l.b16 %v2606
    %v3286 = vunpack.c.h.b16 %v2606
    %v3287 = vunpack.c.l.b16 %v2607
    %v3288 = vunpack.c.h.b16 %v2607
    %v3289 = vunpack.c.l.b16 %v2608
    %v3290 = vunpack.c.l.b16 %v2609
    %v3291 = vunpack.c.h.b16 %v2609
    %v3292 = vunpack.c.l.b16 %v2610
    %v3293 = vunpack.c.h.b16 %v2610
    %v3294 = vunpack.c.l.b16 %v2611
    %v3295 = vunpack.c.h.b16 %v2611
    %v3296 = vunpack.c.l.b16 %v2612
    %v3297 = vunpack.c.l.b16 %v2613
    %v3298 = vunpack.c.h.b16 %v2613
    %v3299 = vunpack.c.l.b16 %v2614
    %v3300 = vunpack.c.h.b16 %v2614
    %v3301 = vunpack.c.l.b16 %v2615
    %v3302 = vunpack.c.h.b16 %v2615
    %v3303 = vunpack.c.l.b16 %v2616
    %v3304 = vunpack.c.l.b16 %v2617
    %v3305 = vunpack.c.h.b16 %v2617
    %v3306 = vunpack.c.l.b16 %v2618
    %v3307 = vunpack.c.h.b16 %v2618
    %v3308 = vunpack.c.l.b16 %v2619
    %v3309 = vunpack.c.h.b16 %v2619
    %v3310 = vunpack.c.l.b16 %v2620
    %v3311 = vunpack.c.l.b16 %v2621
    %v3312 = vunpack.c.h.b16 %v2621
    %v3313 = vunpack.c.l.b16 %v2622
    %v3314 = vunpack.c.h.b16 %v2622
    %v3315 = vunpack.c.l.b16 %v2623
    %v3316 = vunpack.c.h.b16 %v2623
    %v3317 = vunpack.c.l.b16 %v2624
    %v3318 = vunpack.c.l.b16 %v2625
    %v3319 = vunpack.c.h.b16 %v2625
    %v3320 = vunpack.c.l.b16 %v2626
    %v3321 = vunpack.c.h.b16 %v2626
    %v3322 = vunpack.c.l.b16 %v2627
    %v3323 = vunpack.c.h.b16 %v2627
    %v3324 = vunpack.c.l.b16 %v2628
    %v3325 = vunpack.c.l.b16 %v2629
    %v3326 = vunpack.c.h.b16 %v2629
    %v3327 = vunpack.c.l.b16 %v2630
    %v3328 = vunpack.c.h.b16 %v2630
    %v3329 = vunpack.c.l.b16 %v2631
    %v3330 = vunpack.c.h.b16 %v2631
    %v3331 = vunpack.c.l.b16 %v2632
    %v3332 = vunpack.c.l.b16 %v2633
    %v3333 = vunpack.c.h.b16 %v2633
    %v3334 = vunpack.c.l.b16 %v2634
    %v3335 = vunpack.c.h.b16 %v2634
    %v3336 = vunpack.c.l.b16 %v2635
    %v3337 = vunpack.c.h.b16 %v2635
    %v3338 = vunpack.c.l.b16 %v2636
    %v3339 = vunpack.c.l.b16 %v2637
    %v3340 = vunpack.c.h.b16 %v2637
    %v3341 = vunpack.c.l.b16 %v2638
    %v3342 = vunpack.c.h.b16 %v2638
    %v3343 = vunpack.c.l.b16 %v2639
    %v3344 = vunpack.c.h.b16 %v2639
    %v3345 = vunpack.c.l.b16 %v2640
    %v3346 = vunpack.c.l.b16 %v2641
    %v3347 = vunpack.c.h.b16 %v2641
    %v3348 = vunpack.c.l.b16 %v2642
    %v3349 = vunpack.c.h.b16 %v2642
    %v3350 = vunpack.c.l.b16 %v2643
    %v3351 = vunpack.c.h.b16 %v2643
    %v3352 = vunpack.c.l.b16 %v2644
    %v3353 = vunpack.c.l.b16 %v2645
    %v3354 = vunpack.c.h.b16 %v2645
    %v3355 = vunpack.c.l.b16 %v2646
    %v3356 = vunpack.c.h.b16 %v2646
    %v3357 = vunpack.c.l.b16 %v2647
    %v3358 = vunpack.c.h.b16 %v2647
    %v3359 = vunpack.c.l.b16 %v2648
    %v3360 = vunpack.c.l.b16 %v2649
    %v3361 = vunpack.c.h.b16 %v2649
    %v3362 = vunpack.c.l.b16 %v2650
    %v3363 = vunpack.c.h.b16 %v2650
    %v3364 = vunpack.c.l.b16 %v2651
    %v3365 = vunpack.c.h.b16 %v2651
    %v3366 = vunpack.c.l.b16 %v2652
    %v3367 = vunpack.c.l.b16 %v2653
    %v3368 = vunpack.c.h.b16 %v2653
    %v3369 = vunpack.c.l.b16 %v2654
    %v3370 = vunpack.c.h.b16 %v2654
    %v3371 = vunpack.c.l.b16 %v2655
    %v3372 = vunpack.c.h.b16 %v2655
    %v3373 = vunpack.c.l.b16 %v2656
    %v3374 = vunpack.c.l.b16 %v2657
    %v3375 = vunpack.c.h.b16 %v2657
    %v3376 = vunpack.c.l.b16 %v2658
    %v3377 = vunpack.c.h.b16 %v2658
    %v3378 = vunpack.c.l.b16 %v2659
    %v3379 = vunpack.c.h.b16 %v2659
    %v3380 = vunpack.c.l.b16 %v2660
    %v3381 = vunpack.c.l.b16 %v2661
    %v3382 = vunpack.c.h.b16 %v2661
    %v3383 = vunpack.c.l.b16 %v2662
    %v3384 = vunpack.c.h.b16 %v2662
    %v3385 = vunpack.c.l.b16 %v2663
    %v3386 = vunpack.c.h.b16 %v2663
    %v3387 = vunpack.c.l.b16 %v2664
    %v3388 = vunpack.c.l.b16 %v2665
    %v3389 = vunpack.c.h.b16 %v2665
    %v3390 = vunpack.c.l.b16 %v2666
    %v3391 = vunpack.c.h.b16 %v2666
    %v3392 = vunpack.c.l.b16 %v2667
    %v3393 = vunpack.c.h.b16 %v2667
    %v3394 = vunpack.c.l.b16 %v2668
    %v3395 = vunpack.c.l.b16 %v2669
    %v3396 = vunpack.c.h.b16 %v2669
    %v3397 = vunpack.c.l.b16 %v2670
    %v3398 = vunpack.c.h.b16 %v2670
    %v3399 = vunpack.c.l.b16 %v2671
    %v3400 = vunpack.c.h.b16 %v2671
    %v3401 = vunpack.c.l.b16 %v2672
    %v3402 = vunpack.c.l.b16 %v2673
    %v3403 = vunpack.c.h.b16 %v2673
    %v3404 = vunpack.c.l.b16 %v2674
    %v3405 = vunpack.c.h.b16 %v2674
    %v3406 = vunpack.c.l.b16 %v2675
    %v3407 = vunpack.c.h.b16 %v2675
    %v3408 = vunpack.c.l.b16 %v2676
    %v3409 = vunpack.c.l.b16 %v2677
    %v3410 = vunpack.c.h.b16 %v2677
    %v3411 = vunpack.c.l.b16 %v2678
    %v3412 = vunpack.c.h.b16 %v2678
    %v3413 = vunpack.c.l.b16 %v2679
    %v3414 = vunpack.c.h.b16 %v2679
    %v3415 = vunpack.c.l.b16 %v2680
    %v3416 = vunpack.c.l.b16 %v2681
    %v3417 = vunpack.c.h.b16 %v2681
    %v3418 = vunpack.c.l.b16 %v2682
    %v3419 = vunpack.c.h.b16 %v2682
    %v3420 = vunpack.c.l.b16 %v2683
    %v3421 = vunpack.c.h.b16 %v2683
    %v3422 = vunpack.c.l.b16 %v2684
    %v3423 = vunpack.c.l.b16 %v2685
    %v3424 = vunpack.c.h.b16 %v2685
    %v3425 = vunpack.c.l.b16 %v2686
    %v3426 = vunpack.c.h.b16 %v2686
    %v3427 = vunpack.c.l.b16 %v2687
    %v3428 = vunpack.c.h.b16 %v2687
    %v3429 = vunpack.c.l.b16 %v2688
    %v3430 = vpack.c.b16 %v2989, %v2982
    %v3431 = vpack.c.b16 %v2990, %v2983
    %v3432 = vpack.c.b16 %v2991, %v2984
    %v3433 = vpack.c.b16 %v2992, %v2985
    %v3434 = vpack.c.b16 %v2993, %v2986
    %v3435 = vpack.c.b16 %v2994, %v2987
    %v3436 = vpack.c.b16 %v2995, %v2988
    %v3437 = vpack.c.b16 %v3003, %v2996
    %v3438 = vpack.c.b16 %v3004, %v2997
    %v3439 = vpack.c.b16 %v3005, %v2998
    %v3440 = vpack.c.b16 %v3006, %v2999
    %v3441 = vpack.c.b16 %v3007, %v3000
    %v3442 = vpack.c.b16 %v3008, %v3001
    %v3443 = vpack.c.b16 %v3009, %v3002
    %v3444 = vpack.c.b16 %v3017, %v3010
    %v3445 = vpack.c.b16 %v3018, %v3011
    %v3446 = vpack.c.b16 %v3019, %v3012
    %v3447 = vpack.c.b16 %v3020, %v3013
    %v3448 = vpack.c.b16 %v3021, %v3014
    %v3449 = vpack.c.b16 %v3022, %v3015
    %v3450 = vpack.c.b16 %v3023, %v3016
    %v3451 = vpack.c.b16 %v3031, %v3024
    %v3452 = vpack.c.b16 %v3032, %v3025
    %v3453 = vpack.c.b16 %v3033, %v3026
    %v3454 = vpack.c.b16 %v3034, %v3027
    %v3455 = vpack.c.b16 %v3035, %v3028
    %v3456 = vpack.c.b16 %v3036, %v3029
    %v3457 = vpack.c.b16 %v3037, %v3030
    %v3458 = vpack.c.b16 %v3045, %v3038
    %v3459 = vpack.c.b16 %v3046, %v3039
    %v3460 = vpack.c.b16 %v3047, %v3040
    %v3461 = vpack.c.b16 %v3048, %v3041
    %v3462 = vpack.c.b16 %v3049, %v3042
    %v3463 = vpack.c.b16 %v3050, %v3043
    %v3464 = vpack.c.b16 %v3051, %v3044
    %v3465 = vpack.c.b16 %v3059, %v3052
    %v3466 = vpack.c.b16 %v3060, %v3053
    %v3467 = vpack.c.b16 %v3061, %v3054
    %v3468 = vpack.c.b16 %v3062, %v3055
    %v3469 = vpack.c.b16 %v3063, %v3056
    %v3470 = vpack.c.b16 %v3064, %v3057
    %v3471 = vpack.c.b16 %v3065, %v3058
    %v3472 = vpack.c.b16 %v3073, %v3066
    %v3473 = vpack.c.b16 %v3074, %v3067
    %v3474 = vpack.c.b16 %v3075, %v3068
    %v3475 = vpack.c.b16 %v3076, %v3069
    %v3476 = vpack.c.b16 %v3077, %v3070
    %v3477 = vpack.c.b16 %v3078, %v3071
    %v3478 = vpack.c.b16 %v3079, %v3072
    %v3479 = vpack.c.b16 %v3087, %v3080
    %v3480 = vpack.c.b16 %v3088, %v3081
    %v3481 = vpack.c.b16 %v3089, %v3082
    %v3482 = vpack.c.b16 %v3090, %v3083
    %v3483 = vpack.c.b16 %v3091, %v3084
    %v3484 = vpack.c.b16 %v3092, %v3085
    %v3485 = vpack.c.b16 %v3093, %v3086
    %v3486 = vpack.c.b16 %v3101, %v3094
    %v3487 = vpack.c.b16 %v3102, %v3095
    %v3488 = vpack.c.b16 %v3103, %v3096
    %v3489 = vpack.c.b16 %v3104, %v3097
    %v3490 = vpack.c.b16 %v3105, %v3098
    %v3491 = vpack.c.b16 %v3106, %v3099
    %v3492 = vpack.c.b16 %v3107, %v3100
    %v3493 = vpack.c.b16 %v3115, %v3108
    %v3494 = vpack.c.b16 %v3116, %v3109
    %v3495 = vpack.c.b16 %v3117, %v3110
    %v3496 = vpack.c.b16 %v3118, %v3111
    %v3497 = vpack.c.b16 %v3119, %v3112
    %v3498 = vpack.c.b16 %v3120, %v3113
    %v3499 = vpack.c.b16 %v3121, %v3114
    %v3500 = vpack.c.b16 %v3129, %v3122
    %v3501 = vpack.c.b16 %v3130, %v3123
    %v3502 = vpack.c.b16 %v3131, %v3124
    %v3503 = vpack.c.b16 %v3132, %v3125
    %v3504 = vpack.c.b16 %v3133, %v3126
    %v3505 = vpack.c.b16 %v3134, %v3127
    %v3506 = vpack.c.b16 %v3135, %v3128
    %v3507 = vpack.c.b16 %v3143, %v3136
    %v3508 = vpack.c.b16 %v3144, %v3137
    %v3509 = vpack.c.b16 %v3145, %v3138
    %v3510 = vpack.c.b16 %v3146, %v3139
    %v3511 = vpack.c.b16 %v3147, %v3140
    %v3512 = vpack.c.b16 %v3148, %v3141
    %v3513 = vpack.c.b16 %v3149, %v3142
    %v3514 = vpack.c.b16 %v3157, %v3150
    %v3515 = vpack.c.b16 %v3158, %v3151
    %v3516 = vpack.c.b16 %v3159, %v3152
    %v3517 = vpack.c.b16 %v3160, %v3153
    %v3518 = vpack.c.b16 %v3161, %v3154
    %v3519 = vpack.c.b16 %v3162, %v3155
    %v3520 = vpack.c.b16 %v3163, %v3156
    %v3521 = vpack.c.b16 %v3171, %v3164
    %v3522 = vpack.c.b16 %v3172, %v3165
    %v3523 = vpack.c.b16 %v3173, %v3166
    %v3524 = vpack.c.b16 %v3174, %v3167
    %v3525 = vpack.c.b16 %v3175, %v3168
    %v3526 = vpack.c.b16 %v3176, %v3169
    %v3527 = vpack.c.b16 %v3177, %v3170
    %v3528 = vpack.c.b16 %v3185, %v3178
    %v3529 = vpack.c.b16 %v3186, %v3179
    %v3530 = vpack.c.b16 %v3187, %v3180
    %v3531 = vpack.c.b16 %v3188, %v3181
    %v3532 = vpack.c.b16 %v3189, %v3182
    %v3533 = vpack.c.b16 %v3190, %v3183
    %v3534 = vpack.c.b16 %v3191, %v3184
    %v3535 = vpack.c.b16 %v3199, %v3192
    %v3536 = vpack.c.b16 %v3200, %v3193
    %v3537 = vpack.c.b16 %v3201, %v3194
    %v3538 = vpack.c.b16 %v3202, %v3195
    %v3539 = vpack.c.b16 %v3203, %v3196
    %v3540 = vpack.c.b16 %v3204, %v3197
    %v3541 = vpack.c.b16 %v3205, %v3198
    %v3542 = vpack.c.b16 %v3213, %v3206
    %v3543 = vpack.c.b16 %v3214, %v3207
    %v3544 = vpack.c.b16 %v3215, %v3208
    %v3545 = vpack.c.b16 %v3216, %v3209
    %v3546 = vpack.c.b16 %v3217, %v3210
    %v3547 = vpack.c.b16 %v3218, %v3211
    %v3548 = vpack.c.b16 %v3219, %v3212
    %v3549 = vpack.c.b16 %v3227, %v3220
    %v3550 = vpack.c.b16 %v3228, %v3221
    %v3551 = vpack.c.b16 %v3229, %v3222
    %v3552 = vpack.c.b16 %v3230, %v3223
    %v3553 = vpack.c.b16 %v3231, %v3224
    %v3554 = vpack.c.b16 %v3232, %v3225
    %v3555 = vpack.c.b16 %v3233, %v3226
    %v3556 = vpack.c.b16 %v3241, %v3234
    %v3557 = vpack.c.b16 %v3242, %v3235
    %v3558 = vpack.c.b16 %v3243, %v3236
    %v3559 = vpack.c.b16 %v3244, %v3237
    %v3560 = vpack.c.b16 %v3245, %v3238
    %v3561 = vpack.c.b16 %v3246, %v3239
    %v3562 = vpack.c.b16 %v3247, %v3240
    %v3563 = vpack.c.b16 %v3255, %v3248
    %v3564 = vpack.c.b16 %v3256, %v3249
    %v3565 = vpack.c.b16 %v3257, %v3250
    %v3566 = vpack.c.b16 %v3258, %v3251
    %v3567 = vpack.c.b16 %v3259, %v3252
    %v3568 = vpack.c.b16 %v3260, %v3253
    %v3569 = vpack.c.b16 %v3261, %v3254
    %v3570 = vpack.c.b16 %v3269, %v3262
    %v3571 = vpack.c.b16 %v3270, %v3263
    %v3572 = vpack.c.b16 %v3271, %v3264
    %v3573 = vpack.c.b16 %v3272, %v3265
    %v3574 = vpack.c.b16 %v3273, %v3266
    %v3575 = vpack.c.b16 %v3274, %v3267
    %v3576 = vpack.c.b16 %v3275, %v3268
    %v3577 = vpack.c.b16 %v3283, %v3276
    %v3578 = vpack.c.b16 %v3284, %v3277
    %v3579 = vpack.c.b16 %v3285, %v3278
    %v3580 = vpack.c.b16 %v3286, %v3279
    %v3581 = vpack.c.b16 %v3287, %v3280
    %v3582 = vpack.c.b16 %v3288, %v3281
    %v3583 = vpack.c.b16 %v3289, %v3282
    %v3584 = vpack.c.b16 %v3297, %v3290
    %v3585 = vpack.c.b16 %v3298, %v3291
    %v3586 = vpack.c.b16 %v3299, %v3292
    %v3587 = vpack.c.b16 %v3300, %v3293
    %v3588 = vpack.c.b16 %v3301, %v3294
    %v3589 = vpack.c.b16 %v3302, %v3295
    %v3590 = vpack.c.b16 %v3303, %v3296
    %v3591 = vpack.c.b16 %v3311, %v3304
    %v3592 = vpack.c.b16 %v3312, %v3305
    %v3593 = vpack.c.b16 %v3313, %v3306
    %v3594 = vpack.c.b16 %v3314, %v3307
    %v3595 = vpack.c.b16 %v3315, %v3308
    %v3596 = vpack.c.b16 %v3316, %v3309
    %v3597 = vpack.c.b16 %v3317, %v3310
    %v3598 = vpack.c.b16 %v3325, %v3318
    %v3599 = vpack.c.b16 %v3326, %v3319
    %v3600 = vpack.c.b16 %v3327, %v3320
    %v3601 = vpack.c.b16 %v3328, %v3321
    %v3602 = vpack.c.b16 %v3329, %v3322
    %v3603 = vpack.c.b16 %v3330, %v3323
    %v3604 = vpack.c.b16 %v3331, %v3324
    %v3605 = vpack.c.b16 %v3339, %v3332
    %v3606 = vpack.c.b16 %v3340, %v3333
    %v3607 = vpack.c.b16 %v3341, %v3334
    %v3608 = vpack.c.b16 %v3342, %v3335
    %v3609 = vpack.c.b16 %v3343, %v3336
    %v3610 = vpack.c.b16 %v3344, %v3337
    %v3611 = vpack.c.b16 %v3345, %v3338
    %v3612 = vpack.c.b16 %v3353, %v3346
    %v3613 = vpack.c.b16 %v3354, %v3347
    %v3614 = vpack.c.b16 %v3355, %v3348
    %v3615 = vpack.c.b16 %v3356, %v3349
    %v3616 = vpack.c.b16 %v3357, %v3350
    %v3617 = vpack.c.b16 %v3358, %v3351
    %v3618 = vpack.c.b16 %v3359, %v3352
    %v3619 = vpack.c.b16 %v3367, %v3360
    %v3620 = vpack.c.b16 %v3368, %v3361
    %v3621 = vpack.c.b16 %v3369, %v3362
    %v3622 = vpack.c.b16 %v3370, %v3363
    %v3623 = vpack.c.b16 %v3371, %v3364
    %v3624 = vpack.c.b16 %v3372, %v3365
    %v3625 = vpack.c.b16 %v3373, %v3366
    %v3626 = vpack.c.b16 %v3381, %v3374
    %v3627 = vpack.c.b16 %v3382, %v3375
    %v3628 = vpack.c.b16 %v3383, %v3376
    %v3629 = vpack.c.b16 %v3384, %v3377
    %v3630 = vpack.c.b16 %v3385, %v3378
    %v3631 = vpack.c.b16 %v3386, %v3379
    %v3632 = vpack.c.b16 %v3387, %v3380
    %v3633 = vpack.c.b16 %v3395, %v3388
    %v3634 = vpack.c.b16 %v3396, %v3389
    %v3635 = vpack.c.b16 %v3397, %v3390
    %v3636 = vpack.c.b16 %v3398, %v3391
    %v3637 = vpack.c.b16 %v3399, %v3392
    %v3638 = vpack.c.b16 %v3400, %v3393
    %v3639 = vpack.c.b16 %v3401, %v3394
    %v3640 = vpack.c.b16 %v3409, %v3402
    %v3641 = vpack.c.b16 %v3410, %v3403
    %v3642 = vpack.c.b16 %v3411, %v3404
    %v3643 = vpack.c.b16 %v3412, %v3405
    %v3644 = vpack.c.b16 %v3413, %v3406
    %v3645 = vpack.c.b16 %v3414, %v3407
    %v3646 = vpack.c.b16 %v3415, %v3408
    %v3647 = vpack.c.b16 %v3423, %v3416
    %v3648 = vpack.c.b16 %v3424, %v3417
    %v3649 = vpack.c.b16 %v3425, %v3418
    %v3650 = vpack.c.b16 %v3426, %v3419
    %v3651 = vpack.c.b16 %v3427, %v3420
    %v3652 = vpack.c.b16 %v3428, %v3421
    %v3653 = vpack.c.b16 %v3429, %v3422
    %3878 = vmatprep.subr.bf16.mxu0 %v3431
    %3879 = vmatpush1.bf16.msra.mxu0 %v3430
    %3880 = vmatprep.subr.bf16.mxu0 %v3438
    %3881 = vmatpush1.bf16.msra.mxu0 %v3437
    %3882 = vmatprep.subr.bf16.mxu0 %v3445
    %3883 = vmatpush1.bf16.msra.mxu0 %v3444
    %3884 = vmatprep.subr.bf16.mxu0 %v3452
    %3885 = vmatpush1.bf16.msra.mxu0 %v3451
    %3886 = vmatprep.subr.bf16.mxu0 %v3459
    %3887 = vmatpush1.bf16.msra.mxu0 %v3458
    %3888 = vmatprep.subr.bf16.mxu0 %v3466
    %3889 = vmatpush1.bf16.msra.mxu0 %v3465
    %3890 = vmatprep.subr.bf16.mxu0 %v3473
    %3891 = vmatpush1.bf16.msra.mxu0 %v3472
    %3892 = vmatprep.subr.bf16.mxu0 %v3480
    %3893 = vmatpush1.bf16.msra.mxu0 %v3479
    %3894 = vmatprep.subr.bf16.mxu0 %v3487
    %3895 = vmatpush1.bf16.msra.mxu0 %v3486
    %3896 = vmatprep.subr.bf16.mxu0 %v3494
    %3897 = vmatpush1.bf16.msra.mxu0 %v3493
    %3898 = vmatprep.subr.bf16.mxu0 %v3501
    %3899 = vmatpush1.bf16.msra.mxu0 %v3500
    %3900 = vmatprep.subr.bf16.mxu0 %v3508
    %3901 = vmatpush1.bf16.msra.mxu0 %v3507
    %3902 = vmatprep.subr.bf16.mxu0 %v3515
    %3903 = vmatpush1.bf16.msra.mxu0 %v3514
    %3904 = vmatprep.subr.bf16.mxu0 %v3522
    %3905 = vmatpush1.bf16.msra.mxu0 %v3521
    %3906 = vmatprep.subr.bf16.mxu0 %v3529
    %3907 = vmatpush1.bf16.msra.mxu0 %v3528
    %3908 = vmatprep.subr.bf16.mxu0 %v3536
    %3909 = vmatpush1.bf16.msra.mxu0 %v3535
    %3910 = vmatprep.mubr.bf16.mxu0 %v2430
    %3911 = vmatmul.mubr.bf16.gmra.mrb[0].mxu0 %v2429
    %v3912 = vpop.f32.mrb[0].mxu0
    %v3913 = vadd.f32 %v2694, %v3912
    %v3914 = vpop.f32.mrb[0].mxu0
    %v3915 = vadd.f32 %v2698, %v3914
    %v3916 = vpop.f32.mrb[0].mxu0
    %v3917 = vadd.f32 %v2694, %v3916
    %v3918 = vpop.f32.mrb[0].mxu0
    %v3919 = vadd.f32 %v2698, %v3918
    %3920 = vdwg.mxu0
    %3921 = vmatprep.subr.bf16.mxu0 %v3543
    %3922 = vmatpush1.bf16.msra.mxu0 %v3542
    %3923 = vmatprep.subr.bf16.mxu0 %v3550
    %3924 = vmatpush1.bf16.msra.mxu0 %v3549
    %3925 = vmatprep.subr.bf16.mxu0 %v3557
    %3926 = vmatpush1.bf16.msra.mxu0 %v3556
    %3927 = vmatprep.subr.bf16.mxu0 %v3564
    %3928 = vmatpush1.bf16.msra.mxu0 %v3563
    %3929 = vmatprep.subr.bf16.mxu0 %v3571
    %3930 = vmatpush1.bf16.msra.mxu0 %v3570
    %3931 = vmatprep.subr.bf16.mxu0 %v3578
    %3932 = vmatpush1.bf16.msra.mxu0 %v3577
    %3933 = vmatprep.subr.bf16.mxu0 %v3585
    %3934 = vmatpush1.bf16.msra.mxu0 %v3584
    %3935 = vmatprep.subr.bf16.mxu0 %v3592
    %3936 = vmatpush1.bf16.msra.mxu0 %v3591
    %3937 = vmatprep.subr.bf16.mxu0 %v3599
    %3938 = vmatpush1.bf16.msra.mxu0 %v3598
    %3939 = vmatprep.subr.bf16.mxu0 %v3606
    %3940 = vmatpush1.bf16.msra.mxu0 %v3605
    %3941 = vmatprep.subr.bf16.mxu0 %v3613
    %3942 = vmatpush1.bf16.msra.mxu0 %v3612
    %3943 = vmatprep.subr.bf16.mxu0 %v3620
    %3944 = vmatpush1.bf16.msra.mxu0 %v3619
    %3945 = vmatprep.subr.bf16.mxu0 %v3627
    %3946 = vmatpush1.bf16.msra.mxu0 %v3626
    %3947 = vmatprep.subr.bf16.mxu0 %v3634
    %3948 = vmatpush1.bf16.msra.mxu0 %v3633
    %3949 = vmatprep.subr.bf16.mxu0 %v3641
    %3950 = vmatpush1.bf16.msra.mxu0 %v3640
    %3951 = vmatprep.subr.bf16.mxu0 %v3648
    %3952 = vmatpush1.bf16.msra.mxu0 %v3647
    %3953 = vmatprep.mubr.bf16.mxu0 %v2432
    %3954 = vmatmul.mubr.bf16.gmra.mrb[0].mxu0 %v2431
    %v3955 = vpop.f32.mrb[0].mxu0
    %v3956 = vadd.f32 %v3913, %v3955
    %v3957 = vpop.f32.mrb[0].mxu0
    %v3958 = vadd.f32 %v3915, %v3957
    %v3959 = vpop.f32.mrb[0].mxu0
    %v3960 = vadd.f32 %v3917, %v3959
    %v3961 = vpop.f32.mrb[0].mxu0
    %v3962 = vadd.f32 %v3919, %v3961
    %3963 = vdwg.mxu0
    %3964 = vmatprep.subr.bf16.mxu0 %v3433
    %3965 = vmatpush1.bf16.msra.mxu0 %v3432
    %3966 = vmatprep.subr.bf16.mxu0 %v3440
    %3967 = vmatpush1.bf16.msra.mxu0 %v3439
    %3968 = vmatprep.subr.bf16.mxu0 %v3447
    %3969 = vmatpush1.bf16.msra.mxu0 %v3446
    %3970 = vmatprep.subr.bf16.mxu0 %v3454
    %3971 = vmatpush1.bf16.msra.mxu0 %v3453
    %3972 = vmatprep.subr.bf16.mxu0 %v3461
    %3973 = vmatpush1.bf16.msra.mxu0 %v3460
    %3974 = vmatprep.subr.bf16.mxu0 %v3468
    %3975 = vmatpush1.bf16.msra.mxu0 %v3467
    %3976 = vmatprep.subr.bf16.mxu0 %v3475
    %3977 = vmatpush1.bf16.msra.mxu0 %v3474
    %3978 = vmatprep.subr.bf16.mxu0 %v3482
    %3979 = vmatpush1.bf16.msra.mxu0 %v3481
    %3980 = vmatprep.subr.bf16.mxu0 %v3489
    %3981 = vmatpush1.bf16.msra.mxu0 %v3488
    %3982 = vmatprep.subr.bf16.mxu0 %v3496
    %3983 = vmatpush1.bf16.msra.mxu0 %v3495
    %3984 = vmatprep.subr.bf16.mxu0 %v3503
    %3985 = vmatpush1.bf16.msra.mxu0 %v3502
    %3986 = vmatprep.subr.bf16.mxu0 %v3510
    %3987 = vmatpush1.bf16.msra.mxu0 %v3509
    %3988 = vmatprep.subr.bf16.mxu0 %v3517
    %3989 = vmatpush1.bf16.msra.mxu0 %v3516
    %3990 = vmatprep.subr.bf16.mxu0 %v3524
    %3991 = vmatpush1.bf16.msra.mxu0 %v3523
    %3992 = vmatprep.subr.bf16.mxu0 %v3531
    %3993 = vmatpush1.bf16.msra.mxu0 %v3530
    %3994 = vmatprep.subr.bf16.mxu0 %v3538
    %3995 = vmatpush1.bf16.msra.mxu0 %v3537
    %3996 = vmatprep.mubr.bf16.mxu0 %v2430
    %3997 = vmatmul.mubr.bf16.gmra.mrb[0].mxu0 %v2429
    %v3998 = vpop.f32.mrb[0].mxu0
    %v3999 = vadd.f32 %v2702, %v3998
    %v4000 = vpop.f32.mrb[0].mxu0
    %v4001 = vadd.f32 %v2706, %v4000
    %v4002 = vpop.f32.mrb[0].mxu0
    %v4003 = vadd.f32 %v2702, %v4002
    %v4004 = vpop.f32.mrb[0].mxu0
    %v4005 = vadd.f32 %v2706, %v4004
    %4006 = vdwg.mxu0
    %4007 = vmatprep.subr.bf16.mxu0 %v3545
    %4008 = vmatpush1.bf16.msra.mxu0 %v3544
    %4009 = vmatprep.subr.bf16.mxu0 %v3552
    %4010 = vmatpush1.bf16.msra.mxu0 %v3551
    %4011 = vmatprep.subr.bf16.mxu0 %v3559
    %4012 = vmatpush1.bf16.msra.mxu0 %v3558
    %4013 = vmatprep.subr.bf16.mxu0 %v3566
    %4014 = vmatpush1.bf16.msra.mxu0 %v3565
    %4015 = vmatprep.subr.bf16.mxu0 %v3573
    %4016 = vmatpush1.bf16.msra.mxu0 %v3572
    %4017 = vmatprep.subr.bf16.mxu0 %v3580
    %4018 = vmatpush1.bf16.msra.mxu0 %v3579
    %4019 = vmatprep.subr.bf16.mxu0 %v3587
    %4020 = vmatpush1.bf16.msra.mxu0 %v3586
    %4021 = vmatprep.subr.bf16.mxu0 %v3594
    %4022 = vmatpush1.bf16.msra.mxu0 %v3593
    %4023 = vmatprep.subr.bf16.mxu0 %v3601
    %4024 = vmatpush1.bf16.msra.mxu0 %v3600
    %4025 = vmatprep.subr.bf16.mxu0 %v3608
    %4026 = vmatpush1.bf16.msra.mxu0 %v3607
    %4027 = vmatprep.subr.bf16.mxu0 %v3615
    %4028 = vmatpush1.bf16.msra.mxu0 %v3614
    %4029 = vmatprep.subr.bf16.mxu0 %v3622
    %4030 = vmatpush1.bf16.msra.mxu0 %v3621
    %4031 = vmatprep.subr.bf16.mxu0 %v3629
    %4032 = vmatpush1.bf16.msra.mxu0 %v3628
    %4033 = vmatprep.subr.bf16.mxu0 %v3636
    %4034 = vmatpush1.bf16.msra.mxu0 %v3635
    %4035 = vmatprep.subr.bf16.mxu0 %v3643
    %4036 = vmatpush1.bf16.msra.mxu0 %v3642
    %4037 = vmatprep.subr.bf16.mxu0 %v3650
    %4038 = vmatpush1.bf16.msra.mxu0 %v3649
    %4039 = vmatprep.mubr.bf16.mxu0 %v2432
    %4040 = vmatmul.mubr.bf16.gmra.mrb[0].mxu0 %v2431
    %v4041 = vpop.f32.mrb[0].mxu0
    %v4042 = vadd.f32 %v3999, %v4041
    %v4043 = vpop.f32.mrb[0].mxu0
    %v4044 = vadd.f32 %v4001, %v4043
    %v4045 = vpop.f32.mrb[0].mxu0
    %v4046 = vadd.f32 %v4003, %v4045
    %v4047 = vpop.f32.mrb[0].mxu0
    %v4048 = vadd.f32 %v4005, %v4047
    %4049 = vdwg.mxu0
    %4050 = vmatprep.subr.bf16.mxu0 %v3435
    %4051 = vmatpush1.bf16.msra.mxu0 %v3434
    %4052 = vmatprep.subr.bf16.mxu0 %v3442
    %4053 = vmatpush1.bf16.msra.mxu0 %v3441
    %4054 = vmatprep.subr.bf16.mxu0 %v3449
    %4055 = vmatpush1.bf16.msra.mxu0 %v3448
    %4056 = vmatprep.subr.bf16.mxu0 %v3456
    %4057 = vmatpush1.bf16.msra.mxu0 %v3455
    %4058 = vmatprep.subr.bf16.mxu0 %v3463
    %4059 = vmatpush1.bf16.msra.mxu0 %v3462
    %4060 = vmatprep.subr.bf16.mxu0 %v3470
    %4061 = vmatpush1.bf16.msra.mxu0 %v3469
    %4062 = vmatprep.subr.bf16.mxu0 %v3477
    %4063 = vmatpush1.bf16.msra.mxu0 %v3476
    %4064 = vmatprep.subr.bf16.mxu0 %v3484
    %4065 = vmatpush1.bf16.msra.mxu0 %v3483
    %4066 = vmatprep.subr.bf16.mxu0 %v3491
    %4067 = vmatpush1.bf16.msra.mxu0 %v3490
    %4068 = vmatprep.subr.bf16.mxu0 %v3498
    %4069 = vmatpush1.bf16.msra.mxu0 %v3497
    %4070 = vmatprep.subr.bf16.mxu0 %v3505
    %4071 = vmatpush1.bf16.msra.mxu0 %v3504
    %4072 = vmatprep.subr.bf16.mxu0 %v3512
    %4073 = vmatpush1.bf16.msra.mxu0 %v3511
    %4074 = vmatprep.subr.bf16.mxu0 %v3519
    %4075 = vmatpush1.bf16.msra.mxu0 %v3518
    %4076 = vmatprep.subr.bf16.mxu0 %v3526
    %4077 = vmatpush1.bf16.msra.mxu0 %v3525
    %4078 = vmatprep.subr.bf16.mxu0 %v3533
    %4079 = vmatpush1.bf16.msra.mxu0 %v3532
    %4080 = vmatprep.subr.bf16.mxu0 %v3540
    %4081 = vmatpush1.bf16.msra.mxu0 %v3539
    %4082 = vmatprep.mubr.bf16.mxu0 %v2430
    %4083 = vmatmul.mubr.bf16.gmra.mrb[0].mxu0 %v2429
    %v4084 = vpop.f32.mrb[0].mxu0
    %v4085 = vadd.f32 %v2710, %v4084
    %v4086 = vpop.f32.mrb[0].mxu0
    %v4087 = vadd.f32 %v2714, %v4086
    %v4088 = vpop.f32.mrb[0].mxu0
    %v4089 = vadd.f32 %v2710, %v4088
    %v4090 = vpop.f32.mrb[0].mxu0
    %v4091 = vadd.f32 %v2714, %v4090
    %4092 = vdwg.mxu0
    %4093 = vmatprep.subr.bf16.mxu0 %v3547
    %4094 = vmatpush1.bf16.msra.mxu0 %v3546
    %4095 = vmatprep.subr.bf16.mxu0 %v3554
    %4096 = vmatpush1.bf16.msra.mxu0 %v3553
    %4097 = vmatprep.subr.bf16.mxu0 %v3561
    %4098 = vmatpush1.bf16.msra.mxu0 %v3560
    %4099 = vmatprep.subr.bf16.mxu0 %v3568
    %4100 = vmatpush1.bf16.msra.mxu0 %v3567
    %4101 = vmatprep.subr.bf16.mxu0 %v3575
    %4102 = vmatpush1.bf16.msra.mxu0 %v3574
    %4103 = vmatprep.subr.bf16.mxu0 %v3582
    %4104 = vmatpush1.bf16.msra.mxu0 %v3581
    %4105 = vmatprep.subr.bf16.mxu0 %v3589
    %4106 = vmatpush1.bf16.msra.mxu0 %v3588
    %4107 = vmatprep.subr.bf16.mxu0 %v3596
    %4108 = vmatpush1.bf16.msra.mxu0 %v3595
    %4109 = vmatprep.subr.bf16.mxu0 %v3603
    %4110 = vmatpush1.bf16.msra.mxu0 %v3602
    %4111 = vmatprep.subr.bf16.mxu0 %v3610
    %4112 = vmatpush1.bf16.msra.mxu0 %v3609
    %4113 = vmatprep.subr.bf16.mxu0 %v3617
    %4114 = vmatpush1.bf16.msra.mxu0 %v3616
    %4115 = vmatprep.subr.bf16.mxu0 %v3624
    %4116 = vmatpush1.bf16.msra.mxu0 %v3623
    %4117 = vmatprep.subr.bf16.mxu0 %v3631
    %4118 = vmatpush1.bf16.msra.mxu0 %v3630
    %4119 = vmatprep.subr.bf16.mxu0 %v3638
    %4120 = vmatpush1.bf16.msra.mxu0 %v3637
    %4121 = vmatprep.subr.bf16.mxu0 %v3645
    %4122 = vmatpush1.bf16.msra.mxu0 %v3644
    %4123 = vmatprep.subr.bf16.mxu0 %v3652
    %4124 = vmatpush1.bf16.msra.mxu0 %v3651
    %4125 = vmatprep.mubr.bf16.mxu0 %v2432
    %4126 = vmatmul.mubr.bf16.gmra.mrb[0].mxu0 %v2431
    %v4127 = vpop.f32.mrb[0].mxu0
    %v4128 = vadd.f32 %v4085, %v4127
    %v4129 = vpop.f32.mrb[0].mxu0
    %v4130 = vadd.f32 %v4087, %v4129
    %v4131 = vpop.f32.mrb[0].mxu0
    %v4132 = vadd.f32 %v4089, %v4131
    %v4133 = vpop.f32.mrb[0].mxu0
    %v4134 = vadd.f32 %v4091, %v4133
    %4135 = vdwg.mxu0
    %4136 = vmatprep.subr.bf16.mxu0 0
    %4137 = vmatpush1.bf16.msra.mxu0 %v3436
    %4138 = vmatprep.subr.bf16.mxu0 0
    %4139 = vmatpush1.bf16.msra.mxu0 %v3443
    %4140 = vmatprep.subr.bf16.mxu0 0
    %4141 = vmatpush1.bf16.msra.mxu0 %v3450
    %4142 = vmatprep.subr.bf16.mxu0 0
    %4143 = vmatpush1.bf16.msra.mxu0 %v3457
    %4144 = vmatprep.subr.bf16.mxu0 0
    %4145 = vmatpush1.bf16.msra.mxu0 %v3464
    %4146 = vmatprep.subr.bf16.mxu0 0
    %4147 = vmatpush1.bf16.msra.mxu0 %v3471
    %4148 = vmatprep.subr.bf16.mxu0 0
    %4149 = vmatpush1.bf16.msra.mxu0 %v3478
    %4150 = vmatprep.subr.bf16.mxu0 0
    %4151 = vmatpush1.bf16.msra.mxu0 %v3485
    %4152 = vmatprep.subr.bf16.mxu0 0
    %4153 = vmatpush1.bf16.msra.mxu0 %v3492
    %4154 = vmatprep.subr.bf16.mxu0 0
    %4155 = vmatpush1.bf16.msra.mxu0 %v3499
    %4156 = vmatprep.subr.bf16.mxu0 0
    %4157 = vmatpush1.bf16.msra.mxu0 %v3506
    %4158 = vmatprep.subr.bf16.mxu0 0
    %4159 = vmatpush1.bf16.msra.mxu0 %v3513
    %4160 = vmatprep.subr.bf16.mxu0 0
    %4161 = vmatpush1.bf16.msra.mxu0 %v3520
    %4162 = vmatprep.subr.bf16.mxu0 0
    %4163 = vmatpush1.bf16.msra.mxu0 %v3527
    %4164 = vmatprep.subr.bf16.mxu0 0
    %4165 = vmatpush1.bf16.msra.mxu0 %v3534
    %4166 = vmatprep.subr.bf16.mxu0 0
    %4167 = vmatpush1.bf16.msra.mxu0 %v3541
    %4168 = vmatprep.mubr.bf16.mxu0 %v2430
    %4169 = vmatmul.mubr.bf16.gmra.mrb[0].mxu0 %v2429
    %v4170 = vpop.f32.mrb[0].mxu0
    %v4171 = vadd.f32 %v2718, %v4170
    %v4172 = vpop.f32.mrb[0].mxu0
    %v4173 = vpop.f32.mrb[0].mxu0
    %v4174 = vadd.f32 %v2718, %v4173
    %v4175 = vpop.f32.mrb[0].mxu0
    %4176 = vdwg.mxu0
    %4177 = vmatprep.subr.bf16.mxu0 0
    %4178 = vmatpush1.bf16.msra.mxu0 %v3548
    %4179 = vmatprep.subr.bf16.mxu0 0
    %4180 = vmatpush1.bf16.msra.mxu0 %v3555
    %4181 = vmatprep.subr.bf16.mxu0 0
    %4182 = vmatpush1.bf16.msra.mxu0 %v3562
    %4183 = vmatprep.subr.bf16.mxu0 0
    %4184 = vmatpush1.bf16.msra.mxu0 %v3569
    %4185 = vmatprep.subr.bf16.mxu0 0
    %4186 = vmatpush1.bf16.msra.mxu0 %v3576
    %4187 = vmatprep.subr.bf16.mxu0 0
    %4188 = vmatpush1.bf16.msra.mxu0 %v3583
    %4189 = vmatprep.subr.bf16.mxu0 0
    %4190 = vmatpush1.bf16.msra.mxu0 %v3590
    %4191 = vmatprep.subr.bf16.mxu0 0
    %4192 = vmatpush1.bf16.msra.mxu0 %v3597
    %4193 = vmatprep.subr.bf16.mxu0 0
    %4194 = vmatpush1.bf16.msra.mxu0 %v3604
    %4195 = vmatprep.subr.bf16.mxu0 0
    %4196 = vmatpush1.bf16.msra.mxu0 %v3611
    %4197 = vmatprep.subr.bf16.mxu0 0
    %4198 = vmatpush1.bf16.msra.mxu0 %v3618
    %4199 = vmatprep.subr.bf16.mxu0 0
    %4200 = vmatpush1.bf16.msra.mxu0 %v3625
    %4201 = vmatprep.subr.bf16.mxu0 0
    %4202 = vmatpush1.bf16.msra.mxu0 %v3632
    %4203 = vmatprep.subr.bf16.mxu0 0
    %4204 = vmatpush1.bf16.msra.mxu0 %v3639
    %4205 = vmatprep.subr.bf16.mxu0 0
    %4206 = vmatpush1.bf16.msra.mxu0 %v3646
    %4207 = vmatprep.subr.bf16.mxu0 0
    %4208 = vmatpush1.bf16.msra.mxu0 %v3653
    %4209 = vmatprep.mubr.bf16.mxu0 %v2432
    %4210 = vmatmul.mubr.bf16.gmra.mrb[0].mxu0 %v2431
    %v4211 = vpop.f32.mrb[0].mxu0
    %v4212 = vadd.f32 %v4171, %v4211
    %v4213 = vpop.f32.mrb[0].mxu0
    %v4214 = vpop.f32.mrb[0].mxu0
    %v4215 = vadd.f32 %v4174, %v4214
    %v4216 = vpop.f32.mrb[0].mxu0
    %4217 = vdwg.mxu0
    %v4218 = vpack.c.bf16 %v3960, %v3956
    %v4219 = vpack.c.bf16 %v3962, %v3958
    %v4220 = vpack.c.bf16 %v4046, %v4042
    %v4221 = vpack.c.bf16 %v4048, %v4044
    %v4222 = vpack.c.bf16 %v4132, %v4128
    %v4223 = vpack.c.bf16 %v4134, %v4130
    %v4224 = vpack.c.bf16 %v4215, %v4212
    %v4225 = vtanh.bf16.pop %v4218
    %v4226 = vtanh.bf16.pop %v4219
    %v4227 = vtanh.bf16.pop %v4220
    %v4228 = vtanh.bf16.pop %v4221
    %v4229 = vtanh.bf16.pop %v4222
    %v4230 = vtanh.bf16.pop %v4223
    %v4231 = vtanh.bf16.pop %v4224
    %v4239 = vunpack.c.l.b16 %v4225
    %v4240 = vunpack.c.l.b16 %v4226
    %v4241 = vunpack.c.l.b16 %v4227
    %v4242 = vunpack.c.l.b16 %v4228
    %v4243 = vunpack.c.l.b16 %v4229
    %v4244 = vunpack.c.l.b16 %v4230
    %v4245 = vunpack.c.l.b16 %v4231
    %v4246 = vunpack.c.h.b16 %v4225
    %v4247 = vunpack.c.h.b16 %v4226
    %v4248 = vunpack.c.h.b16 %v4227
    %v4249 = vunpack.c.h.b16 %v4228
    %v4250 = vunpack.c.h.b16 %v4229
    %v4251 = vunpack.c.h.b16 %v4230
    %v4252 = vunpack.c.h.b16 %v4231
    %v4253 = vpack.c.b16 %v4240, %v4239
    %v4254 = vpack.c.b16 %v4242, %v4241
    %v4255 = vpack.c.b16 %v4244, %v4243
    %v4256 = vpack.c.b16 %v4245, %v4245
    %v4257 = vpack.c.b16 %v4247, %v4246
    %v4258 = vpack.c.b16 %v4249, %v4248
    %v4259 = vpack.c.b16 %v4251, %v4250
    %v4260 = vpack.c.b16 %v4252, %v4252
    %4269 = vst [vmem:[%s10] sm:$0xff] %v4253
    %4270 = vst [vmem:[%s10 + $0x8] sm:$0xff] %v4254
    %4271 = vst [vmem:[%s10 + $0x10] sm:$0xff] %v4255
    %4272 = vst [vmem:[%s10 + $0x18] sm:$0xf] %v4256
    %4273 = vst [vmem:[%s10 + $0x1c] sm:$0xff] %v4257
    %4274 = vst [vmem:[%s10 + $0x24] sm:$0xff] %v4258
    %4275 = vst [vmem:[%s10 + $0x2c] sm:$0xff] %v4259
    %4276 = vst [vmem:[%s10 + $0x34] sm:$0xf] %v4260
    %4277 = vst [vmem:[%s11] sm:$0xff] %v2184
    %4278 = vst [vmem:[%s11 + $0x8] sm:$0xff] %v2187
    // Predicated region
    $region54: #{vae_forward.1} parent=1 // pred_check
      _
    $region55: #{vae_forward.1} parent=1 // pred_check_branch
      %4280 = sbr.rel (0) target = $region57
    $region56: #{vae_forward.1} parent=1 // pred_region
      _
    $region57: #{vae_forward.1} parent=1 // pred_fallthru
      _
    // Predicated region
    $region58: #{vae_forward.1} parent=1 // pred_check
      _
    $region59: #{vae_forward.1} parent=1 // pred_check_branch
      %4282 = sbr.rel (0) target = $region61
    $region60: #{vae_forward.1} parent=1 // pred_region
      _
    $region61: #{vae_forward.1} parent=1 // pred_fallthru
      _
    // Predicated region
    $region62: #{vae_forward.1} parent=1 // pred_check
      _
    $region63: #{vae_forward.1} parent=1 // pred_check_branch
      %4284 = sbr.rel (0) target = $region65
    $region64: #{vae_forward.1} parent=1 // pred_region
      _
    $region65: #{vae_forward.1} parent=1 // pred_fallthru
      _
    // Predicated region
    $region66: #{vae_forward.1} parent=1 // pred_check
      _
    $region67: #{vae_forward.1} parent=1 // pred_check_branch
      %4286 = sbr.rel (0) target = $region69
    $region68: #{vae_forward.1} parent=1 // pred_region
      _
    $region69: #{vae_forward.1} parent=1 // pred_fallthru
      _
    %4287 = vsyncpa [#allocation3], 1
    %4288 = vsyncpa [#allocation5], 1

</llo_original>
